<compile_context>
chip_gen: v6e
topology: v6e:2x2x1
jax: 0.10.0
libtpu: 0.0.40
codegen_flags: <defaults>
</compile_context>

<pallas_src>
import functools

import jax
import jax.numpy as jnp
from jax.experimental import pallas as pl
from jax.experimental.pallas import tpu as pltpu

H1, H2, H3, H4 = 1024, 512, 256, 1
NEG_SLOPE = 0.2


def _round_up(v, m):
    return ((v + m - 1) // m) * m


def _leaky_relu(x, slope=NEG_SLOPE):
    # slope in (0,1) => leaky_relu(x) == max(x, slope*x)  (1 vmul + 1 vmax)
    return jnp.maximum(x, slope * x)


def critic_kernel(x_ref,
                  w1_ref, b1_ref,
                  w2_ref, b2_ref,
                  w3_ref, b3_ref,
                  w4_ref, b4_ref,
                  o_ref):
    """Whole MLP for one batch tile.  Weights resident in VMEM (bf16)."""
    x = x_ref[...]                                                    # (tb, D) bf16

    h = jnp.dot(x, w1_ref[...], preferred_element_type=jnp.float32) + b1_ref[...]
    h = _leaky_relu(h).astype(jnp.bfloat16)                           # (tb, 1024)

    h = jnp.dot(h, w2_ref[...], preferred_element_type=jnp.float32) + b2_ref[...]
    h = _leaky_relu(h).astype(jnp.bfloat16)                           # (tb, 512)

    h = jnp.dot(h, w3_ref[...], preferred_element_type=jnp.float32) + b3_ref[...]
    h = _leaky_relu(h)                                                # (tb, 256) f32

    # Final Linear(256, 1): N=1 would waste an entire MXU pass, so do it as a
    # VPU multiply + XLU lane reduction (both units are otherwise idle here).
    out = jnp.sum(h * w4_ref[...], axis=-1, keepdims=True) + b4_ref[...]
    o_ref[...] = out.astype(o_ref.dtype)                              # (tb, 1)


@functools.partial(jax.jit, static_argnames=("tile_b", "single_buffer_weights"))
def _critic_pallas(x, w1, b1, w2, b2, w3, b3, w4, b4, *,
                   tile_b, single_buffer_weights):
    B, D = x.shape
    grid = (pl.cdiv(B, tile_b),)

    pipeline_mode = None
    if single_buffer_weights and hasattr(pl, "Buffered"):
        # Grid-invariant blocks: one VMEM copy is enough, no re-fetch needed.
        pipeline_mode = pl.Buffered(1)

    def rep(shape):
        idx = lambda i, _r=len(shape): (0,) * _r
        if pipeline_mode is None:
            return pl.BlockSpec(shape, idx)
        return pl.BlockSpec(shape, idx, pipeline_mode=pipeline_mode)

    # Explicit VMEM budget: weights (+biases) x buffer count + pipelined
    # activation tiles + headroom.  Clamped below v7x's 64 MiB physical VMEM.
    weight_bytes = (w1.size + w2.size + w3.size) * 2 + w4.size * 4    # bf16 / f32
    bias_bytes = (b1.size + b2.size + b3.size + b4.size) * 4          # f32
    act_bytes = tile_b * (D * 2 + (H1 + H2 + H3 + H4) * 4)
    wmul = 1 if pipeline_mode is not None else 2
    vmem_bytes = wmul * (weight_bytes + bias_bytes) + 4 * act_bytes + (4 << 20)
    vmem_limit = int(min(max(vmem_bytes, 16 << 20), 60 << 20))

    flops = 2 * B * (D * H1 + H1 * H2 + H2 * H3 + H3 * H4)
    bytes_accessed = x.size * 2 + weight_bytes + bias_bytes + B * H4 * 4

    return pl.pallas_call(
        critic_kernel,
        out_shape=jax.ShapeDtypeStruct((B, H4), jnp.float32),
        grid_spec=pltpu.PrefetchScalarGridSpec(
            num_scalar_prefetch=0,
            grid=grid,
            in_specs=[
                pl.BlockSpec((tile_b, D), lambda i: (i, 0)),          # x batch tile
                rep((D, H1)), rep((1, H1)),
                rep((H1, H2)), rep((1, H2)),
                rep((H2, H3)), rep((1, H3)),
                rep((1, H3)), rep((1, H4)),
            ],
            out_specs=pl.BlockSpec((tile_b, H4), lambda i: (i, 0)),
        ),
        compiler_params=pltpu.CompilerParams(
            dimension_semantics=("parallel",),
            vmem_limit_bytes=vmem_limit,
        ),
        cost_estimate=pl.CostEstimate(
            flops=flops, transcendentals=0, bytes_accessed=bytes_accessed),
    )(x, w1, b1, w2, b2, w3, b3, w4, b4)


_SINGLE_BUFFER_OK = None  # resolved lazily; falls back if pl.Buffered(1) is unsupported


def critic_forward(x, params, block_b=256):
    """x: (B, D) float32 (or bf16).  params: dict from init_params."""
    global _SINGLE_BUFFER_OK
    B = x.shape[0]

    block_b = max(16, _round_up(int(block_b), 16))
    if B <= 16 or B >= 2 * block_b:
        tile_b = min(block_b, B)          # B<=16 -> single full-array block (always legal)
    else:
        # Force >=2 grid steps so the "parallel" axis can shard across both
        # TensorCores on v7x while keeping tiles MXU-friendly.
        tile_b = _round_up(pl.cdiv(B, 2), 16)

    args = (x.astype(jnp.bfloat16),
            params["w1"], params["b1"],
            params["w2"], params["b2"],
            params["w3"], params["b3"],
            params["w4"], params["b4"])

    if _SINGLE_BUFFER_OK is None:
        try:
            out = jax.block_until_ready(
                _critic_pallas(*args, tile_b=tile_b, single_buffer_weights=True))
            _SINGLE_BUFFER_OK = True
            return out
        except Exception:
            # pl.Buffered(1) not supported by this jax/libtpu: default buffering.
            _SINGLE_BUFFER_OK = False
    return _critic_pallas(*args, tile_b=tile_b,
                          single_buffer_weights=_SINGLE_BUFFER_OK)


def init_params(key, input_dim):
    """Mirror PyTorch Linear default init U(-1/sqrt(fan_in), 1/sqrt(fan_in)).
    Weights stored as (in, out) bf16 for layers 1-3; final layer as a (1, 256)
    f32 row (used on the VPU, not the MXU); biases f32."""
    dims = [(input_dim, H1), (H1, H2), (H2, H3), (H3, H4)]
    params = {}
    keys = jax.random.split(key, 2 * len(dims))
    for idx, (fan_in, fan_out) in enumerate(dims):
        bound = float(fan_in) ** -0.5
        w = jax.random.uniform(keys[2 * idx], (fan_in, fan_out),
                               minval=-bound, maxval=bound, dtype=jnp.float32)
        b = jax.random.uniform(keys[2 * idx + 1], (1, fan_out),
                               minval=-bound, maxval=bound, dtype=jnp.float32)
        if fan_out == H4:
            params[f"w{idx + 1}"] = w.T                 # (1, 256) f32 row, VPU reduce
        else:
            params[f"w{idx + 1}"] = w.astype(jnp.bfloat16)
        params[f"b{idx + 1}"] = b                       # biases stay f32
    return params


def critic_reference(x, params):
    """Pure-JAX f32 reference of the same forward pass (same weights/dtypes)."""
    h = x.astype(jnp.float32)
    for i in range(1, 4):
        h = h @ params[f"w{i}"].astype(jnp.float32) + params[f"b{i}"]
        h = jnp.where(h > 0, h, NEG_SLOPE * h)
    return h @ params["w4"].astype(jnp.float32).T + params["b4"]


if __name__ == "__main__":
    key = jax.random.PRNGKey(0)
    k_params, k_x = jax.random.split(key)

    batch, input_dim = 8, 64
    params = init_params(k_params, input_dim)
    x = jax.random.normal(k_x, (batch, input_dim), dtype=jnp.float32)

    out = critic_forward(x, params)
    out = jax.block_until_ready(out)

    ref = critic_reference(x.astype(jnp.bfloat16).astype(jnp.float32), params)
    assert out.shape == (batch, 1), out.shape
    max_err = float(jnp.max(jnp.abs(out - ref)))
    assert max_err < 3e-2, f"max abs err {max_err}"

    print("KERNEL_OK")
</pallas_src>

<mosaic_0001>
module attributes {stable_mosaic.version = 11 : i64} {
  func.func @critic_kernel(%arg0: i32, %arg1: memref<8x64xbf16, #tpu.memory_space<vmem>>, %arg2: memref<64x1024xbf16, #tpu.memory_space<vmem>>, %arg3: memref<1x1024xf32, #tpu.memory_space<vmem>>, %arg4: memref<1024x512xbf16, #tpu.memory_space<vmem>>, %arg5: memref<1x512xf32, #tpu.memory_space<vmem>>, %arg6: memref<512x256xbf16, #tpu.memory_space<vmem>>, %arg7: memref<1x256xf32, #tpu.memory_space<vmem>>, %arg8: memref<1x256xf32, #tpu.memory_space<vmem>>, %arg9: memref<1x1xf32, #tpu.memory_space<vmem>>, %arg10: memref<8x1xf32, #tpu.memory_space<vmem>>) attributes {dimension_semantics = [#tpu.dimension_semantics<parallel>], iteration_bounds = array<i64: 1>, scalar_prefetch = 0 : i64, scratch_operands = 0 : i64, tpu.core_type = #tpu.core_type<tc>, window_params = [{transform_indices = @transform_0, window_bounds = array<i64: 8, 64>}, {pipeline_mode = #tpu.pipeline_mode<synchronous>, transform_indices = @transform_1, window_bounds = array<i64: 64, 1024>}, {pipeline_mode = #tpu.pipeline_mode<synchronous>, transform_indices = @transform_2, window_bounds = array<i64: 1, 1024>}, {pipeline_mode = #tpu.pipeline_mode<synchronous>, transform_indices = @transform_3, window_bounds = array<i64: 1024, 512>}, {pipeline_mode = #tpu.pipeline_mode<synchronous>, transform_indices = @transform_4, window_bounds = array<i64: 1, 512>}, {pipeline_mode = #tpu.pipeline_mode<synchronous>, transform_indices = @transform_5, window_bounds = array<i64: 512, 256>}, {pipeline_mode = #tpu.pipeline_mode<synchronous>, transform_indices = @transform_6, window_bounds = array<i64: 1, 256>}, {pipeline_mode = #tpu.pipeline_mode<synchronous>, transform_indices = @transform_7, window_bounds = array<i64: 1, 256>}, {pipeline_mode = #tpu.pipeline_mode<synchronous>, transform_indices = @transform_8, window_bounds = array<i64: 1, 1>}, {transform_indices = @transform_9, window_bounds = array<i64: 8, 1>}]} {
    %c0 = arith.constant 0 : index
    %c0_0 = arith.constant 0 : index
    %0 = vector.load %arg1[%c0, %c0_0] : memref<8x64xbf16, #tpu.memory_space<vmem>>, vector<8x64xbf16>
    %c0_1 = arith.constant 0 : index
    %c0_2 = arith.constant 0 : index
    %1 = vector.load %arg2[%c0_1, %c0_2] : memref<64x1024xbf16, #tpu.memory_space<vmem>>, vector<64x1024xbf16>
    %cst = arith.constant dense<0.000000e+00> : vector<8x1024xf32>
    %2 = tpu.matmul %0, %1, %cst {dimension_numbers = #tpu.dot_dimension_numbers<[1], [0], [0], [1], [0, 0, 1, 1], [], []>} : vector<8x64xbf16>, vector<64x1024xbf16>, vector<8x1024xf32> -> vector<8x1024xf32>
    %c0_3 = arith.constant 0 : index
    %c0_4 = arith.constant 0 : index
    %3 = vector.load %arg3[%c0_3, %c0_4] : memref<1x1024xf32, #tpu.memory_space<vmem>>, vector<1x1024xf32>
    %4 = vector.broadcast %3 : vector<1x1024xf32> to vector<8x1024xf32>
    %5 = arith.addf %2, %4 : vector<8x1024xf32>
    %cst_5 = arith.constant 2.000000e-01 : f32
    %6 = vector.broadcast %cst_5 : f32 to vector<8x1024xf32>
    %7 = arith.mulf %6, %5 : vector<8x1024xf32>
    %8 = arith.maximumf %5, %7 : vector<8x1024xf32>
    %9 = arith.truncf %8 : vector<8x1024xf32> to vector<8x1024xbf16>
    %c0_6 = arith.constant 0 : index
    %c0_7 = arith.constant 0 : index
    %10 = vector.load %arg4[%c0_6, %c0_7] : memref<1024x512xbf16, #tpu.memory_space<vmem>>, vector<1024x512xbf16>
    %cst_8 = arith.constant dense<0.000000e+00> : vector<8x512xf32>
    %11 = tpu.matmul %9, %10, %cst_8 {dimension_numbers = #tpu.dot_dimension_numbers<[1], [0], [0], [1], [0, 0, 1, 1], [], []>} : vector<8x1024xbf16>, vector<1024x512xbf16>, vector<8x512xf32> -> vector<8x512xf32>
    %c0_9 = arith.constant 0 : index
    %c0_10 = arith.constant 0 : index
    %12 = vector.load %arg5[%c0_9, %c0_10] : memref<1x512xf32, #tpu.memory_space<vmem>>, vector<1x512xf32>
    %13 = vector.broadcast %12 : vector<1x512xf32> to vector<8x512xf32>
    %14 = arith.addf %11, %13 : vector<8x512xf32>
    %cst_11 = arith.constant 2.000000e-01 : f32
    %15 = vector.broadcast %cst_11 : f32 to vector<8x512xf32>
    %16 = arith.mulf %15, %14 : vector<8x512xf32>
    %17 = arith.maximumf %14, %16 : vector<8x512xf32>
    %18 = arith.truncf %17 : vector<8x512xf32> to vector<8x512xbf16>
    %c0_12 = arith.constant 0 : index
    %c0_13 = arith.constant 0 : index
    %19 = vector.load %arg6[%c0_12, %c0_13] : memref<512x256xbf16, #tpu.memory_space<vmem>>, vector<512x256xbf16>
    %cst_14 = arith.constant dense<0.000000e+00> : vector<8x256xf32>
    %20 = tpu.matmul %18, %19, %cst_14 {dimension_numbers = #tpu.dot_dimension_numbers<[1], [0], [0], [1], [0, 0, 1, 1], [], []>} : vector<8x512xbf16>, vector<512x256xbf16>, vector<8x256xf32> -> vector<8x256xf32>
    %c0_15 = arith.constant 0 : index
    %c0_16 = arith.constant 0 : index
    %21 = vector.load %arg7[%c0_15, %c0_16] : memref<1x256xf32, #tpu.memory_space<vmem>>, vector<1x256xf32>
    %22 = vector.broadcast %21 : vector<1x256xf32> to vector<8x256xf32>
    %23 = arith.addf %20, %22 : vector<8x256xf32>
    %cst_17 = arith.constant 2.000000e-01 : f32
    %24 = vector.broadcast %cst_17 : f32 to vector<8x256xf32>
    %25 = arith.mulf %24, %23 : vector<8x256xf32>
    %26 = arith.maximumf %23, %25 : vector<8x256xf32>
    %c0_18 = arith.constant 0 : index
    %c0_19 = arith.constant 0 : index
    %27 = vector.load %arg8[%c0_18, %c0_19] : memref<1x256xf32, #tpu.memory_space<vmem>>, vector<1x256xf32>
    %28 = vector.broadcast %27 : vector<1x256xf32> to vector<8x256xf32>
    %29 = arith.mulf %26, %28 : vector<8x256xf32>
    %cst_20 = arith.constant dense<0.000000e+00> : vector<8xf32>
    %30 = vector.multi_reduction <add>, %29, %cst_20 [1] : vector<8x256xf32> to vector<8xf32>
    %31 = vector.shape_cast %30 : vector<8xf32> to vector<8x1xf32>
    %c0_21 = arith.constant 0 : index
    %c0_22 = arith.constant 0 : index
    %32 = vector.load %arg9[%c0_21, %c0_22] : memref<1x1xf32, #tpu.memory_space<vmem>>, vector<1x1xf32>
    %33 = vector.broadcast %32 : vector<1x1xf32> to vector<8x1xf32>
    %34 = arith.addf %31, %33 : vector<8x1xf32>
    %c0_23 = arith.constant 0 : index
    %c0_24 = arith.constant 0 : index
    %35 = vector.load %arg10[%c0_23, %c0_24] : memref<8x1xf32, #tpu.memory_space<vmem>>, vector<8x1xf32>
    tpu.vector_store %arg10[%c0_23, %c0_24], %34 {strides = array<i32>} : memref<8x1xf32, #tpu.memory_space<vmem>>, vector<8x1xf32>,
    return
  }
  func.func @transform_0(%arg0: i32) -> (i32, i32) {
    %c0_i32 = arith.constant 0 : i32
    %c0_i32_0 = arith.constant 0 : i32
    return %arg0, %c0_i32 : i32, i32
  }
  func.func @transform_1(%arg0: i32) -> (i32, i32) {
    %c0_i32 = arith.constant 0 : i32
    %c0_i32_0 = arith.constant 0 : i32
    %c0_i32_1 = arith.constant 0 : i32
    return %c0_i32, %c0_i32_0 : i32, i32
  }
  func.func @transform_2(%arg0: i32) -> (i32, i32) {
    %c0_i32 = arith.constant 0 : i32
    %c0_i32_0 = arith.constant 0 : i32
    %c0_i32_1 = arith.constant 0 : i32
    return %c0_i32, %c0_i32_0 : i32, i32
  }
  func.func @transform_3(%arg0: i32) -> (i32, i32) {
    %c0_i32 = arith.constant 0 : i32
    %c0_i32_0 = arith.constant 0 : i32
    %c0_i32_1 = arith.constant 0 : i32
    return %c0_i32, %c0_i32_0 : i32, i32
  }
  func.func @transform_4(%arg0: i32) -> (i32, i32) {
    %c0_i32 = arith.constant 0 : i32
    %c0_i32_0 = arith.constant 0 : i32
    %c0_i32_1 = arith.constant 0 : i32
    return %c0_i32, %c0_i32_0 : i32, i32
  }
  func.func @transform_5(%arg0: i32) -> (i32, i32) {
    %c0_i32 = arith.constant 0 : i32
    %c0_i32_0 = arith.constant 0 : i32
    %c0_i32_1 = arith.constant 0 : i32
    return %c0_i32, %c0_i32_0 : i32, i32
  }
  func.func @transform_6(%arg0: i32) -> (i32, i32) {
    %c0_i32 = arith.constant 0 : i32
    %c0_i32_0 = arith.constant 0 : i32
    %c0_i32_1 = arith.constant 0 : i32
    return %c0_i32, %c0_i32_0 : i32, i32
  }
  func.func @transform_7(%arg0: i32) -> (i32, i32) {
    %c0_i32 = arith.constant 0 : i32
    %c0_i32_0 = arith.constant 0 : i32
    %c0_i32_1 = arith.constant 0 : i32
    return %c0_i32, %c0_i32_0 : i32, i32
  }
  func.func @transform_8(%arg0: i32) -> (i32, i32) {
    %c0_i32 = arith.constant 0 : i32
    %c0_i32_0 = arith.constant 0 : i32
    %c0_i32_1 = arith.constant 0 : i32
    return %c0_i32, %c0_i32_0 : i32, i32
  }
  func.func @transform_9(%arg0: i32) -> (i32, i32) {
    %c0_i32 = arith.constant 0 : i32
    %c0_i32_0 = arith.constant 0 : i32
    return %arg0, %c0_i32 : i32, i32
  }
}

module attributes {stable_mosaic.version = 11 : i64} {
  func.func @critic_kernel(%arg0: i32, %arg1: memref<8x64xbf16, #tpu.memory_space<vmem>>, %arg2: memref<64x1024xbf16, #tpu.memory_space<vmem>>, %arg3: memref<1x1024xf32, #tpu.memory_space<vmem>>, %arg4: memref<1024x512xbf16, #tpu.memory_space<vmem>>, %arg5: memref<1x512xf32, #tpu.memory_space<vmem>>, %arg6: memref<512x256xbf16, #tpu.memory_space<vmem>>, %arg7: memref<1x256xf32, #tpu.memory_space<vmem>>, %arg8: memref<1x256xf32, #tpu.memory_space<vmem>>, %arg9: memref<1x1xf32, #tpu.memory_space<vmem>>, %arg10: memref<8x1xf32, #tpu.memory_space<vmem>>) attributes {dimension_semantics = [#tpu.dimension_semantics<parallel>], iteration_bounds = array<i64: 1>, scalar_prefetch = 0 : i64, scratch_operands = 0 : i64, tpu.core_type = #tpu.core_type<tc>, window_params = [{transform_indices = @transform_0, window_bounds = array<i64: 8, 64>}, {pipeline_mode = #tpu.pipeline_mode<synchronous>, transform_indices = @transform_1, window_bounds = array<i64: 64, 1024>}, {pipeline_mode = #tpu.pipeline_mode<synchronous>, transform_indices = @transform_2, window_bounds = array<i64: 1, 1024>}, {pipeline_mode = #tpu.pipeline_mode<synchronous>, transform_indices = @transform_3, window_bounds = array<i64: 1024, 512>}, {pipeline_mode = #tpu.pipeline_mode<synchronous>, transform_indices = @transform_4, window_bounds = array<i64: 1, 512>}, {pipeline_mode = #tpu.pipeline_mode<synchronous>, transform_indices = @transform_5, window_bounds = array<i64: 512, 256>}, {pipeline_mode = #tpu.pipeline_mode<synchronous>, transform_indices = @transform_6, window_bounds = array<i64: 1, 256>}, {pipeline_mode = #tpu.pipeline_mode<synchronous>, transform_indices = @transform_7, window_bounds = array<i64: 1, 256>}, {pipeline_mode = #tpu.pipeline_mode<synchronous>, transform_indices = @transform_8, window_bounds = array<i64: 1, 1>}, {transform_indices = @transform_9, window_bounds = array<i64: 8, 1>}]} {
    %c0 = arith.constant 0 : index
    %c0_0 = arith.constant 0 : index
    %0 = vector.load %arg1[%c0, %c0_0] : memref<8x64xbf16, #tpu.memory_space<vmem>>, vector<8x64xbf16>
    %c0_1 = arith.constant 0 : index
    %c0_2 = arith.constant 0 : index
    %1 = vector.load %arg2[%c0_1, %c0_2] : memref<64x1024xbf16, #tpu.memory_space<vmem>>, vector<64x1024xbf16>
    %cst = arith.constant dense<0.000000e+00> : vector<8x1024xf32>
    %2 = tpu.matmul %0, %1, %cst {dimension_numbers = #tpu.dot_dimension_numbers<[1], [0], [0], [1], [0, 0, 1, 1], [], []>} : vector<8x64xbf16>, vector<64x1024xbf16>, vector<8x1024xf32> -> vector<8x1024xf32>
    %c0_3 = arith.constant 0 : index
    %c0_4 = arith.constant 0 : index
    %3 = vector.load %arg3[%c0_3, %c0_4] : memref<1x1024xf32, #tpu.memory_space<vmem>>, vector<1x1024xf32>
    %4 = vector.broadcast %3 : vector<1x1024xf32> to vector<8x1024xf32>
    %5 = arith.addf %2, %4 : vector<8x1024xf32>
    %cst_5 = arith.constant 2.000000e-01 : f32
    %6 = vector.broadcast %cst_5 : f32 to vector<8x1024xf32>
    %7 = arith.mulf %6, %5 : vector<8x1024xf32>
    %8 = arith.maximumf %5, %7 : vector<8x1024xf32>
    %9 = arith.truncf %8 : vector<8x1024xf32> to vector<8x1024xbf16>
    %c0_6 = arith.constant 0 : index
    %c0_7 = arith.constant 0 : index
    %10 = vector.load %arg4[%c0_6, %c0_7] : memref<1024x512xbf16, #tpu.memory_space<vmem>>, vector<1024x512xbf16>
    %cst_8 = arith.constant dense<0.000000e+00> : vector<8x512xf32>
    %11 = tpu.matmul %9, %10, %cst_8 {dimension_numbers = #tpu.dot_dimension_numbers<[1], [0], [0], [1], [0, 0, 1, 1], [], []>} : vector<8x1024xbf16>, vector<1024x512xbf16>, vector<8x512xf32> -> vector<8x512xf32>
    %c0_9 = arith.constant 0 : index
    %c0_10 = arith.constant 0 : index
    %12 = vector.load %arg5[%c0_9, %c0_10] : memref<1x512xf32, #tpu.memory_space<vmem>>, vector<1x512xf32>
    %13 = vector.broadcast %12 : vector<1x512xf32> to vector<8x512xf32>
    %14 = arith.addf %11, %13 : vector<8x512xf32>
    %cst_11 = arith.constant 2.000000e-01 : f32
    %15 = vector.broadcast %cst_11 : f32 to vector<8x512xf32>
    %16 = arith.mulf %15, %14 : vector<8x512xf32>
    %17 = arith.maximumf %14, %16 : vector<8x512xf32>
    %18 = arith.truncf %17 : vector<8x512xf32> to vector<8x512xbf16>
    %c0_12 = arith.constant 0 : index
    %c0_13 = arith.constant 0 : index
    %19 = vector.load %arg6[%c0_12, %c0_13] : memref<512x256xbf16, #tpu.memory_space<vmem>>, vector<512x256xbf16>
    %cst_14 = arith.constant dense<0.000000e+00> : vector<8x256xf32>
    %20 = tpu.matmul %18, %19, %cst_14 {dimension_numbers = #tpu.dot_dimension_numbers<[1], [0], [0], [1], [0, 0, 1, 1], [], []>} : vector<8x512xbf16>, vector<512x256xbf16>, vector<8x256xf32> -> vector<8x256xf32>
    %c0_15 = arith.constant 0 : index
    %c0_16 = arith.constant 0 : index
    %21 = vector.load %arg7[%c0_15, %c0_16] : memref<1x256xf32, #tpu.memory_space<vmem>>, vector<1x256xf32>
    %22 = vector.broadcast %21 : vector<1x256xf32> to vector<8x256xf32>
    %23 = arith.addf %20, %22 : vector<8x256xf32>
    %cst_17 = arith.constant 2.000000e-01 : f32
    %24 = vector.broadcast %cst_17 : f32 to vector<8x256xf32>
    %25 = arith.mulf %24, %23 : vector<8x256xf32>
    %26 = arith.maximumf %23, %25 : vector<8x256xf32>
    %c0_18 = arith.constant 0 : index
    %c0_19 = arith.constant 0 : index
    %27 = vector.load %arg8[%c0_18, %c0_19] : memref<1x256xf32, #tpu.memory_space<vmem>>, vector<1x256xf32>
    %28 = vector.broadcast %27 : vector<1x256xf32> to vector<8x256xf32>
    %29 = arith.mulf %26, %28 : vector<8x256xf32>
    %cst_20 = arith.constant dense<0.000000e+00> : vector<8xf32>
    %30 = vector.multi_reduction <add>, %29, %cst_20 [1] : vector<8x256xf32> to vector<8xf32>
    %31 = vector.shape_cast %30 : vector<8xf32> to vector<8x1xf32>
    %c0_21 = arith.constant 0 : index
    %c0_22 = arith.constant 0 : index
    %32 = vector.load %arg9[%c0_21, %c0_22] : memref<1x1xf32, #tpu.memory_space<vmem>>, vector<1x1xf32>
    %33 = vector.broadcast %32 : vector<1x1xf32> to vector<8x1xf32>
    %34 = arith.addf %31, %33 : vector<8x1xf32>
    %c0_23 = arith.constant 0 : index
    %c0_24 = arith.constant 0 : index
    %35 = vector.load %arg10[%c0_23, %c0_24] : memref<8x1xf32, #tpu.memory_space<vmem>>, vector<8x1xf32>
    tpu.vector_store %arg10[%c0_23, %c0_24], %34 {strides = array<i32>} : memref<8x1xf32, #tpu.memory_space<vmem>>, vector<8x1xf32>,
    return
  }
  func.func @transform_0(%arg0: i32) -> (i32, i32) {
    %c0_i32 = arith.constant 0 : i32
    %c0_i32_0 = arith.constant 0 : i32
    return %arg0, %c0_i32 : i32, i32
  }
  func.func @transform_1(%arg0: i32) -> (i32, i32) {
    %c0_i32 = arith.constant 0 : i32
    %c0_i32_0 = arith.constant 0 : i32
    %c0_i32_1 = arith.constant 0 : i32
    return %c0_i32, %c0_i32_0 : i32, i32
  }
  func.func @transform_2(%arg0: i32) -> (i32, i32) {
    %c0_i32 = arith.constant 0 : i32
    %c0_i32_0 = arith.constant 0 : i32
    %c0_i32_1 = arith.constant 0 : i32
    return %c0_i32, %c0_i32_0 : i32, i32
  }
  func.func @transform_3(%arg0: i32) -> (i32, i32) {
    %c0_i32 = arith.constant 0 : i32
    %c0_i32_0 = arith.constant 0 : i32
    %c0_i32_1 = arith.constant 0 : i32
    return %c0_i32, %c0_i32_0 : i32, i32
  }
  func.func @transform_4(%arg0: i32) -> (i32, i32) {
    %c0_i32 = arith.constant 0 : i32
    %c0_i32_0 = arith.constant 0 : i32
    %c0_i32_1 = arith.constant 0 : i32
    return %c0_i32, %c0_i32_0 : i32, i32
  }
  func.func @transform_5(%arg0: i32) -> (i32, i32) {
    %c0_i32 = arith.constant 0 : i32
    %c0_i32_0 = arith.constant 0 : i32
    %c0_i32_1 = arith.constant 0 : i32
    return %c0_i32, %c0_i32_0 : i32, i32
  }
  func.func @transform_6(%arg0: i32) -> (i32, i32) {
    %c0_i32 = arith.constant 0 : i32
    %c0_i32_0 = arith.constant 0 : i32
    %c0_i32_1 = arith.constant 0 : i32
    return %c0_i32, %c0_i32_0 : i32, i32
  }
  func.func @transform_7(%arg0: i32) -> (i32, i32) {
    %c0_i32 = arith.constant 0 : i32
    %c0_i32_0 = arith.constant 0 : i32
    %c0_i32_1 = arith.constant 0 : i32
    return %c0_i32, %c0_i32_0 : i32, i32
  }
  func.func @transform_8(%arg0: i32) -> (i32, i32) {
    %c0_i32 = arith.constant 0 : i32
    %c0_i32_0 = arith.constant 0 : i32
    %c0_i32_1 = arith.constant 0 : i32
    return %c0_i32, %c0_i32_0 : i32, i32
  }
  func.func @transform_9(%arg0: i32) -> (i32, i32) {
    %c0_i32 = arith.constant 0 : i32
    %c0_i32_0 = arith.constant 0 : i32
    return %arg0, %c0_i32 : i32, i32
  }
}

</mosaic_0001>

<llo_original>
// kernel: _critic_pallas.1
$region0: #{_critic_pallas.1}
  #allocation0 [shape = 'u32[]', space=smem, size = 0x4, offset = 0x4, fixed_abs, tag = 'smem constant byte address 0x4 - core index']
  #allocation1 [shape = 'u32[144,128]{1,0:T(1,128)}', space=vmem, size = 0x12000, scoped, tag = 'internal scratch']
  #allocation2 [shape = 'f32[1,1]{1,0:T(1,128)S(1)}', space=vmem, size = 0x200, scoped, tag = 'scoped memory for _critic_pallas.1']
  %s0 = inlined_call_operand.hbm [shape: bf16[8,64], index: 0, kind: input, shape index: {}]
  %s1 = inlined_call_operand.hbm [shape: bf16[64,1024], index: 1, kind: input, shape index: {}]
  %s2 = inlined_call_operand.hbm [shape: f32[1,1024], index: 2, kind: input, shape index: {}]
  %s3 = inlined_call_operand.hbm [shape: bf16[1024,512], index: 3, kind: input, shape index: {}]
  %s4 = inlined_call_operand.vmem [shape: f32[1,512], index: 4, kind: input, shape index: {}]
  %s5 = inlined_call_operand.hbm [shape: bf16[512,256], index: 5, kind: input, shape index: {}]
  %s6 = inlined_call_operand.vmem [shape: f32[1,256], index: 6, kind: input, shape index: {}]
  %s7 = inlined_call_operand.vmem [shape: f32[1,256], index: 7, kind: input, shape index: {}]
  %s8 = inlined_call_operand.<no memory space> [shape: f32[1,1], index: 8, kind: input, shape index: {}]
  %s9 = inlined_call_operand.vmem [shape: f32[8,1], index: 9, kind: output, shape index: {}]
  %s10 = sld [smem:[#allocation0]]
  $region66: #{_critic_pallas.1} parent=0
    _
  %s12 = ssub.s32 1, %s10
  %s13 = scalar_select 0, %s12, %s10
  %v14 = vstv %s8
  %15 = vst [vmem:[#allocation2] sm:$0x1] %v14
  $region1: #{_critic_pallas.1} parent=0
    #allocation3 [shape = 'u8[2048]{0}', space=vmem, size = 0x800, scoped, tag = 'input window, operand 0, single buffered']
    #allocation4 [shape = 's32[1]{0}', space=sflag, size = 0x4, scoped, tag = 'scoped memory for _critic_pallas.1']
    #allocation5 [shape = 'u8[131072]{0}', space=vmem, size = 0x20000, scoped, tag = 'input window, operand 1, single buffered']
    #allocation6 [shape = 's32[1]{0}', space=sflag, size = 0x4, scoped, tag = 'scoped memory for _critic_pallas.1']
    #allocation7 [shape = 'u8[4096]{0}', space=vmem, size = 0x1000, scoped, tag = 'input window, operand 2, single buffered']
    #allocation8 [shape = 'u8[1048576]{0}', space=vmem, size = 0x100000, scoped, tag = 'input window, operand 3, single buffered']
    #allocation9 [shape = 's32[1]{0}', space=sflag, size = 0x4, scoped, tag = 'scoped memory for _critic_pallas.1']
    #allocation10 [shape = 'u8[262144]{0}', space=vmem, size = 0x40000, scoped, tag = 'input window, operand 5, single buffered']
    %16 = vsyncpa [#allocation4], 0
    %17 = vsyncpa [#allocation6], 0
    %18 = vsyncpa [#allocation9], 0
    // Predicated region
    $region2: #{_critic_pallas.1} parent=1 // pred_check
      _
    $region3: #{_critic_pallas.1} parent=1 // pred_check_branch
      %20 = sbr.rel (0) target = $region5
    $region4: #{_critic_pallas.1} parent=1 // pred_region
      %s22 = ssub.s32 64, 64
      %23 = vsyncadd [#allocation4], %s22
      %s25 = sshll.u32 [#allocation3], 4
      %s26 = int_to_ptr.vmem [resolvable:$true] %s25
      %28 = dma.hbm_to_vmem [thread:$0]  %s0, 64, %s26, [#allocation4]
    $region5: #{_critic_pallas.1} parent=1 // pred_fallthru
      _
    // Predicated region
    $region6: #{_critic_pallas.1} parent=1 // pred_check
      _
    $region7: #{_critic_pallas.1} parent=1 // pred_check_branch
      %30 = sbr.rel (0) target = $region9
    $region8: #{_critic_pallas.1} parent=1 // pred_region
      %s32 = ssub.s32 4096, 4096
      %33 = vsyncadd [#allocation6], %s32
      %s34 = sshll.u32 [#allocation5], 4
      %s35 = int_to_ptr.vmem [resolvable:$true] %s34
      %40 = dma.hbm_to_vmem [thread:$0]  %s1, 4096, %s35, [#allocation6], 512, 512, 32
    $region9: #{_critic_pallas.1} parent=1 // pred_fallthru
      _
    // Predicated region
    $region10: #{_critic_pallas.1} parent=1 // pred_check
      _
    $region11: #{_critic_pallas.1} parent=1 // pred_check_branch
      %42 = sbr.rel (0) target = $region13
    $region12: #{_critic_pallas.1} parent=1 // pred_region
      %s44 = ssub.s32 128, 128
      %45 = vsyncadd [#allocation6], %s44
      %s47 = sshll.u32 [#allocation7], 4
      %s48 = int_to_ptr.vmem [resolvable:$true] %s47
      %50 = dma.hbm_to_vmem [thread:$0]  %s2, 128, %s48, [#allocation6]
    $region13: #{_critic_pallas.1} parent=1 // pred_fallthru
      _
    // Predicated region
    $region14: #{_critic_pallas.1} parent=1 // pred_check
      _
    $region15: #{_critic_pallas.1} parent=1 // pred_check_branch
      %52 = sbr.rel (0) target = $region17
    $region16: #{_critic_pallas.1} parent=1 // pred_region
      %s54 = ssub.s32 32768, 32768
      %55 = vsyncadd [#allocation9], %s54
      %s56 = sshll.u32 [#allocation8], 4
      %s57 = int_to_ptr.vmem [resolvable:$true] %s56
      %62 = dma.hbm_to_vmem [thread:$0]  %s3, 32768, %s57, [#allocation9], 256, 256, 16
    $region17: #{_critic_pallas.1} parent=1 // pred_fallthru
      _
    // Predicated region
    $region18: #{_critic_pallas.1} parent=1 // pred_check
      _
    $region19: #{_critic_pallas.1} parent=1 // pred_check_branch
      %64 = sbr.rel (0) target = $region21
    $region20: #{_critic_pallas.1} parent=1 // pred_region
      _
    $region21: #{_critic_pallas.1} parent=1 // pred_fallthru
      _
    // Predicated region
    $region22: #{_critic_pallas.1} parent=1 // pred_check
      _
    $region23: #{_critic_pallas.1} parent=1 // pred_check_branch
      %66 = sbr.rel (0) target = $region25
    $region24: #{_critic_pallas.1} parent=1 // pred_region
      %s68 = ssub.s32 8192, 8192
      %69 = vsyncadd [#allocation9], %s68
      %s70 = sshll.u32 [#allocation10], 4
      %s71 = int_to_ptr.vmem [resolvable:$true] %s70
      %76 = dma.hbm_to_vmem [thread:$0]  %s5, 8192, %s71, [#allocation9], 128, 128, 8
    $region25: #{_critic_pallas.1} parent=1 // pred_fallthru
      _
    // Predicated region
    $region26: #{_critic_pallas.1} parent=1 // pred_check
      _
    $region27: #{_critic_pallas.1} parent=1 // pred_check_branch
      %78 = sbr.rel (0) target = $region29
    $region28: #{_critic_pallas.1} parent=1 // pred_region
      _
    $region29: #{_critic_pallas.1} parent=1 // pred_fallthru
      _
    // Predicated region
    $region30: #{_critic_pallas.1} parent=1 // pred_check
      _
    $region31: #{_critic_pallas.1} parent=1 // pred_check_branch
      %80 = sbr.rel (0) target = $region33
    $region32: #{_critic_pallas.1} parent=1 // pred_region
      _
    $region33: #{_critic_pallas.1} parent=1 // pred_fallthru
      _
    // Predicated region
    $region34: #{_critic_pallas.1} parent=1 // pred_check
      _
    $region35: #{_critic_pallas.1} parent=1 // pred_check_branch
      %82 = sbr.rel (0) target = $region37
    $region36: #{_critic_pallas.1} parent=1 // pred_region
      _
    $region37: #{_critic_pallas.1} parent=1 // pred_fallthru
      _
    // Predicated region
    $region38: #{_critic_pallas.1} parent=1 // pred_check
      _
    $region39: #{_critic_pallas.1} parent=1 // pred_check_branch
      %84 = sbr.rel (0) target = $region41
    $region40: #{_critic_pallas.1} parent=1 // pred_region
      %85 = dma.done [#allocation4], 64
    $region41: #{_critic_pallas.1} parent=1 // pred_fallthru
      _
    // Predicated region
    $region42: #{_critic_pallas.1} parent=1 // pred_check
      _
    $region43: #{_critic_pallas.1} parent=1 // pred_check_branch
      %87 = sbr.rel (0) target = $region45
    $region44: #{_critic_pallas.1} parent=1 // pred_region
      %88 = dma.done [#allocation6], 4096
    $region45: #{_critic_pallas.1} parent=1 // pred_fallthru
      _
    // Predicated region
    $region46: #{_critic_pallas.1} parent=1 // pred_check
      _
    $region47: #{_critic_pallas.1} parent=1 // pred_check_branch
      %90 = sbr.rel (0) target = $region49
    $region48: #{_critic_pallas.1} parent=1 // pred_region
      %91 = dma.done [#allocation6], 128
    $region49: #{_critic_pallas.1} parent=1 // pred_fallthru
      _
    // Predicated region
    $region50: #{_critic_pallas.1} parent=1 // pred_check
      _
    $region51: #{_critic_pallas.1} parent=1 // pred_check_branch
      %93 = sbr.rel (0) target = $region53
    $region52: #{_critic_pallas.1} parent=1 // pred_region
      %94 = dma.done [#allocation9], 32768
    $region53: #{_critic_pallas.1} parent=1 // pred_fallthru
      _
    // Predicated region
    $region54: #{_critic_pallas.1} parent=1 // pred_check
      _
    $region55: #{_critic_pallas.1} parent=1 // pred_check_branch
      %96 = sbr.rel (0) target = $region57
    $region56: #{_critic_pallas.1} parent=1 // pred_region
      %97 = dma.done [#allocation9], 8192
    $region57: #{_critic_pallas.1} parent=1 // pred_fallthru
      _
    %v99 = vld [vmem:[#allocation3] sm:$0xf]
    %v100 = vld [vmem:[#allocation5] sm:$0xff]
    %v101 = vld [vmem:[#allocation5 + $0x8] sm:$0xff]
    %v102 = vld [vmem:[#allocation5 + $0x10] sm:$0xff]
    %v103 = vld [vmem:[#allocation5 + $0x18] sm:$0xff]
    %v104 = vld [vmem:[#allocation5 + $0x20] sm:$0xff]
    %v105 = vld [vmem:[#allocation5 + $0x28] sm:$0xff]
    %v106 = vld [vmem:[#allocation5 + $0x30] sm:$0xff]
    %v107 = vld [vmem:[#allocation5 + $0x38] sm:$0xff]
    %v108 = vld [vmem:[#allocation5 + $0x40] sm:$0xff]
    %v109 = vld [vmem:[#allocation5 + $0x48] sm:$0xff]
    %v110 = vld [vmem:[#allocation5 + $0x50] sm:$0xff]
    %v111 = vld [vmem:[#allocation5 + $0x58] sm:$0xff]
    %v112 = vld [vmem:[#allocation5 + $0x60] sm:$0xff]
    %v113 = vld [vmem:[#allocation5 + $0x68] sm:$0xff]
    %v114 = vld [vmem:[#allocation5 + $0x70] sm:$0xff]
    %v115 = vld [vmem:[#allocation5 + $0x78] sm:$0xff]
    %v116 = vld [vmem:[#allocation5 + $0x80] sm:$0xff]
    %v117 = vld [vmem:[#allocation5 + $0x88] sm:$0xff]
    %v118 = vld [vmem:[#allocation5 + $0x90] sm:$0xff]
    %v119 = vld [vmem:[#allocation5 + $0x98] sm:$0xff]
    %v120 = vld [vmem:[#allocation5 + $0xa0] sm:$0xff]
    %v121 = vld [vmem:[#allocation5 + $0xa8] sm:$0xff]
    %v122 = vld [vmem:[#allocation5 + $0xb0] sm:$0xff]
    %v123 = vld [vmem:[#allocation5 + $0xb8] sm:$0xff]
    %v124 = vld [vmem:[#allocation5 + $0xc0] sm:$0xff]
    %v125 = vld [vmem:[#allocation5 + $0xc8] sm:$0xff]
    %v126 = vld [vmem:[#allocation5 + $0xd0] sm:$0xff]
    %v127 = vld [vmem:[#allocation5 + $0xd8] sm:$0xff]
    %v128 = vld [vmem:[#allocation5 + $0xe0] sm:$0xff]
    %v129 = vld [vmem:[#allocation5 + $0xe8] sm:$0xff]
    %v130 = vld [vmem:[#allocation5 + $0xf0] sm:$0xff]
    %v131 = vld [vmem:[#allocation5 + $0xf8] sm:$0xff]
    %v132 = vld [vmem:[#allocation7] sm:$0xff]
    %v134 = vlaneseq
    %v135 = vshrl.u32 %v134, 7
    %v136 = vsub.s32 0, %v135
    %v137 = vrot.slane %v132, %v136
    %v138 = vlaneseq
    %v139 = vshrl.u32 %v138, 7
    %v140 = vsub.s32 1, %v139
    %v141 = vrot.slane %v132, %v140
    %v142 = vlaneseq
    %v143 = vshrl.u32 %v142, 7
    %v144 = vsub.s32 2, %v143
    %v145 = vrot.slane %v132, %v144
    %v146 = vlaneseq
    %v147 = vshrl.u32 %v146, 7
    %v148 = vsub.s32 3, %v147
    %v149 = vrot.slane %v132, %v148
    %v150 = vlaneseq
    %v151 = vshrl.u32 %v150, 7
    %v152 = vsub.s32 4, %v151
    %v153 = vrot.slane %v132, %v152
    %v154 = vlaneseq
    %v155 = vshrl.u32 %v154, 7
    %v156 = vsub.s32 5, %v155
    %v157 = vrot.slane %v132, %v156
    %v158 = vlaneseq
    %v159 = vshrl.u32 %v158, 7
    %v160 = vsub.s32 6, %v159
    %v161 = vrot.slane %v132, %v160
    %v162 = vlaneseq
    %v163 = vshrl.u32 %v162, 7
    %v164 = vsub.s32 7, %v163
    %v165 = vrot.slane %v132, %v164
    %v206 = vunpack.c.l.b16 %v100
    %v207 = vunpack.c.h.b16 %v100
    %v208 = vunpack.c.l.b16 %v101
    %v209 = vunpack.c.h.b16 %v101
    %v210 = vunpack.c.l.b16 %v102
    %v211 = vunpack.c.h.b16 %v102
    %v212 = vunpack.c.l.b16 %v103
    %v213 = vunpack.c.h.b16 %v103
    %v214 = vunpack.c.l.b16 %v104
    %v215 = vunpack.c.h.b16 %v104
    %v216 = vunpack.c.l.b16 %v105
    %v217 = vunpack.c.h.b16 %v105
    %v218 = vunpack.c.l.b16 %v106
    %v219 = vunpack.c.h.b16 %v106
    %v220 = vunpack.c.l.b16 %v107
    %v221 = vunpack.c.h.b16 %v107
    %v222 = vunpack.c.l.b16 %v108
    %v223 = vunpack.c.h.b16 %v108
    %v224 = vunpack.c.l.b16 %v109
    %v225 = vunpack.c.h.b16 %v109
    %v226 = vunpack.c.l.b16 %v110
    %v227 = vunpack.c.h.b16 %v110
    %v228 = vunpack.c.l.b16 %v111
    %v229 = vunpack.c.h.b16 %v111
    %v230 = vunpack.c.l.b16 %v112
    %v231 = vunpack.c.h.b16 %v112
    %v232 = vunpack.c.l.b16 %v113
    %v233 = vunpack.c.h.b16 %v113
    %v234 = vunpack.c.l.b16 %v114
    %v235 = vunpack.c.h.b16 %v114
    %v236 = vunpack.c.l.b16 %v115
    %v237 = vunpack.c.h.b16 %v115
    %v238 = vunpack.c.l.b16 %v116
    %v239 = vunpack.c.h.b16 %v116
    %v240 = vunpack.c.l.b16 %v117
    %v241 = vunpack.c.h.b16 %v117
    %v242 = vunpack.c.l.b16 %v118
    %v243 = vunpack.c.h.b16 %v118
    %v244 = vunpack.c.l.b16 %v119
    %v245 = vunpack.c.h.b16 %v119
    %v246 = vunpack.c.l.b16 %v120
    %v247 = vunpack.c.h.b16 %v120
    %v248 = vunpack.c.l.b16 %v121
    %v249 = vunpack.c.h.b16 %v121
    %v250 = vunpack.c.l.b16 %v122
    %v251 = vunpack.c.h.b16 %v122
    %v252 = vunpack.c.l.b16 %v123
    %v253 = vunpack.c.h.b16 %v123
    %v254 = vunpack.c.l.b16 %v124
    %v255 = vunpack.c.h.b16 %v124
    %v256 = vunpack.c.l.b16 %v125
    %v257 = vunpack.c.h.b16 %v125
    %v258 = vunpack.c.l.b16 %v126
    %v259 = vunpack.c.h.b16 %v126
    %v260 = vunpack.c.l.b16 %v127
    %v261 = vunpack.c.h.b16 %v127
    %v262 = vunpack.c.l.b16 %v128
    %v263 = vunpack.c.h.b16 %v128
    %v264 = vunpack.c.l.b16 %v129
    %v265 = vunpack.c.h.b16 %v129
    %v266 = vunpack.c.l.b16 %v130
    %v267 = vunpack.c.h.b16 %v130
    %v268 = vunpack.c.l.b16 %v131
    %v269 = vunpack.c.h.b16 %v131
    %v270 = vpack.c.b16 %v214, %v206
    %v271 = vpack.c.b16 %v215, %v207
    %v272 = vpack.c.b16 %v216, %v208
    %v273 = vpack.c.b16 %v217, %v209
    %v274 = vpack.c.b16 %v218, %v210
    %v275 = vpack.c.b16 %v219, %v211
    %v276 = vpack.c.b16 %v220, %v212
    %v277 = vpack.c.b16 %v221, %v213
    %v278 = vpack.c.b16 %v230, %v222
    %v279 = vpack.c.b16 %v231, %v223
    %v280 = vpack.c.b16 %v232, %v224
    %v281 = vpack.c.b16 %v233, %v225
    %v282 = vpack.c.b16 %v234, %v226
    %v283 = vpack.c.b16 %v235, %v227
    %v284 = vpack.c.b16 %v236, %v228
    %v285 = vpack.c.b16 %v237, %v229
    %v286 = vpack.c.b16 %v246, %v238
    %v287 = vpack.c.b16 %v247, %v239
    %v288 = vpack.c.b16 %v248, %v240
    %v289 = vpack.c.b16 %v249, %v241
    %v290 = vpack.c.b16 %v250, %v242
    %v291 = vpack.c.b16 %v251, %v243
    %v292 = vpack.c.b16 %v252, %v244
    %v293 = vpack.c.b16 %v253, %v245
    %v294 = vpack.c.b16 %v262, %v254
    %v295 = vpack.c.b16 %v263, %v255
    %v296 = vpack.c.b16 %v264, %v256
    %v297 = vpack.c.b16 %v265, %v257
    %v298 = vpack.c.b16 %v266, %v258
    %v299 = vpack.c.b16 %v267, %v259
    %v300 = vpack.c.b16 %v268, %v260
    %v301 = vpack.c.b16 %v269, %v261
    %vm334 = vcmask 523264
    %v336 = vsel %vm334, %v99, 0
    %338 = vmatprep.subr.bf16.mxu0 0
    %339 = vmatpush1.bf16.msra.mxu0 0
    %340 = vmatprep.subr.bf16.mxu0 0
    %341 = vmatpush1.bf16.msra.mxu0 0
    %342 = vmatprep.subr.bf16.mxu0 0
    %343 = vmatpush1.bf16.msra.mxu0 0
    %344 = vmatprep.subr.bf16.mxu0 0
    %345 = vmatpush1.bf16.msra.mxu0 0
    %346 = vmatprep.subr.bf16.mxu0 %v295
    %347 = vmatpush1.bf16.msra.mxu0 %v294
    %348 = vmatprep.subr.bf16.mxu0 %v287
    %349 = vmatpush1.bf16.msra.mxu0 %v286
    %350 = vmatprep.subr.bf16.mxu0 %v279
    %351 = vmatpush1.bf16.msra.mxu0 %v278
    %352 = vmatprep.subr.bf16.mxu0 %v271
    %353 = vmatpush1.bf16.msra.mxu0 %v270
    %354 = vmatprep.subr.bf16.mxu0 0
    %355 = vmatpush2.bf16.msra.mxu0 0
    %356 = vmatprep.subr.bf16.mxu0 0
    %357 = vmatpush2.bf16.msra.mxu0 0
    %358 = vmatprep.subr.bf16.mxu0 0
    %359 = vmatpush2.bf16.msra.mxu0 0
    %360 = vmatprep.subr.bf16.mxu0 0
    %361 = vmatpush2.bf16.msra.mxu0 0
    %362 = vmatprep.subr.bf16.mxu0 0
    %363 = vmatpush2.bf16.msra.mxu0 0
    %364 = vmatprep.subr.bf16.mxu0 0
    %365 = vmatpush2.bf16.msra.mxu0 0
    %366 = vmatprep.subr.bf16.mxu0 0
    %367 = vmatpush2.bf16.msra.mxu0 0
    %368 = vmatprep.subr.bf16.mxu0 0
    %369 = vmatpush2.bf16.msra.mxu0 0
    %370 = vmatprep.mubr.bf16.mxu0 0
    %371 = vmatmul.mubr.bf16.gmra.mxu0 %v336
    %v372 = vpop.f32.mrf.mxu0
    %v373 = vadd.f32 %v137, %v372
    %v374 = vpop.f32.mrf.mxu0
    %v375 = vadd.f32 %v141, %v374
    %v376 = vpop.f32.mrf.mxu0
    %v377 = vpop.f32.mrf.mxu0
    %378 = vdwg.mxu0
    %379 = vmatprep.subr.bf16.mxu0 0
    %380 = vmatpush1.bf16.msra.mxu0 0
    %381 = vmatprep.subr.bf16.mxu0 0
    %382 = vmatpush1.bf16.msra.mxu0 0
    %383 = vmatprep.subr.bf16.mxu0 0
    %384 = vmatpush1.bf16.msra.mxu0 0
    %385 = vmatprep.subr.bf16.mxu0 0
    %386 = vmatpush1.bf16.msra.mxu0 0
    %387 = vmatprep.subr.bf16.mxu0 %v297
    %388 = vmatpush1.bf16.msra.mxu0 %v296
    %389 = vmatprep.subr.bf16.mxu0 %v289
    %390 = vmatpush1.bf16.msra.mxu0 %v288
    %391 = vmatprep.subr.bf16.mxu0 %v281
    %392 = vmatpush1.bf16.msra.mxu0 %v280
    %393 = vmatprep.subr.bf16.mxu0 %v273
    %394 = vmatpush1.bf16.msra.mxu0 %v272
    %395 = vmatprep.subr.bf16.mxu0 0
    %396 = vmatpush2.bf16.msra.mxu0 0
    %397 = vmatprep.subr.bf16.mxu0 0
    %398 = vmatpush2.bf16.msra.mxu0 0
    %399 = vmatprep.subr.bf16.mxu0 0
    %400 = vmatpush2.bf16.msra.mxu0 0
    %401 = vmatprep.subr.bf16.mxu0 0
    %402 = vmatpush2.bf16.msra.mxu0 0
    %403 = vmatprep.subr.bf16.mxu0 0
    %404 = vmatpush2.bf16.msra.mxu0 0
    %405 = vmatprep.subr.bf16.mxu0 0
    %406 = vmatpush2.bf16.msra.mxu0 0
    %407 = vmatprep.subr.bf16.mxu0 0
    %408 = vmatpush2.bf16.msra.mxu0 0
    %409 = vmatprep.subr.bf16.mxu0 0
    %410 = vmatpush2.bf16.msra.mxu0 0
    %411 = vmatprep.mubr.bf16.mxu0 0
    %412 = vmatmul.mubr.bf16.gmra.mxu0 %v336
    %v413 = vpop.f32.mrf.mxu0
    %v414 = vadd.f32 %v145, %v413
    %v415 = vpop.f32.mrf.mxu0
    %v416 = vadd.f32 %v149, %v415
    %v417 = vpop.f32.mrf.mxu0
    %v418 = vpop.f32.mrf.mxu0
    %419 = vdwg.mxu0
    %420 = vmatprep.subr.bf16.mxu0 0
    %421 = vmatpush1.bf16.msra.mxu0 0
    %422 = vmatprep.subr.bf16.mxu0 0
    %423 = vmatpush1.bf16.msra.mxu0 0
    %424 = vmatprep.subr.bf16.mxu0 0
    %425 = vmatpush1.bf16.msra.mxu0 0
    %426 = vmatprep.subr.bf16.mxu0 0
    %427 = vmatpush1.bf16.msra.mxu0 0
    %428 = vmatprep.subr.bf16.mxu0 %v299
    %429 = vmatpush1.bf16.msra.mxu0 %v298
    %430 = vmatprep.subr.bf16.mxu0 %v291
    %431 = vmatpush1.bf16.msra.mxu0 %v290
    %432 = vmatprep.subr.bf16.mxu0 %v283
    %433 = vmatpush1.bf16.msra.mxu0 %v282
    %434 = vmatprep.subr.bf16.mxu0 %v275
    %435 = vmatpush1.bf16.msra.mxu0 %v274
    %436 = vmatprep.subr.bf16.mxu0 0
    %437 = vmatpush2.bf16.msra.mxu0 0
    %438 = vmatprep.subr.bf16.mxu0 0
    %439 = vmatpush2.bf16.msra.mxu0 0
    %440 = vmatprep.subr.bf16.mxu0 0
    %441 = vmatpush2.bf16.msra.mxu0 0
    %442 = vmatprep.subr.bf16.mxu0 0
    %443 = vmatpush2.bf16.msra.mxu0 0
    %444 = vmatprep.subr.bf16.mxu0 0
    %445 = vmatpush2.bf16.msra.mxu0 0
    %446 = vmatprep.subr.bf16.mxu0 0
    %447 = vmatpush2.bf16.msra.mxu0 0
    %448 = vmatprep.subr.bf16.mxu0 0
    %449 = vmatpush2.bf16.msra.mxu0 0
    %450 = vmatprep.subr.bf16.mxu0 0
    %451 = vmatpush2.bf16.msra.mxu0 0
    %452 = vmatprep.mubr.bf16.mxu0 0
    %453 = vmatmul.mubr.bf16.gmra.mxu0 %v336
    %v454 = vpop.f32.mrf.mxu0
    %v455 = vadd.f32 %v153, %v454
    %v456 = vpop.f32.mrf.mxu0
    %v457 = vadd.f32 %v157, %v456
    %v458 = vpop.f32.mrf.mxu0
    %v459 = vpop.f32.mrf.mxu0
    %460 = vdwg.mxu0
    %461 = vmatprep.subr.bf16.mxu0 0
    %462 = vmatpush1.bf16.msra.mxu0 0
    %463 = vmatprep.subr.bf16.mxu0 0
    %464 = vmatpush1.bf16.msra.mxu0 0
    %465 = vmatprep.subr.bf16.mxu0 0
    %466 = vmatpush1.bf16.msra.mxu0 0
    %467 = vmatprep.subr.bf16.mxu0 0
    %468 = vmatpush1.bf16.msra.mxu0 0
    %469 = vmatprep.subr.bf16.mxu0 %v301
    %470 = vmatpush1.bf16.msra.mxu0 %v300
    %471 = vmatprep.subr.bf16.mxu0 %v293
    %472 = vmatpush1.bf16.msra.mxu0 %v292
    %473 = vmatprep.subr.bf16.mxu0 %v285
    %474 = vmatpush1.bf16.msra.mxu0 %v284
    %475 = vmatprep.subr.bf16.mxu0 %v277
    %476 = vmatpush1.bf16.msra.mxu0 %v276
    %477 = vmatprep.subr.bf16.mxu0 0
    %478 = vmatpush2.bf16.msra.mxu0 0
    %479 = vmatprep.subr.bf16.mxu0 0
    %480 = vmatpush2.bf16.msra.mxu0 0
    %481 = vmatprep.subr.bf16.mxu0 0
    %482 = vmatpush2.bf16.msra.mxu0 0
    %483 = vmatprep.subr.bf16.mxu0 0
    %484 = vmatpush2.bf16.msra.mxu0 0
    %485 = vmatprep.subr.bf16.mxu0 0
    %486 = vmatpush2.bf16.msra.mxu0 0
    %487 = vmatprep.subr.bf16.mxu0 0
    %488 = vmatpush2.bf16.msra.mxu0 0
    %489 = vmatprep.subr.bf16.mxu0 0
    %490 = vmatpush2.bf16.msra.mxu0 0
    %491 = vmatprep.subr.bf16.mxu0 0
    %492 = vmatpush2.bf16.msra.mxu0 0
    %493 = vmatprep.mubr.bf16.mxu0 0
    %494 = vmatmul.mubr.bf16.gmra.mxu0 %v336
    %v495 = vpop.f32.mrf.mxu0
    %v496 = vadd.f32 %v161, %v495
    %v497 = vpop.f32.mrf.mxu0
    %v498 = vadd.f32 %v165, %v497
    %v499 = vpop.f32.mrf.mxu0
    %v500 = vpop.f32.mrf.mxu0
    %501 = vdwg.mxu0
    %v502 = vmul.f32 %v373, 0.2
    %v503 = vmul.f32 %v375, 0.2
    %v504 = vmul.f32 %v414, 0.2
    %v505 = vmul.f32 %v416, 0.2
    %v506 = vmul.f32 %v455, 0.2
    %v507 = vmul.f32 %v457, 0.2
    %v508 = vmul.f32 %v496, 0.2
    %v509 = vmul.f32 %v498, 0.2
    %v510 = vmax.f32 %v373, %v502
    %v511 = vmax.f32 %v375, %v503
    %v512 = vmax.f32 %v414, %v504
    %v513 = vmax.f32 %v416, %v505
    %v514 = vmax.f32 %v455, %v506
    %v515 = vmax.f32 %v457, %v507
    %v516 = vmax.f32 %v496, %v508
    %v517 = vmax.f32 %v498, %v509
    %v518 = vpack.c.bf16 %v510, %v510
    %v519 = vpack.c.bf16 %v511, %v511
    %v520 = vpack.c.bf16 %v512, %v512
    %v521 = vpack.c.bf16 %v513, %v513
    %v522 = vpack.c.bf16 %v514, %v514
    %v523 = vpack.c.bf16 %v515, %v515
    %v524 = vpack.c.bf16 %v516, %v516
    %v525 = vpack.c.bf16 %v517, %v517
    %v526 = vld [vmem:[#allocation8] sm:$0xff]
    %v527 = vld [vmem:[#allocation8 + $0x8] sm:$0xff]
    %v528 = vld [vmem:[#allocation8 + $0x10] sm:$0xff]
    %v529 = vld [vmem:[#allocation8 + $0x18] sm:$0xff]
    %v530 = vld [vmem:[#allocation8 + $0x20] sm:$0xff]
    %v531 = vld [vmem:[#allocation8 + $0x28] sm:$0xff]
    %v532 = vld [vmem:[#allocation8 + $0x30] sm:$0xff]
    %v533 = vld [vmem:[#allocation8 + $0x38] sm:$0xff]
    %v534 = vld [vmem:[#allocation8 + $0x40] sm:$0xff]
    %v535 = vld [vmem:[#allocation8 + $0x48] sm:$0xff]
    %v536 = vld [vmem:[#allocation8 + $0x50] sm:$0xff]
    %v537 = vld [vmem:[#allocation8 + $0x58] sm:$0xff]
    %v538 = vld [vmem:[#allocation8 + $0x60] sm:$0xff]
    %v539 = vld [vmem:[#allocation8 + $0x68] sm:$0xff]
    %v540 = vld [vmem:[#allocation8 + $0x70] sm:$0xff]
    %v541 = vld [vmem:[#allocation8 + $0x78] sm:$0xff]
    %v542 = vld [vmem:[#allocation8 + $0x80] sm:$0xff]
    %v543 = vld [vmem:[#allocation8 + $0x88] sm:$0xff]
    %v544 = vld [vmem:[#allocation8 + $0x90] sm:$0xff]
    %v545 = vld [vmem:[#allocation8 + $0x98] sm:$0xff]
    %v546 = vld [vmem:[#allocation8 + $0xa0] sm:$0xff]
    %v547 = vld [vmem:[#allocation8 + $0xa8] sm:$0xff]
    %v548 = vld [vmem:[#allocation8 + $0xb0] sm:$0xff]
    %v549 = vld [vmem:[#allocation8 + $0xb8] sm:$0xff]
    %v550 = vld [vmem:[#allocation8 + $0xc0] sm:$0xff]
    %v551 = vld [vmem:[#allocation8 + $0xc8] sm:$0xff]
    %v552 = vld [vmem:[#allocation8 + $0xd0] sm:$0xff]
    %v553 = vld [vmem:[#allocation8 + $0xd8] sm:$0xff]
    %v554 = vld [vmem:[#allocation8 + $0xe0] sm:$0xff]
    %v555 = vld [vmem:[#allocation8 + $0xe8] sm:$0xff]
    %v556 = vld [vmem:[#allocation8 + $0xf0] sm:$0xff]
    %v557 = vld [vmem:[#allocation8 + $0xf8] sm:$0xff]
    %v558 = vld [vmem:[#allocation8 + $0x100] sm:$0xff]
    %v559 = vld [vmem:[#allocation8 + $0x108] sm:$0xff]
    %v560 = vld [vmem:[#allocation8 + $0x110] sm:$0xff]
    %v561 = vld [vmem:[#allocation8 + $0x118] sm:$0xff]
    %v562 = vld [vmem:[#allocation8 + $0x120] sm:$0xff]
    %v563 = vld [vmem:[#allocation8 + $0x128] sm:$0xff]
    %v564 = vld [vmem:[#allocation8 + $0x130] sm:$0xff]
    %v565 = vld [vmem:[#allocation8 + $0x138] sm:$0xff]
    %v566 = vld [vmem:[#allocation8 + $0x140] sm:$0xff]
    %v567 = vld [vmem:[#allocation8 + $0x148] sm:$0xff]
    %v568 = vld [vmem:[#allocation8 + $0x150] sm:$0xff]
    %v569 = vld [vmem:[#allocation8 + $0x158] sm:$0xff]
    %v570 = vld [vmem:[#allocation8 + $0x160] sm:$0xff]
    %v571 = vld [vmem:[#allocation8 + $0x168] sm:$0xff]
    %v572 = vld [vmem:[#allocation8 + $0x170] sm:$0xff]
    %v573 = vld [vmem:[#allocation8 + $0x178] sm:$0xff]
    %v574 = vld [vmem:[#allocation8 + $0x180] sm:$0xff]
    %v575 = vld [vmem:[#allocation8 + $0x188] sm:$0xff]
    %v576 = vld [vmem:[#allocation8 + $0x190] sm:$0xff]
    %v577 = vld [vmem:[#allocation8 + $0x198] sm:$0xff]
    %v578 = vld [vmem:[#allocation8 + $0x1a0] sm:$0xff]
    %v579 = vld [vmem:[#allocation8 + $0x1a8] sm:$0xff]
    %v580 = vld [vmem:[#allocation8 + $0x1b0] sm:$0xff]
    %v581 = vld [vmem:[#allocation8 + $0x1b8] sm:$0xff]
    %v582 = vld [vmem:[#allocation8 + $0x1c0] sm:$0xff]
    %v583 = vld [vmem:[#allocation8 + $0x1c8] sm:$0xff]
    %v584 = vld [vmem:[#allocation8 + $0x1d0] sm:$0xff]
    %v585 = vld [vmem:[#allocation8 + $0x1d8] sm:$0xff]
    %v586 = vld [vmem:[#allocation8 + $0x1e0] sm:$0xff]
    %v587 = vld [vmem:[#allocation8 + $0x1e8] sm:$0xff]
    %v588 = vld [vmem:[#allocation8 + $0x1f0] sm:$0xff]
    %v589 = vld [vmem:[#allocation8 + $0x1f8] sm:$0xff]
    %v590 = vld [vmem:[#allocation8 + $0x200] sm:$0xff]
    %v591 = vld [vmem:[#allocation8 + $0x208] sm:$0xff]
    %v592 = vld [vmem:[#allocation8 + $0x210] sm:$0xff]
    %v593 = vld [vmem:[#allocation8 + $0x218] sm:$0xff]
    %v594 = vld [vmem:[#allocation8 + $0x220] sm:$0xff]
    %v595 = vld [vmem:[#allocation8 + $0x228] sm:$0xff]
    %v596 = vld [vmem:[#allocation8 + $0x230] sm:$0xff]
    %v597 = vld [vmem:[#allocation8 + $0x238] sm:$0xff]
    %v598 = vld [vmem:[#allocation8 + $0x240] sm:$0xff]
    %v599 = vld [vmem:[#allocation8 + $0x248] sm:$0xff]
    %v600 = vld [vmem:[#allocation8 + $0x250] sm:$0xff]
    %v601 = vld [vmem:[#allocation8 + $0x258] sm:$0xff]
    %v602 = vld [vmem:[#allocation8 + $0x260] sm:$0xff]
    %v603 = vld [vmem:[#allocation8 + $0x268] sm:$0xff]
    %v604 = vld [vmem:[#allocation8 + $0x270] sm:$0xff]
    %v605 = vld [vmem:[#allocation8 + $0x278] sm:$0xff]
    %v606 = vld [vmem:[#allocation8 + $0x280] sm:$0xff]
    %v607 = vld [vmem:[#allocation8 + $0x288] sm:$0xff]
    %v608 = vld [vmem:[#allocation8 + $0x290] sm:$0xff]
    %v609 = vld [vmem:[#allocation8 + $0x298] sm:$0xff]
    %v610 = vld [vmem:[#allocation8 + $0x2a0] sm:$0xff]
    %v611 = vld [vmem:[#allocation8 + $0x2a8] sm:$0xff]
    %v612 = vld [vmem:[#allocation8 + $0x2b0] sm:$0xff]
    %v613 = vld [vmem:[#allocation8 + $0x2b8] sm:$0xff]
    %v614 = vld [vmem:[#allocation8 + $0x2c0] sm:$0xff]
    %v615 = vld [vmem:[#allocation8 + $0x2c8] sm:$0xff]
    %v616 = vld [vmem:[#allocation8 + $0x2d0] sm:$0xff]
    %v617 = vld [vmem:[#allocation8 + $0x2d8] sm:$0xff]
    %v618 = vld [vmem:[#allocation8 + $0x2e0] sm:$0xff]
    %v619 = vld [vmem:[#allocation8 + $0x2e8] sm:$0xff]
    %v620 = vld [vmem:[#allocation8 + $0x2f0] sm:$0xff]
    %v621 = vld [vmem:[#allocation8 + $0x2f8] sm:$0xff]
    %v622 = vld [vmem:[#allocation8 + $0x300] sm:$0xff]
    %v623 = vld [vmem:[#allocation8 + $0x308] sm:$0xff]
    %v624 = vld [vmem:[#allocation8 + $0x310] sm:$0xff]
    %v625 = vld [vmem:[#allocation8 + $0x318] sm:$0xff]
    %v626 = vld [vmem:[#allocation8 + $0x320] sm:$0xff]
    %v627 = vld [vmem:[#allocation8 + $0x328] sm:$0xff]
    %v628 = vld [vmem:[#allocation8 + $0x330] sm:$0xff]
    %v629 = vld [vmem:[#allocation8 + $0x338] sm:$0xff]
    %v630 = vld [vmem:[#allocation8 + $0x340] sm:$0xff]
    %v631 = vld [vmem:[#allocation8 + $0x348] sm:$0xff]
    %v632 = vld [vmem:[#allocation8 + $0x350] sm:$0xff]
    %v633 = vld [vmem:[#allocation8 + $0x358] sm:$0xff]
    %v634 = vld [vmem:[#allocation8 + $0x360] sm:$0xff]
    %v635 = vld [vmem:[#allocation8 + $0x368] sm:$0xff]
    %v636 = vld [vmem:[#allocation8 + $0x370] sm:$0xff]
    %v637 = vld [vmem:[#allocation8 + $0x378] sm:$0xff]
    %v638 = vld [vmem:[#allocation8 + $0x380] sm:$0xff]
    %v639 = vld [vmem:[#allocation8 + $0x388] sm:$0xff]
    %v640 = vld [vmem:[#allocation8 + $0x390] sm:$0xff]
    %v641 = vld [vmem:[#allocation8 + $0x398] sm:$0xff]
    %v642 = vld [vmem:[#allocation8 + $0x3a0] sm:$0xff]
    %v643 = vld [vmem:[#allocation8 + $0x3a8] sm:$0xff]
    %v644 = vld [vmem:[#allocation8 + $0x3b0] sm:$0xff]
    %v645 = vld [vmem:[#allocation8 + $0x3b8] sm:$0xff]
    %v646 = vld [vmem:[#allocation8 + $0x3c0] sm:$0xff]
    %v647 = vld [vmem:[#allocation8 + $0x3c8] sm:$0xff]
    %v648 = vld [vmem:[#allocation8 + $0x3d0] sm:$0xff]
    %v649 = vld [vmem:[#allocation8 + $0x3d8] sm:$0xff]
    %v650 = vld [vmem:[#allocation8 + $0x3e0] sm:$0xff]
    %v651 = vld [vmem:[#allocation8 + $0x3e8] sm:$0xff]
    %v652 = vld [vmem:[#allocation8 + $0x3f0] sm:$0xff]
    %v653 = vld [vmem:[#allocation8 + $0x3f8] sm:$0xff]
    %v654 = vld [vmem:[#allocation8 + $0x400] sm:$0xff]
    %v655 = vld [vmem:[#allocation8 + $0x408] sm:$0xff]
    %v656 = vld [vmem:[#allocation8 + $0x410] sm:$0xff]
    %v657 = vld [vmem:[#allocation8 + $0x418] sm:$0xff]
    %v658 = vld [vmem:[#allocation8 + $0x420] sm:$0xff]
    %v659 = vld [vmem:[#allocation8 + $0x428] sm:$0xff]
    %v660 = vld [vmem:[#allocation8 + $0x430] sm:$0xff]
    %v661 = vld [vmem:[#allocation8 + $0x438] sm:$0xff]
    %v662 = vld [vmem:[#allocation8 + $0x440] sm:$0xff]
    %v663 = vld [vmem:[#allocation8 + $0x448] sm:$0xff]
    %v664 = vld [vmem:[#allocation8 + $0x450] sm:$0xff]
    %v665 = vld [vmem:[#allocation8 + $0x458] sm:$0xff]
    %v666 = vld [vmem:[#allocation8 + $0x460] sm:$0xff]
    %v667 = vld [vmem:[#allocation8 + $0x468] sm:$0xff]
    %v668 = vld [vmem:[#allocation8 + $0x470] sm:$0xff]
    %v669 = vld [vmem:[#allocation8 + $0x478] sm:$0xff]
    %v670 = vld [vmem:[#allocation8 + $0x480] sm:$0xff]
    %v671 = vld [vmem:[#allocation8 + $0x488] sm:$0xff]
    %v672 = vld [vmem:[#allocation8 + $0x490] sm:$0xff]
    %v673 = vld [vmem:[#allocation8 + $0x498] sm:$0xff]
    %v674 = vld [vmem:[#allocation8 + $0x4a0] sm:$0xff]
    %v675 = vld [vmem:[#allocation8 + $0x4a8] sm:$0xff]
    %v676 = vld [vmem:[#allocation8 + $0x4b0] sm:$0xff]
    %v677 = vld [vmem:[#allocation8 + $0x4b8] sm:$0xff]
    %v678 = vld [vmem:[#allocation8 + $0x4c0] sm:$0xff]
    %v679 = vld [vmem:[#allocation8 + $0x4c8] sm:$0xff]
    %v680 = vld [vmem:[#allocation8 + $0x4d0] sm:$0xff]
    %v681 = vld [vmem:[#allocation8 + $0x4d8] sm:$0xff]
    %v682 = vld [vmem:[#allocation8 + $0x4e0] sm:$0xff]
    %v683 = vld [vmem:[#allocation8 + $0x4e8] sm:$0xff]
    %v684 = vld [vmem:[#allocation8 + $0x4f0] sm:$0xff]
    %v685 = vld [vmem:[#allocation8 + $0x4f8] sm:$0xff]
    %v686 = vld [vmem:[#allocation8 + $0x500] sm:$0xff]
    %v687 = vld [vmem:[#allocation8 + $0x508] sm:$0xff]
    %v688 = vld [vmem:[#allocation8 + $0x510] sm:$0xff]
    %v689 = vld [vmem:[#allocation8 + $0x518] sm:$0xff]
    %v690 = vld [vmem:[#allocation8 + $0x520] sm:$0xff]
    %v691 = vld [vmem:[#allocation8 + $0x528] sm:$0xff]
    %v692 = vld [vmem:[#allocation8 + $0x530] sm:$0xff]
    %v693 = vld [vmem:[#allocation8 + $0x538] sm:$0xff]
    %v694 = vld [vmem:[#allocation8 + $0x540] sm:$0xff]
    %v695 = vld [vmem:[#allocation8 + $0x548] sm:$0xff]
    %v696 = vld [vmem:[#allocation8 + $0x550] sm:$0xff]
    %v697 = vld [vmem:[#allocation8 + $0x558] sm:$0xff]
    %v698 = vld [vmem:[#allocation8 + $0x560] sm:$0xff]
    %v699 = vld [vmem:[#allocation8 + $0x568] sm:$0xff]
    %v700 = vld [vmem:[#allocation8 + $0x570] sm:$0xff]
    %v701 = vld [vmem:[#allocation8 + $0x578] sm:$0xff]
    %v702 = vld [vmem:[#allocation8 + $0x580] sm:$0xff]
    %v703 = vld [vmem:[#allocation8 + $0x588] sm:$0xff]
    %v704 = vld [vmem:[#allocation8 + $0x590] sm:$0xff]
    %v705 = vld [vmem:[#allocation8 + $0x598] sm:$0xff]
    %v706 = vld [vmem:[#allocation8 + $0x5a0] sm:$0xff]
    %v707 = vld [vmem:[#allocation8 + $0x5a8] sm:$0xff]
    %v708 = vld [vmem:[#allocation8 + $0x5b0] sm:$0xff]
    %v709 = vld [vmem:[#allocation8 + $0x5b8] sm:$0xff]
    %v710 = vld [vmem:[#allocation8 + $0x5c0] sm:$0xff]
    %v711 = vld [vmem:[#allocation8 + $0x5c8] sm:$0xff]
    %v712 = vld [vmem:[#allocation8 + $0x5d0] sm:$0xff]
    %v713 = vld [vmem:[#allocation8 + $0x5d8] sm:$0xff]
    %v714 = vld [vmem:[#allocation8 + $0x5e0] sm:$0xff]
    %v715 = vld [vmem:[#allocation8 + $0x5e8] sm:$0xff]
    %v716 = vld [vmem:[#allocation8 + $0x5f0] sm:$0xff]
    %v717 = vld [vmem:[#allocation8 + $0x5f8] sm:$0xff]
    %v718 = vld [vmem:[#allocation8 + $0x600] sm:$0xff]
    %v719 = vld [vmem:[#allocation8 + $0x608] sm:$0xff]
    %v720 = vld [vmem:[#allocation8 + $0x610] sm:$0xff]
    %v721 = vld [vmem:[#allocation8 + $0x618] sm:$0xff]
    %v722 = vld [vmem:[#allocation8 + $0x620] sm:$0xff]
    %v723 = vld [vmem:[#allocation8 + $0x628] sm:$0xff]
    %v724 = vld [vmem:[#allocation8 + $0x630] sm:$0xff]
    %v725 = vld [vmem:[#allocation8 + $0x638] sm:$0xff]
    %v726 = vld [vmem:[#allocation8 + $0x640] sm:$0xff]
    %v727 = vld [vmem:[#allocation8 + $0x648] sm:$0xff]
    %v728 = vld [vmem:[#allocation8 + $0x650] sm:$0xff]
    %v729 = vld [vmem:[#allocation8 + $0x658] sm:$0xff]
    %v730 = vld [vmem:[#allocation8 + $0x660] sm:$0xff]
    %v731 = vld [vmem:[#allocation8 + $0x668] sm:$0xff]
    %v732 = vld [vmem:[#allocation8 + $0x670] sm:$0xff]
    %v733 = vld [vmem:[#allocation8 + $0x678] sm:$0xff]
    %v734 = vld [vmem:[#allocation8 + $0x680] sm:$0xff]
    %v735 = vld [vmem:[#allocation8 + $0x688] sm:$0xff]
    %v736 = vld [vmem:[#allocation8 + $0x690] sm:$0xff]
    %v737 = vld [vmem:[#allocation8 + $0x698] sm:$0xff]
    %v738 = vld [vmem:[#allocation8 + $0x6a0] sm:$0xff]
    %v739 = vld [vmem:[#allocation8 + $0x6a8] sm:$0xff]
    %v740 = vld [vmem:[#allocation8 + $0x6b0] sm:$0xff]
    %v741 = vld [vmem:[#allocation8 + $0x6b8] sm:$0xff]
    %v742 = vld [vmem:[#allocation8 + $0x6c0] sm:$0xff]
    %v743 = vld [vmem:[#allocation8 + $0x6c8] sm:$0xff]
    %v744 = vld [vmem:[#allocation8 + $0x6d0] sm:$0xff]
    %v745 = vld [vmem:[#allocation8 + $0x6d8] sm:$0xff]
    %v746 = vld [vmem:[#allocation8 + $0x6e0] sm:$0xff]
    %v747 = vld [vmem:[#allocation8 + $0x6e8] sm:$0xff]
    %v748 = vld [vmem:[#allocation8 + $0x6f0] sm:$0xff]
    %v749 = vld [vmem:[#allocation8 + $0x6f8] sm:$0xff]
    %v750 = vld [vmem:[#allocation8 + $0x700] sm:$0xff]
    %v751 = vld [vmem:[#allocation8 + $0x708] sm:$0xff]
    %v752 = vld [vmem:[#allocation8 + $0x710] sm:$0xff]
    %v753 = vld [vmem:[#allocation8 + $0x718] sm:$0xff]
    %v754 = vld [vmem:[#allocation8 + $0x720] sm:$0xff]
    %v755 = vld [vmem:[#allocation8 + $0x728] sm:$0xff]
    %v756 = vld [vmem:[#allocation8 + $0x730] sm:$0xff]
    %v757 = vld [vmem:[#allocation8 + $0x738] sm:$0xff]
    %v758 = vld [vmem:[#allocation8 + $0x740] sm:$0xff]
    %v759 = vld [vmem:[#allocation8 + $0x748] sm:$0xff]
    %v760 = vld [vmem:[#allocation8 + $0x750] sm:$0xff]
    %v761 = vld [vmem:[#allocation8 + $0x758] sm:$0xff]
    %v762 = vld [vmem:[#allocation8 + $0x760] sm:$0xff]
    %v763 = vld [vmem:[#allocation8 + $0x768] sm:$0xff]
    %v764 = vld [vmem:[#allocation8 + $0x770] sm:$0xff]
    %v765 = vld [vmem:[#allocation8 + $0x778] sm:$0xff]
    %v766 = vld [vmem:[#allocation8 + $0x780] sm:$0xff]
    %v767 = vld [vmem:[#allocation8 + $0x788] sm:$0xff]
    %v768 = vld [vmem:[#allocation8 + $0x790] sm:$0xff]
    %v769 = vld [vmem:[#allocation8 + $0x798] sm:$0xff]
    %v770 = vld [vmem:[#allocation8 + $0x7a0] sm:$0xff]
    %v771 = vld [vmem:[#allocation8 + $0x7a8] sm:$0xff]
    %v772 = vld [vmem:[#allocation8 + $0x7b0] sm:$0xff]
    %v773 = vld [vmem:[#allocation8 + $0x7b8] sm:$0xff]
    %v774 = vld [vmem:[#allocation8 + $0x7c0] sm:$0xff]
    %v775 = vld [vmem:[#allocation8 + $0x7c8] sm:$0xff]
    %v776 = vld [vmem:[#allocation8 + $0x7d0] sm:$0xff]
    %v777 = vld [vmem:[#allocation8 + $0x7d8] sm:$0xff]
    %v778 = vld [vmem:[#allocation8 + $0x7e0] sm:$0xff]
    %v779 = vld [vmem:[#allocation8 + $0x7e8] sm:$0xff]
    %v780 = vld [vmem:[#allocation8 + $0x7f0] sm:$0xff]
    %v781 = vld [vmem:[#allocation8 + $0x7f8] sm:$0xff]
    %v782 = vld [vmem:[%s4] sm:$0xf]
    %v784 = vlaneseq
    %v785 = vshrl.u32 %v784, 7
    %v786 = vsub.s32 0, %v785
    %v787 = vrot.slane %v782, %v786
    %v788 = vlaneseq
    %v789 = vshrl.u32 %v788, 7
    %v790 = vsub.s32 1, %v789
    %v791 = vrot.slane %v782, %v790
    %v792 = vlaneseq
    %v793 = vshrl.u32 %v792, 7
    %v794 = vsub.s32 2, %v793
    %v795 = vrot.slane %v782, %v794
    %v796 = vlaneseq
    %v797 = vshrl.u32 %v796, 7
    %v798 = vsub.s32 3, %v797
    %v799 = vrot.slane %v782, %v798
    %v1060 = vunpack.c.l.b16 %v526
    %v1061 = vunpack.c.h.b16 %v526
    %v1062 = vunpack.c.l.b16 %v527
    %v1063 = vunpack.c.h.b16 %v527
    %v1064 = vunpack.c.l.b16 %v528
    %v1065 = vunpack.c.h.b16 %v528
    %v1066 = vunpack.c.l.b16 %v529
    %v1067 = vunpack.c.h.b16 %v529
    %v1068 = vunpack.c.l.b16 %v530
    %v1069 = vunpack.c.h.b16 %v530
    %v1070 = vunpack.c.l.b16 %v531
    %v1071 = vunpack.c.h.b16 %v531
    %v1072 = vunpack.c.l.b16 %v532
    %v1073 = vunpack.c.h.b16 %v532
    %v1074 = vunpack.c.l.b16 %v533
    %v1075 = vunpack.c.h.b16 %v533
    %v1076 = vunpack.c.l.b16 %v534
    %v1077 = vunpack.c.h.b16 %v534
    %v1078 = vunpack.c.l.b16 %v535
    %v1079 = vunpack.c.h.b16 %v535
    %v1080 = vunpack.c.l.b16 %v536
    %v1081 = vunpack.c.h.b16 %v536
    %v1082 = vunpack.c.l.b16 %v537
    %v1083 = vunpack.c.h.b16 %v537
    %v1084 = vunpack.c.l.b16 %v538
    %v1085 = vunpack.c.h.b16 %v538
    %v1086 = vunpack.c.l.b16 %v539
    %v1087 = vunpack.c.h.b16 %v539
    %v1088 = vunpack.c.l.b16 %v540
    %v1089 = vunpack.c.h.b16 %v540
    %v1090 = vunpack.c.l.b16 %v541
    %v1091 = vunpack.c.h.b16 %v541
    %v1092 = vunpack.c.l.b16 %v542
    %v1093 = vunpack.c.h.b16 %v542
    %v1094 = vunpack.c.l.b16 %v543
    %v1095 = vunpack.c.h.b16 %v543
    %v1096 = vunpack.c.l.b16 %v544
    %v1097 = vunpack.c.h.b16 %v544
    %v1098 = vunpack.c.l.b16 %v545
    %v1099 = vunpack.c.h.b16 %v545
    %v1100 = vunpack.c.l.b16 %v546
    %v1101 = vunpack.c.h.b16 %v546
    %v1102 = vunpack.c.l.b16 %v547
    %v1103 = vunpack.c.h.b16 %v547
    %v1104 = vunpack.c.l.b16 %v548
    %v1105 = vunpack.c.h.b16 %v548
    %v1106 = vunpack.c.l.b16 %v549
    %v1107 = vunpack.c.h.b16 %v549
    %v1108 = vunpack.c.l.b16 %v550
    %v1109 = vunpack.c.h.b16 %v550
    %v1110 = vunpack.c.l.b16 %v551
    %v1111 = vunpack.c.h.b16 %v551
    %v1112 = vunpack.c.l.b16 %v552
    %v1113 = vunpack.c.h.b16 %v552
    %v1114 = vunpack.c.l.b16 %v553
    %v1115 = vunpack.c.h.b16 %v553
    %v1116 = vunpack.c.l.b16 %v554
    %v1117 = vunpack.c.h.b16 %v554
    %v1118 = vunpack.c.l.b16 %v555
    %v1119 = vunpack.c.h.b16 %v555
    %v1120 = vunpack.c.l.b16 %v556
    %v1121 = vunpack.c.h.b16 %v556
    %v1122 = vunpack.c.l.b16 %v557
    %v1123 = vunpack.c.h.b16 %v557
    %v1124 = vunpack.c.l.b16 %v558
    %v1125 = vunpack.c.h.b16 %v558
    %v1126 = vunpack.c.l.b16 %v559
    %v1127 = vunpack.c.h.b16 %v559
    %v1128 = vunpack.c.l.b16 %v560
    %v1129 = vunpack.c.h.b16 %v560
    %v1130 = vunpack.c.l.b16 %v561
    %v1131 = vunpack.c.h.b16 %v561
    %v1132 = vunpack.c.l.b16 %v562
    %v1133 = vunpack.c.h.b16 %v562
    %v1134 = vunpack.c.l.b16 %v563
    %v1135 = vunpack.c.h.b16 %v563
    %v1136 = vunpack.c.l.b16 %v564
    %v1137 = vunpack.c.h.b16 %v564
    %v1138 = vunpack.c.l.b16 %v565
    %v1139 = vunpack.c.h.b16 %v565
    %v1140 = vunpack.c.l.b16 %v566
    %v1141 = vunpack.c.h.b16 %v566
    %v1142 = vunpack.c.l.b16 %v567
    %v1143 = vunpack.c.h.b16 %v567
    %v1144 = vunpack.c.l.b16 %v568
    %v1145 = vunpack.c.h.b16 %v568
    %v1146 = vunpack.c.l.b16 %v569
    %v1147 = vunpack.c.h.b16 %v569
    %v1148 = vunpack.c.l.b16 %v570
    %v1149 = vunpack.c.h.b16 %v570
    %v1150 = vunpack.c.l.b16 %v571
    %v1151 = vunpack.c.h.b16 %v571
    %v1152 = vunpack.c.l.b16 %v572
    %v1153 = vunpack.c.h.b16 %v572
    %v1154 = vunpack.c.l.b16 %v573
    %v1155 = vunpack.c.h.b16 %v573
    %v1156 = vunpack.c.l.b16 %v574
    %v1157 = vunpack.c.h.b16 %v574
    %v1158 = vunpack.c.l.b16 %v575
    %v1159 = vunpack.c.h.b16 %v575
    %v1160 = vunpack.c.l.b16 %v576
    %v1161 = vunpack.c.h.b16 %v576
    %v1162 = vunpack.c.l.b16 %v577
    %v1163 = vunpack.c.h.b16 %v577
    %v1164 = vunpack.c.l.b16 %v578
    %v1165 = vunpack.c.h.b16 %v578
    %v1166 = vunpack.c.l.b16 %v579
    %v1167 = vunpack.c.h.b16 %v579
    %v1168 = vunpack.c.l.b16 %v580
    %v1169 = vunpack.c.h.b16 %v580
    %v1170 = vunpack.c.l.b16 %v581
    %v1171 = vunpack.c.h.b16 %v581
    %v1172 = vunpack.c.l.b16 %v582
    %v1173 = vunpack.c.h.b16 %v582
    %v1174 = vunpack.c.l.b16 %v583
    %v1175 = vunpack.c.h.b16 %v583
    %v1176 = vunpack.c.l.b16 %v584
    %v1177 = vunpack.c.h.b16 %v584
    %v1178 = vunpack.c.l.b16 %v585
    %v1179 = vunpack.c.h.b16 %v585
    %v1180 = vunpack.c.l.b16 %v586
    %v1181 = vunpack.c.h.b16 %v586
    %v1182 = vunpack.c.l.b16 %v587
    %v1183 = vunpack.c.h.b16 %v587
    %v1184 = vunpack.c.l.b16 %v588
    %v1185 = vunpack.c.h.b16 %v588
    %v1186 = vunpack.c.l.b16 %v589
    %v1187 = vunpack.c.h.b16 %v589
    %v1188 = vunpack.c.l.b16 %v590
    %v1189 = vunpack.c.h.b16 %v590
    %v1190 = vunpack.c.l.b16 %v591
    %v1191 = vunpack.c.h.b16 %v591
    %v1192 = vunpack.c.l.b16 %v592
    %v1193 = vunpack.c.h.b16 %v592
    %v1194 = vunpack.c.l.b16 %v593
    %v1195 = vunpack.c.h.b16 %v593
    %v1196 = vunpack.c.l.b16 %v594
    %v1197 = vunpack.c.h.b16 %v594
    %v1198 = vunpack.c.l.b16 %v595
    %v1199 = vunpack.c.h.b16 %v595
    %v1200 = vunpack.c.l.b16 %v596
    %v1201 = vunpack.c.h.b16 %v596
    %v1202 = vunpack.c.l.b16 %v597
    %v1203 = vunpack.c.h.b16 %v597
    %v1204 = vunpack.c.l.b16 %v598
    %v1205 = vunpack.c.h.b16 %v598
    %v1206 = vunpack.c.l.b16 %v599
    %v1207 = vunpack.c.h.b16 %v599
    %v1208 = vunpack.c.l.b16 %v600
    %v1209 = vunpack.c.h.b16 %v600
    %v1210 = vunpack.c.l.b16 %v601
    %v1211 = vunpack.c.h.b16 %v601
    %v1212 = vunpack.c.l.b16 %v602
    %v1213 = vunpack.c.h.b16 %v602
    %v1214 = vunpack.c.l.b16 %v603
    %v1215 = vunpack.c.h.b16 %v603
    %v1216 = vunpack.c.l.b16 %v604
    %v1217 = vunpack.c.h.b16 %v604
    %v1218 = vunpack.c.l.b16 %v605
    %v1219 = vunpack.c.h.b16 %v605
    %v1220 = vunpack.c.l.b16 %v606
    %v1221 = vunpack.c.h.b16 %v606
    %v1222 = vunpack.c.l.b16 %v607
    %v1223 = vunpack.c.h.b16 %v607
    %v1224 = vunpack.c.l.b16 %v608
    %v1225 = vunpack.c.h.b16 %v608
    %v1226 = vunpack.c.l.b16 %v609
    %v1227 = vunpack.c.h.b16 %v609
    %v1228 = vunpack.c.l.b16 %v610
    %v1229 = vunpack.c.h.b16 %v610
    %v1230 = vunpack.c.l.b16 %v611
    %v1231 = vunpack.c.h.b16 %v611
    %v1232 = vunpack.c.l.b16 %v612
    %v1233 = vunpack.c.h.b16 %v612
    %v1234 = vunpack.c.l.b16 %v613
    %v1235 = vunpack.c.h.b16 %v613
    %v1236 = vunpack.c.l.b16 %v614
    %v1237 = vunpack.c.h.b16 %v614
    %v1238 = vunpack.c.l.b16 %v615
    %v1239 = vunpack.c.h.b16 %v615
    %v1240 = vunpack.c.l.b16 %v616
    %v1241 = vunpack.c.h.b16 %v616
    %v1242 = vunpack.c.l.b16 %v617
    %v1243 = vunpack.c.h.b16 %v617
    %v1244 = vunpack.c.l.b16 %v618
    %v1245 = vunpack.c.h.b16 %v618
    %v1246 = vunpack.c.l.b16 %v619
    %v1247 = vunpack.c.h.b16 %v619
    %v1248 = vunpack.c.l.b16 %v620
    %v1249 = vunpack.c.h.b16 %v620
    %v1250 = vunpack.c.l.b16 %v621
    %v1251 = vunpack.c.h.b16 %v621
    %v1252 = vunpack.c.l.b16 %v622
    %v1253 = vunpack.c.h.b16 %v622
    %v1254 = vunpack.c.l.b16 %v623
    %v1255 = vunpack.c.h.b16 %v623
    %v1256 = vunpack.c.l.b16 %v624
    %v1257 = vunpack.c.h.b16 %v624
    %v1258 = vunpack.c.l.b16 %v625
    %v1259 = vunpack.c.h.b16 %v625
    %v1260 = vunpack.c.l.b16 %v626
    %v1261 = vunpack.c.h.b16 %v626
    %v1262 = vunpack.c.l.b16 %v627
    %v1263 = vunpack.c.h.b16 %v627
    %v1264 = vunpack.c.l.b16 %v628
    %v1265 = vunpack.c.h.b16 %v628
    %v1266 = vunpack.c.l.b16 %v629
    %v1267 = vunpack.c.h.b16 %v629
    %v1268 = vunpack.c.l.b16 %v630
    %v1269 = vunpack.c.h.b16 %v630
    %v1270 = vunpack.c.l.b16 %v631
    %v1271 = vunpack.c.h.b16 %v631
    %v1272 = vunpack.c.l.b16 %v632
    %v1273 = vunpack.c.h.b16 %v632
    %v1274 = vunpack.c.l.b16 %v633
    %v1275 = vunpack.c.h.b16 %v633
    %v1276 = vunpack.c.l.b16 %v634
    %v1277 = vunpack.c.h.b16 %v634
    %v1278 = vunpack.c.l.b16 %v635
    %v1279 = vunpack.c.h.b16 %v635
    %v1280 = vunpack.c.l.b16 %v636
    %v1281 = vunpack.c.h.b16 %v636
    %v1282 = vunpack.c.l.b16 %v637
    %v1283 = vunpack.c.h.b16 %v637
    %v1284 = vunpack.c.l.b16 %v638
    %v1285 = vunpack.c.h.b16 %v638
    %v1286 = vunpack.c.l.b16 %v639
    %v1287 = vunpack.c.h.b16 %v639
    %v1288 = vunpack.c.l.b16 %v640
    %v1289 = vunpack.c.h.b16 %v640
    %v1290 = vunpack.c.l.b16 %v641
    %v1291 = vunpack.c.h.b16 %v641
    %v1292 = vunpack.c.l.b16 %v642
    %v1293 = vunpack.c.h.b16 %v642
    %v1294 = vunpack.c.l.b16 %v643
    %v1295 = vunpack.c.h.b16 %v643
    %v1296 = vunpack.c.l.b16 %v644
    %v1297 = vunpack.c.h.b16 %v644
    %v1298 = vunpack.c.l.b16 %v645
    %v1299 = vunpack.c.h.b16 %v645
    %v1300 = vunpack.c.l.b16 %v646
    %v1301 = vunpack.c.h.b16 %v646
    %v1302 = vunpack.c.l.b16 %v647
    %v1303 = vunpack.c.h.b16 %v647
    %v1304 = vunpack.c.l.b16 %v648
    %v1305 = vunpack.c.h.b16 %v648
    %v1306 = vunpack.c.l.b16 %v649
    %v1307 = vunpack.c.h.b16 %v649
    %v1308 = vunpack.c.l.b16 %v650
    %v1309 = vunpack.c.h.b16 %v650
    %v1310 = vunpack.c.l.b16 %v651
    %v1311 = vunpack.c.h.b16 %v651
    %v1312 = vunpack.c.l.b16 %v652
    %v1313 = vunpack.c.h.b16 %v652
    %v1314 = vunpack.c.l.b16 %v653
    %v1315 = vunpack.c.h.b16 %v653
    %v1316 = vunpack.c.l.b16 %v654
    %v1317 = vunpack.c.h.b16 %v654
    %v1318 = vunpack.c.l.b16 %v655
    %v1319 = vunpack.c.h.b16 %v655
    %v1320 = vunpack.c.l.b16 %v656
    %v1321 = vunpack.c.h.b16 %v656
    %v1322 = vunpack.c.l.b16 %v657
    %v1323 = vunpack.c.h.b16 %v657
    %v1324 = vunpack.c.l.b16 %v658
    %v1325 = vunpack.c.h.b16 %v658
    %v1326 = vunpack.c.l.b16 %v659
    %v1327 = vunpack.c.h.b16 %v659
    %v1328 = vunpack.c.l.b16 %v660
    %v1329 = vunpack.c.h.b16 %v660
    %v1330 = vunpack.c.l.b16 %v661
    %v1331 = vunpack.c.h.b16 %v661
    %v1332 = vunpack.c.l.b16 %v662
    %v1333 = vunpack.c.h.b16 %v662
    %v1334 = vunpack.c.l.b16 %v663
    %v1335 = vunpack.c.h.b16 %v663
    %v1336 = vunpack.c.l.b16 %v664
    %v1337 = vunpack.c.h.b16 %v664
    %v1338 = vunpack.c.l.b16 %v665
    %v1339 = vunpack.c.h.b16 %v665
    %v1340 = vunpack.c.l.b16 %v666
    %v1341 = vunpack.c.h.b16 %v666
    %v1342 = vunpack.c.l.b16 %v667
    %v1343 = vunpack.c.h.b16 %v667
    %v1344 = vunpack.c.l.b16 %v668
    %v1345 = vunpack.c.h.b16 %v668
    %v1346 = vunpack.c.l.b16 %v669
    %v1347 = vunpack.c.h.b16 %v669
    %v1348 = vunpack.c.l.b16 %v670
    %v1349 = vunpack.c.h.b16 %v670
    %v1350 = vunpack.c.l.b16 %v671
    %v1351 = vunpack.c.h.b16 %v671
    %v1352 = vunpack.c.l.b16 %v672
    %v1353 = vunpack.c.h.b16 %v672
    %v1354 = vunpack.c.l.b16 %v673
    %v1355 = vunpack.c.h.b16 %v673
    %v1356 = vunpack.c.l.b16 %v674
    %v1357 = vunpack.c.h.b16 %v674
    %v1358 = vunpack.c.l.b16 %v675
    %v1359 = vunpack.c.h.b16 %v675
    %v1360 = vunpack.c.l.b16 %v676
    %v1361 = vunpack.c.h.b16 %v676
    %v1362 = vunpack.c.l.b16 %v677
    %v1363 = vunpack.c.h.b16 %v677
    %v1364 = vunpack.c.l.b16 %v678
    %v1365 = vunpack.c.h.b16 %v678
    %v1366 = vunpack.c.l.b16 %v679
    %v1367 = vunpack.c.h.b16 %v679
    %v1368 = vunpack.c.l.b16 %v680
    %v1369 = vunpack.c.h.b16 %v680
    %v1370 = vunpack.c.l.b16 %v681
    %v1371 = vunpack.c.h.b16 %v681
    %v1372 = vunpack.c.l.b16 %v682
    %v1373 = vunpack.c.h.b16 %v682
    %v1374 = vunpack.c.l.b16 %v683
    %v1375 = vunpack.c.h.b16 %v683
    %v1376 = vunpack.c.l.b16 %v684
    %v1377 = vunpack.c.h.b16 %v684
    %v1378 = vunpack.c.l.b16 %v685
    %v1379 = vunpack.c.h.b16 %v685
    %v1380 = vunpack.c.l.b16 %v686
    %v1381 = vunpack.c.h.b16 %v686
    %v1382 = vunpack.c.l.b16 %v687
    %v1383 = vunpack.c.h.b16 %v687
    %v1384 = vunpack.c.l.b16 %v688
    %v1385 = vunpack.c.h.b16 %v688
    %v1386 = vunpack.c.l.b16 %v689
    %v1387 = vunpack.c.h.b16 %v689
    %v1388 = vunpack.c.l.b16 %v690
    %v1389 = vunpack.c.h.b16 %v690
    %v1390 = vunpack.c.l.b16 %v691
    %v1391 = vunpack.c.h.b16 %v691
    %v1392 = vunpack.c.l.b16 %v692
    %v1393 = vunpack.c.h.b16 %v692
    %v1394 = vunpack.c.l.b16 %v693
    %v1395 = vunpack.c.h.b16 %v693
    %v1396 = vunpack.c.l.b16 %v694
    %v1397 = vunpack.c.h.b16 %v694
    %v1398 = vunpack.c.l.b16 %v695
    %v1399 = vunpack.c.h.b16 %v695
    %v1400 = vunpack.c.l.b16 %v696
    %v1401 = vunpack.c.h.b16 %v696
    %v1402 = vunpack.c.l.b16 %v697
    %v1403 = vunpack.c.h.b16 %v697
    %v1404 = vunpack.c.l.b16 %v698
    %v1405 = vunpack.c.h.b16 %v698
    %v1406 = vunpack.c.l.b16 %v699
    %v1407 = vunpack.c.h.b16 %v699
    %v1408 = vunpack.c.l.b16 %v700
    %v1409 = vunpack.c.h.b16 %v700
    %v1410 = vunpack.c.l.b16 %v701
    %v1411 = vunpack.c.h.b16 %v701
    %v1412 = vunpack.c.l.b16 %v702
    %v1413 = vunpack.c.h.b16 %v702
    %v1414 = vunpack.c.l.b16 %v703
    %v1415 = vunpack.c.h.b16 %v703
    %v1416 = vunpack.c.l.b16 %v704
    %v1417 = vunpack.c.h.b16 %v704
    %v1418 = vunpack.c.l.b16 %v705
    %v1419 = vunpack.c.h.b16 %v705
    %v1420 = vunpack.c.l.b16 %v706
    %v1421 = vunpack.c.h.b16 %v706
    %v1422 = vunpack.c.l.b16 %v707
    %v1423 = vunpack.c.h.b16 %v707
    %v1424 = vunpack.c.l.b16 %v708
    %v1425 = vunpack.c.h.b16 %v708
    %v1426 = vunpack.c.l.b16 %v709
    %v1427 = vunpack.c.h.b16 %v709
    %v1428 = vunpack.c.l.b16 %v710
    %v1429 = vunpack.c.h.b16 %v710
    %v1430 = vunpack.c.l.b16 %v711
    %v1431 = vunpack.c.h.b16 %v711
    %v1432 = vunpack.c.l.b16 %v712
    %v1433 = vunpack.c.h.b16 %v712
    %v1434 = vunpack.c.l.b16 %v713
    %v1435 = vunpack.c.h.b16 %v713
    %v1436 = vunpack.c.l.b16 %v714
    %v1437 = vunpack.c.h.b16 %v714
    %v1438 = vunpack.c.l.b16 %v715
    %v1439 = vunpack.c.h.b16 %v715
    %v1440 = vunpack.c.l.b16 %v716
    %v1441 = vunpack.c.h.b16 %v716
    %v1442 = vunpack.c.l.b16 %v717
    %v1443 = vunpack.c.h.b16 %v717
    %v1444 = vunpack.c.l.b16 %v718
    %v1445 = vunpack.c.h.b16 %v718
    %v1446 = vunpack.c.l.b16 %v719
    %v1447 = vunpack.c.h.b16 %v719
    %v1448 = vunpack.c.l.b16 %v720
    %v1449 = vunpack.c.h.b16 %v720
    %v1450 = vunpack.c.l.b16 %v721
    %v1451 = vunpack.c.h.b16 %v721
    %v1452 = vunpack.c.l.b16 %v722
    %v1453 = vunpack.c.h.b16 %v722
    %v1454 = vunpack.c.l.b16 %v723
    %v1455 = vunpack.c.h.b16 %v723
    %v1456 = vunpack.c.l.b16 %v724
    %v1457 = vunpack.c.h.b16 %v724
    %v1458 = vunpack.c.l.b16 %v725
    %v1459 = vunpack.c.h.b16 %v725
    %v1460 = vunpack.c.l.b16 %v726
    %v1461 = vunpack.c.h.b16 %v726
    %v1462 = vunpack.c.l.b16 %v727
    %v1463 = vunpack.c.h.b16 %v727
    %v1464 = vunpack.c.l.b16 %v728
    %v1465 = vunpack.c.h.b16 %v728
    %v1466 = vunpack.c.l.b16 %v729
    %v1467 = vunpack.c.h.b16 %v729
    %v1468 = vunpack.c.l.b16 %v730
    %v1469 = vunpack.c.h.b16 %v730
    %v1470 = vunpack.c.l.b16 %v731
    %v1471 = vunpack.c.h.b16 %v731
    %v1472 = vunpack.c.l.b16 %v732
    %v1473 = vunpack.c.h.b16 %v732
    %v1474 = vunpack.c.l.b16 %v733
    %v1475 = vunpack.c.h.b16 %v733
    %v1476 = vunpack.c.l.b16 %v734
    %v1477 = vunpack.c.h.b16 %v734
    %v1478 = vunpack.c.l.b16 %v735
    %v1479 = vunpack.c.h.b16 %v735
    %v1480 = vunpack.c.l.b16 %v736
    %v1481 = vunpack.c.h.b16 %v736
    %v1482 = vunpack.c.l.b16 %v737
    %v1483 = vunpack.c.h.b16 %v737
    %v1484 = vunpack.c.l.b16 %v738
    %v1485 = vunpack.c.h.b16 %v738
    %v1486 = vunpack.c.l.b16 %v739
    %v1487 = vunpack.c.h.b16 %v739
    %v1488 = vunpack.c.l.b16 %v740
    %v1489 = vunpack.c.h.b16 %v740
    %v1490 = vunpack.c.l.b16 %v741
    %v1491 = vunpack.c.h.b16 %v741
    %v1492 = vunpack.c.l.b16 %v742
    %v1493 = vunpack.c.h.b16 %v742
    %v1494 = vunpack.c.l.b16 %v743
    %v1495 = vunpack.c.h.b16 %v743
    %v1496 = vunpack.c.l.b16 %v744
    %v1497 = vunpack.c.h.b16 %v744
    %v1498 = vunpack.c.l.b16 %v745
    %v1499 = vunpack.c.h.b16 %v745
    %v1500 = vunpack.c.l.b16 %v746
    %v1501 = vunpack.c.h.b16 %v746
    %v1502 = vunpack.c.l.b16 %v747
    %v1503 = vunpack.c.h.b16 %v747
    %v1504 = vunpack.c.l.b16 %v748
    %v1505 = vunpack.c.h.b16 %v748
    %v1506 = vunpack.c.l.b16 %v749
    %v1507 = vunpack.c.h.b16 %v749
    %v1508 = vunpack.c.l.b16 %v750
    %v1509 = vunpack.c.h.b16 %v750
    %v1510 = vunpack.c.l.b16 %v751
    %v1511 = vunpack.c.h.b16 %v751
    %v1512 = vunpack.c.l.b16 %v752
    %v1513 = vunpack.c.h.b16 %v752
    %v1514 = vunpack.c.l.b16 %v753
    %v1515 = vunpack.c.h.b16 %v753
    %v1516 = vunpack.c.l.b16 %v754
    %v1517 = vunpack.c.h.b16 %v754
    %v1518 = vunpack.c.l.b16 %v755
    %v1519 = vunpack.c.h.b16 %v755
    %v1520 = vunpack.c.l.b16 %v756
    %v1521 = vunpack.c.h.b16 %v756
    %v1522 = vunpack.c.l.b16 %v757
    %v1523 = vunpack.c.h.b16 %v757
    %v1524 = vunpack.c.l.b16 %v758
    %v1525 = vunpack.c.h.b16 %v758
    %v1526 = vunpack.c.l.b16 %v759
    %v1527 = vunpack.c.h.b16 %v759
    %v1528 = vunpack.c.l.b16 %v760
    %v1529 = vunpack.c.h.b16 %v760
    %v1530 = vunpack.c.l.b16 %v761
    %v1531 = vunpack.c.h.b16 %v761
    %v1532 = vunpack.c.l.b16 %v762
    %v1533 = vunpack.c.h.b16 %v762
    %v1534 = vunpack.c.l.b16 %v763
    %v1535 = vunpack.c.h.b16 %v763
    %v1536 = vunpack.c.l.b16 %v764
    %v1537 = vunpack.c.h.b16 %v764
    %v1538 = vunpack.c.l.b16 %v765
    %v1539 = vunpack.c.h.b16 %v765
    %v1540 = vunpack.c.l.b16 %v766
    %v1541 = vunpack.c.h.b16 %v766
    %v1542 = vunpack.c.l.b16 %v767
    %v1543 = vunpack.c.h.b16 %v767
    %v1544 = vunpack.c.l.b16 %v768
    %v1545 = vunpack.c.h.b16 %v768
    %v1546 = vunpack.c.l.b16 %v769
    %v1547 = vunpack.c.h.b16 %v769
    %v1548 = vunpack.c.l.b16 %v770
    %v1549 = vunpack.c.h.b16 %v770
    %v1550 = vunpack.c.l.b16 %v771
    %v1551 = vunpack.c.h.b16 %v771
    %v1552 = vunpack.c.l.b16 %v772
    %v1553 = vunpack.c.h.b16 %v772
    %v1554 = vunpack.c.l.b16 %v773
    %v1555 = vunpack.c.h.b16 %v773
    %v1556 = vunpack.c.l.b16 %v774
    %v1557 = vunpack.c.h.b16 %v774
    %v1558 = vunpack.c.l.b16 %v775
    %v1559 = vunpack.c.h.b16 %v775
    %v1560 = vunpack.c.l.b16 %v776
    %v1561 = vunpack.c.h.b16 %v776
    %v1562 = vunpack.c.l.b16 %v777
    %v1563 = vunpack.c.h.b16 %v777
    %v1564 = vunpack.c.l.b16 %v778
    %v1565 = vunpack.c.h.b16 %v778
    %v1566 = vunpack.c.l.b16 %v779
    %v1567 = vunpack.c.h.b16 %v779
    %v1568 = vunpack.c.l.b16 %v780
    %v1569 = vunpack.c.h.b16 %v780
    %v1570 = vunpack.c.l.b16 %v781
    %v1571 = vunpack.c.h.b16 %v781
    %v1572 = vpack.c.b16 %v1064, %v1060
    %v1573 = vpack.c.b16 %v1065, %v1061
    %v1574 = vpack.c.b16 %v1066, %v1062
    %v1575 = vpack.c.b16 %v1067, %v1063
    %v1576 = vpack.c.b16 %v1072, %v1068
    %v1577 = vpack.c.b16 %v1073, %v1069
    %v1578 = vpack.c.b16 %v1074, %v1070
    %v1579 = vpack.c.b16 %v1075, %v1071
    %v1580 = vpack.c.b16 %v1080, %v1076
    %v1581 = vpack.c.b16 %v1081, %v1077
    %v1582 = vpack.c.b16 %v1082, %v1078
    %v1583 = vpack.c.b16 %v1083, %v1079
    %v1584 = vpack.c.b16 %v1088, %v1084
    %v1585 = vpack.c.b16 %v1089, %v1085
    %v1586 = vpack.c.b16 %v1090, %v1086
    %v1587 = vpack.c.b16 %v1091, %v1087
    %v1588 = vpack.c.b16 %v1096, %v1092
    %v1589 = vpack.c.b16 %v1097, %v1093
    %v1590 = vpack.c.b16 %v1098, %v1094
    %v1591 = vpack.c.b16 %v1099, %v1095
    %v1592 = vpack.c.b16 %v1104, %v1100
    %v1593 = vpack.c.b16 %v1105, %v1101
    %v1594 = vpack.c.b16 %v1106, %v1102
    %v1595 = vpack.c.b16 %v1107, %v1103
    %v1596 = vpack.c.b16 %v1112, %v1108
    %v1597 = vpack.c.b16 %v1113, %v1109
    %v1598 = vpack.c.b16 %v1114, %v1110
    %v1599 = vpack.c.b16 %v1115, %v1111
    %v1600 = vpack.c.b16 %v1120, %v1116
    %v1601 = vpack.c.b16 %v1121, %v1117
    %v1602 = vpack.c.b16 %v1122, %v1118
    %v1603 = vpack.c.b16 %v1123, %v1119
    %v1604 = vpack.c.b16 %v1128, %v1124
    %v1605 = vpack.c.b16 %v1129, %v1125
    %v1606 = vpack.c.b16 %v1130, %v1126
    %v1607 = vpack.c.b16 %v1131, %v1127
    %v1608 = vpack.c.b16 %v1136, %v1132
    %v1609 = vpack.c.b16 %v1137, %v1133
    %v1610 = vpack.c.b16 %v1138, %v1134
    %v1611 = vpack.c.b16 %v1139, %v1135
    %v1612 = vpack.c.b16 %v1144, %v1140
    %v1613 = vpack.c.b16 %v1145, %v1141
    %v1614 = vpack.c.b16 %v1146, %v1142
    %v1615 = vpack.c.b16 %v1147, %v1143
    %v1616 = vpack.c.b16 %v1152, %v1148
    %v1617 = vpack.c.b16 %v1153, %v1149
    %v1618 = vpack.c.b16 %v1154, %v1150
    %v1619 = vpack.c.b16 %v1155, %v1151
    %v1620 = vpack.c.b16 %v1160, %v1156
    %v1621 = vpack.c.b16 %v1161, %v1157
    %v1622 = vpack.c.b16 %v1162, %v1158
    %v1623 = vpack.c.b16 %v1163, %v1159
    %v1624 = vpack.c.b16 %v1168, %v1164
    %v1625 = vpack.c.b16 %v1169, %v1165
    %v1626 = vpack.c.b16 %v1170, %v1166
    %v1627 = vpack.c.b16 %v1171, %v1167
    %v1628 = vpack.c.b16 %v1176, %v1172
    %v1629 = vpack.c.b16 %v1177, %v1173
    %v1630 = vpack.c.b16 %v1178, %v1174
    %v1631 = vpack.c.b16 %v1179, %v1175
    %v1632 = vpack.c.b16 %v1184, %v1180
    %v1633 = vpack.c.b16 %v1185, %v1181
    %v1634 = vpack.c.b16 %v1186, %v1182
    %v1635 = vpack.c.b16 %v1187, %v1183
    %v1636 = vpack.c.b16 %v1192, %v1188
    %v1637 = vpack.c.b16 %v1193, %v1189
    %v1638 = vpack.c.b16 %v1194, %v1190
    %v1639 = vpack.c.b16 %v1195, %v1191
    %v1640 = vpack.c.b16 %v1200, %v1196
    %v1641 = vpack.c.b16 %v1201, %v1197
    %v1642 = vpack.c.b16 %v1202, %v1198
    %v1643 = vpack.c.b16 %v1203, %v1199
    %v1644 = vpack.c.b16 %v1208, %v1204
    %v1645 = vpack.c.b16 %v1209, %v1205
    %v1646 = vpack.c.b16 %v1210, %v1206
    %v1647 = vpack.c.b16 %v1211, %v1207
    %v1648 = vpack.c.b16 %v1216, %v1212
    %v1649 = vpack.c.b16 %v1217, %v1213
    %v1650 = vpack.c.b16 %v1218, %v1214
    %v1651 = vpack.c.b16 %v1219, %v1215
    %v1652 = vpack.c.b16 %v1224, %v1220
    %v1653 = vpack.c.b16 %v1225, %v1221
    %v1654 = vpack.c.b16 %v1226, %v1222
    %v1655 = vpack.c.b16 %v1227, %v1223
    %v1656 = vpack.c.b16 %v1232, %v1228
    %v1657 = vpack.c.b16 %v1233, %v1229
    %v1658 = vpack.c.b16 %v1234, %v1230
    %v1659 = vpack.c.b16 %v1235, %v1231
    %v1660 = vpack.c.b16 %v1240, %v1236
    %v1661 = vpack.c.b16 %v1241, %v1237
    %v1662 = vpack.c.b16 %v1242, %v1238
    %v1663 = vpack.c.b16 %v1243, %v1239
    %v1664 = vpack.c.b16 %v1248, %v1244
    %v1665 = vpack.c.b16 %v1249, %v1245
    %v1666 = vpack.c.b16 %v1250, %v1246
    %v1667 = vpack.c.b16 %v1251, %v1247
    %v1668 = vpack.c.b16 %v1256, %v1252
    %v1669 = vpack.c.b16 %v1257, %v1253
    %v1670 = vpack.c.b16 %v1258, %v1254
    %v1671 = vpack.c.b16 %v1259, %v1255
    %v1672 = vpack.c.b16 %v1264, %v1260
    %v1673 = vpack.c.b16 %v1265, %v1261
    %v1674 = vpack.c.b16 %v1266, %v1262
    %v1675 = vpack.c.b16 %v1267, %v1263
    %v1676 = vpack.c.b16 %v1272, %v1268
    %v1677 = vpack.c.b16 %v1273, %v1269
    %v1678 = vpack.c.b16 %v1274, %v1270
    %v1679 = vpack.c.b16 %v1275, %v1271
    %v1680 = vpack.c.b16 %v1280, %v1276
    %v1681 = vpack.c.b16 %v1281, %v1277
    %v1682 = vpack.c.b16 %v1282, %v1278
    %v1683 = vpack.c.b16 %v1283, %v1279
    %v1684 = vpack.c.b16 %v1288, %v1284
    %v1685 = vpack.c.b16 %v1289, %v1285
    %v1686 = vpack.c.b16 %v1290, %v1286
    %v1687 = vpack.c.b16 %v1291, %v1287
    %v1688 = vpack.c.b16 %v1296, %v1292
    %v1689 = vpack.c.b16 %v1297, %v1293
    %v1690 = vpack.c.b16 %v1298, %v1294
    %v1691 = vpack.c.b16 %v1299, %v1295
    %v1692 = vpack.c.b16 %v1304, %v1300
    %v1693 = vpack.c.b16 %v1305, %v1301
    %v1694 = vpack.c.b16 %v1306, %v1302
    %v1695 = vpack.c.b16 %v1307, %v1303
    %v1696 = vpack.c.b16 %v1312, %v1308
    %v1697 = vpack.c.b16 %v1313, %v1309
    %v1698 = vpack.c.b16 %v1314, %v1310
    %v1699 = vpack.c.b16 %v1315, %v1311
    %v1700 = vpack.c.b16 %v1320, %v1316
    %v1701 = vpack.c.b16 %v1321, %v1317
    %v1702 = vpack.c.b16 %v1322, %v1318
    %v1703 = vpack.c.b16 %v1323, %v1319
    %v1704 = vpack.c.b16 %v1328, %v1324
    %v1705 = vpack.c.b16 %v1329, %v1325
    %v1706 = vpack.c.b16 %v1330, %v1326
    %v1707 = vpack.c.b16 %v1331, %v1327
    %v1708 = vpack.c.b16 %v1336, %v1332
    %v1709 = vpack.c.b16 %v1337, %v1333
    %v1710 = vpack.c.b16 %v1338, %v1334
    %v1711 = vpack.c.b16 %v1339, %v1335
    %v1712 = vpack.c.b16 %v1344, %v1340
    %v1713 = vpack.c.b16 %v1345, %v1341
    %v1714 = vpack.c.b16 %v1346, %v1342
    %v1715 = vpack.c.b16 %v1347, %v1343
    %v1716 = vpack.c.b16 %v1352, %v1348
    %v1717 = vpack.c.b16 %v1353, %v1349
    %v1718 = vpack.c.b16 %v1354, %v1350
    %v1719 = vpack.c.b16 %v1355, %v1351
    %v1720 = vpack.c.b16 %v1360, %v1356
    %v1721 = vpack.c.b16 %v1361, %v1357
    %v1722 = vpack.c.b16 %v1362, %v1358
    %v1723 = vpack.c.b16 %v1363, %v1359
    %v1724 = vpack.c.b16 %v1368, %v1364
    %v1725 = vpack.c.b16 %v1369, %v1365
    %v1726 = vpack.c.b16 %v1370, %v1366
    %v1727 = vpack.c.b16 %v1371, %v1367
    %v1728 = vpack.c.b16 %v1376, %v1372
    %v1729 = vpack.c.b16 %v1377, %v1373
    %v1730 = vpack.c.b16 %v1378, %v1374
    %v1731 = vpack.c.b16 %v1379, %v1375
    %v1732 = vpack.c.b16 %v1384, %v1380
    %v1733 = vpack.c.b16 %v1385, %v1381
    %v1734 = vpack.c.b16 %v1386, %v1382
    %v1735 = vpack.c.b16 %v1387, %v1383
    %v1736 = vpack.c.b16 %v1392, %v1388
    %v1737 = vpack.c.b16 %v1393, %v1389
    %v1738 = vpack.c.b16 %v1394, %v1390
    %v1739 = vpack.c.b16 %v1395, %v1391
    %v1740 = vpack.c.b16 %v1400, %v1396
    %v1741 = vpack.c.b16 %v1401, %v1397
    %v1742 = vpack.c.b16 %v1402, %v1398
    %v1743 = vpack.c.b16 %v1403, %v1399
    %v1744 = vpack.c.b16 %v1408, %v1404
    %v1745 = vpack.c.b16 %v1409, %v1405
    %v1746 = vpack.c.b16 %v1410, %v1406
    %v1747 = vpack.c.b16 %v1411, %v1407
    %v1748 = vpack.c.b16 %v1416, %v1412
    %v1749 = vpack.c.b16 %v1417, %v1413
    %v1750 = vpack.c.b16 %v1418, %v1414
    %v1751 = vpack.c.b16 %v1419, %v1415
    %v1752 = vpack.c.b16 %v1424, %v1420
    %v1753 = vpack.c.b16 %v1425, %v1421
    %v1754 = vpack.c.b16 %v1426, %v1422
    %v1755 = vpack.c.b16 %v1427, %v1423
    %v1756 = vpack.c.b16 %v1432, %v1428
    %v1757 = vpack.c.b16 %v1433, %v1429
    %v1758 = vpack.c.b16 %v1434, %v1430
    %v1759 = vpack.c.b16 %v1435, %v1431
    %v1760 = vpack.c.b16 %v1440, %v1436
    %v1761 = vpack.c.b16 %v1441, %v1437
    %v1762 = vpack.c.b16 %v1442, %v1438
    %v1763 = vpack.c.b16 %v1443, %v1439
    %v1764 = vpack.c.b16 %v1448, %v1444
    %v1765 = vpack.c.b16 %v1449, %v1445
    %v1766 = vpack.c.b16 %v1450, %v1446
    %v1767 = vpack.c.b16 %v1451, %v1447
    %v1768 = vpack.c.b16 %v1456, %v1452
    %v1769 = vpack.c.b16 %v1457, %v1453
    %v1770 = vpack.c.b16 %v1458, %v1454
    %v1771 = vpack.c.b16 %v1459, %v1455
    %v1772 = vpack.c.b16 %v1464, %v1460
    %v1773 = vpack.c.b16 %v1465, %v1461
    %v1774 = vpack.c.b16 %v1466, %v1462
    %v1775 = vpack.c.b16 %v1467, %v1463
    %v1776 = vpack.c.b16 %v1472, %v1468
    %v1777 = vpack.c.b16 %v1473, %v1469
    %v1778 = vpack.c.b16 %v1474, %v1470
    %v1779 = vpack.c.b16 %v1475, %v1471
    %v1780 = vpack.c.b16 %v1480, %v1476
    %v1781 = vpack.c.b16 %v1481, %v1477
    %v1782 = vpack.c.b16 %v1482, %v1478
    %v1783 = vpack.c.b16 %v1483, %v1479
    %v1784 = vpack.c.b16 %v1488, %v1484
    %v1785 = vpack.c.b16 %v1489, %v1485
    %v1786 = vpack.c.b16 %v1490, %v1486
    %v1787 = vpack.c.b16 %v1491, %v1487
    %v1788 = vpack.c.b16 %v1496, %v1492
    %v1789 = vpack.c.b16 %v1497, %v1493
    %v1790 = vpack.c.b16 %v1498, %v1494
    %v1791 = vpack.c.b16 %v1499, %v1495
    %v1792 = vpack.c.b16 %v1504, %v1500
    %v1793 = vpack.c.b16 %v1505, %v1501
    %v1794 = vpack.c.b16 %v1506, %v1502
    %v1795 = vpack.c.b16 %v1507, %v1503
    %v1796 = vpack.c.b16 %v1512, %v1508
    %v1797 = vpack.c.b16 %v1513, %v1509
    %v1798 = vpack.c.b16 %v1514, %v1510
    %v1799 = vpack.c.b16 %v1515, %v1511
    %v1800 = vpack.c.b16 %v1520, %v1516
    %v1801 = vpack.c.b16 %v1521, %v1517
    %v1802 = vpack.c.b16 %v1522, %v1518
    %v1803 = vpack.c.b16 %v1523, %v1519
    %v1804 = vpack.c.b16 %v1528, %v1524
    %v1805 = vpack.c.b16 %v1529, %v1525
    %v1806 = vpack.c.b16 %v1530, %v1526
    %v1807 = vpack.c.b16 %v1531, %v1527
    %v1808 = vpack.c.b16 %v1536, %v1532
    %v1809 = vpack.c.b16 %v1537, %v1533
    %v1810 = vpack.c.b16 %v1538, %v1534
    %v1811 = vpack.c.b16 %v1539, %v1535
    %v1812 = vpack.c.b16 %v1544, %v1540
    %v1813 = vpack.c.b16 %v1545, %v1541
    %v1814 = vpack.c.b16 %v1546, %v1542
    %v1815 = vpack.c.b16 %v1547, %v1543
    %v1816 = vpack.c.b16 %v1552, %v1548
    %v1817 = vpack.c.b16 %v1553, %v1549
    %v1818 = vpack.c.b16 %v1554, %v1550
    %v1819 = vpack.c.b16 %v1555, %v1551
    %v1820 = vpack.c.b16 %v1560, %v1556
    %v1821 = vpack.c.b16 %v1561, %v1557
    %v1822 = vpack.c.b16 %v1562, %v1558
    %v1823 = vpack.c.b16 %v1563, %v1559
    %v1824 = vpack.c.b16 %v1568, %v1564
    %v1825 = vpack.c.b16 %v1569, %v1565
    %v1826 = vpack.c.b16 %v1570, %v1566
    %v1827 = vpack.c.b16 %v1571, %v1567
    %2084 = vmatprep.subr.bf16.mxu0 %v1601
    %2085 = vmatpush1.bf16.msra.mxu0 %v1600
    %2086 = vmatprep.subr.bf16.mxu0 %v1597
    %2087 = vmatpush1.bf16.msra.mxu0 %v1596
    %2088 = vmatprep.subr.bf16.mxu0 %v1593
    %2089 = vmatpush1.bf16.msra.mxu0 %v1592
    %2090 = vmatprep.subr.bf16.mxu0 %v1589
    %2091 = vmatpush1.bf16.msra.mxu0 %v1588
    %2092 = vmatprep.subr.bf16.mxu0 %v1585
    %2093 = vmatpush1.bf16.msra.mxu0 %v1584
    %2094 = vmatprep.subr.bf16.mxu0 %v1581
    %2095 = vmatpush1.bf16.msra.mxu0 %v1580
    %2096 = vmatprep.subr.bf16.mxu0 %v1577
    %2097 = vmatpush1.bf16.msra.mxu0 %v1576
    %2098 = vmatprep.subr.bf16.mxu0 %v1573
    %2099 = vmatpush1.bf16.msra.mxu0 %v1572
    %2100 = vmatprep.subr.bf16.mxu0 %v1633
    %2101 = vmatpush2.bf16.msra.mxu0 %v1632
    %2102 = vmatprep.subr.bf16.mxu0 %v1629
    %2103 = vmatpush2.bf16.msra.mxu0 %v1628
    %2104 = vmatprep.subr.bf16.mxu0 %v1625
    %2105 = vmatpush2.bf16.msra.mxu0 %v1624
    %2106 = vmatprep.subr.bf16.mxu0 %v1621
    %2107 = vmatpush2.bf16.msra.mxu0 %v1620
    %2108 = vmatprep.subr.bf16.mxu0 %v1617
    %2109 = vmatpush2.bf16.msra.mxu0 %v1616
    %2110 = vmatprep.subr.bf16.mxu0 %v1613
    %2111 = vmatpush2.bf16.msra.mxu0 %v1612
    %2112 = vmatprep.subr.bf16.mxu0 %v1609
    %2113 = vmatpush2.bf16.msra.mxu0 %v1608
    %2114 = vmatprep.subr.bf16.mxu0 %v1605
    %2115 = vmatpush2.bf16.msra.mxu0 %v1604
    %2116 = vmatprep.mubr.bf16.mxu0 %v519
    %2117 = vmatmul.mubr.bf16.gmra.mxu0 %v518
    %v2118 = vpop.f32.mrf.mxu0
    %v2119 = vadd.f32 %v787, %v2118
    %v2120 = vpop.f32.mrf.mxu0
    %v2121 = vadd.f32 %v791, %v2120
    %v2122 = vpop.f32.mrf.mxu0
    %v2123 = vpop.f32.mrf.mxu0
    %2124 = vdwg.mxu0
    %2125 = vmatprep.subr.bf16.mxu0 %v1665
    %2126 = vmatpush1.bf16.msra.mxu0 %v1664
    %2127 = vmatprep.subr.bf16.mxu0 %v1661
    %2128 = vmatpush1.bf16.msra.mxu0 %v1660
    %2129 = vmatprep.subr.bf16.mxu0 %v1657
    %2130 = vmatpush1.bf16.msra.mxu0 %v1656
    %2131 = vmatprep.subr.bf16.mxu0 %v1653
    %2132 = vmatpush1.bf16.msra.mxu0 %v1652
    %2133 = vmatprep.subr.bf16.mxu0 %v1649
    %2134 = vmatpush1.bf16.msra.mxu0 %v1648
    %2135 = vmatprep.subr.bf16.mxu0 %v1645
    %2136 = vmatpush1.bf16.msra.mxu0 %v1644
    %2137 = vmatprep.subr.bf16.mxu0 %v1641
    %2138 = vmatpush1.bf16.msra.mxu0 %v1640
    %2139 = vmatprep.subr.bf16.mxu0 %v1637
    %2140 = vmatpush1.bf16.msra.mxu0 %v1636
    %2141 = vmatprep.subr.bf16.mxu0 %v1697
    %2142 = vmatpush2.bf16.msra.mxu0 %v1696
    %2143 = vmatprep.subr.bf16.mxu0 %v1693
    %2144 = vmatpush2.bf16.msra.mxu0 %v1692
    %2145 = vmatprep.subr.bf16.mxu0 %v1689
    %2146 = vmatpush2.bf16.msra.mxu0 %v1688
    %2147 = vmatprep.subr.bf16.mxu0 %v1685
    %2148 = vmatpush2.bf16.msra.mxu0 %v1684
    %2149 = vmatprep.subr.bf16.mxu0 %v1681
    %2150 = vmatpush2.bf16.msra.mxu0 %v1680
    %2151 = vmatprep.subr.bf16.mxu0 %v1677
    %2152 = vmatpush2.bf16.msra.mxu0 %v1676
    %2153 = vmatprep.subr.bf16.mxu0 %v1673
    %2154 = vmatpush2.bf16.msra.mxu0 %v1672
    %2155 = vmatprep.subr.bf16.mxu0 %v1669
    %2156 = vmatpush2.bf16.msra.mxu0 %v1668
    %2157 = vmatprep.mubr.bf16.mxu0 %v521
    %2158 = vmatmul.mubr.bf16.gmra.mxu0 %v520
    %v2159 = vpop.f32.mrf.mxu0
    %v2160 = vadd.f32 %v2119, %v2159
    %v2161 = vpop.f32.mrf.mxu0
    %v2162 = vadd.f32 %v2121, %v2161
    %v2163 = vpop.f32.mrf.mxu0
    %v2164 = vpop.f32.mrf.mxu0
    %2165 = vdwg.mxu0
    %2166 = vmatprep.subr.bf16.mxu0 %v1729
    %2167 = vmatpush1.bf16.msra.mxu0 %v1728
    %2168 = vmatprep.subr.bf16.mxu0 %v1725
    %2169 = vmatpush1.bf16.msra.mxu0 %v1724
    %2170 = vmatprep.subr.bf16.mxu0 %v1721
    %2171 = vmatpush1.bf16.msra.mxu0 %v1720
    %2172 = vmatprep.subr.bf16.mxu0 %v1717
    %2173 = vmatpush1.bf16.msra.mxu0 %v1716
    %2174 = vmatprep.subr.bf16.mxu0 %v1713
    %2175 = vmatpush1.bf16.msra.mxu0 %v1712
    %2176 = vmatprep.subr.bf16.mxu0 %v1709
    %2177 = vmatpush1.bf16.msra.mxu0 %v1708
    %2178 = vmatprep.subr.bf16.mxu0 %v1705
    %2179 = vmatpush1.bf16.msra.mxu0 %v1704
    %2180 = vmatprep.subr.bf16.mxu0 %v1701
    %2181 = vmatpush1.bf16.msra.mxu0 %v1700
    %2182 = vmatprep.subr.bf16.mxu0 %v1761
    %2183 = vmatpush2.bf16.msra.mxu0 %v1760
    %2184 = vmatprep.subr.bf16.mxu0 %v1757
    %2185 = vmatpush2.bf16.msra.mxu0 %v1756
    %2186 = vmatprep.subr.bf16.mxu0 %v1753
    %2187 = vmatpush2.bf16.msra.mxu0 %v1752
    %2188 = vmatprep.subr.bf16.mxu0 %v1749
    %2189 = vmatpush2.bf16.msra.mxu0 %v1748
    %2190 = vmatprep.subr.bf16.mxu0 %v1745
    %2191 = vmatpush2.bf16.msra.mxu0 %v1744
    %2192 = vmatprep.subr.bf16.mxu0 %v1741
    %2193 = vmatpush2.bf16.msra.mxu0 %v1740
    %2194 = vmatprep.subr.bf16.mxu0 %v1737
    %2195 = vmatpush2.bf16.msra.mxu0 %v1736
    %2196 = vmatprep.subr.bf16.mxu0 %v1733
    %2197 = vmatpush2.bf16.msra.mxu0 %v1732
    %2198 = vmatprep.mubr.bf16.mxu0 %v523
    %2199 = vmatmul.mubr.bf16.gmra.mxu0 %v522
    %v2200 = vpop.f32.mrf.mxu0
    %v2201 = vadd.f32 %v2160, %v2200
    %v2202 = vpop.f32.mrf.mxu0
    %v2203 = vadd.f32 %v2162, %v2202
    %v2204 = vpop.f32.mrf.mxu0
    %v2205 = vpop.f32.mrf.mxu0
    %2206 = vdwg.mxu0
    %2207 = vmatprep.subr.bf16.mxu0 %v1793
    %2208 = vmatpush1.bf16.msra.mxu0 %v1792
    %2209 = vmatprep.subr.bf16.mxu0 %v1789
    %2210 = vmatpush1.bf16.msra.mxu0 %v1788
    %2211 = vmatprep.subr.bf16.mxu0 %v1785
    %2212 = vmatpush1.bf16.msra.mxu0 %v1784
    %2213 = vmatprep.subr.bf16.mxu0 %v1781
    %2214 = vmatpush1.bf16.msra.mxu0 %v1780
    %2215 = vmatprep.subr.bf16.mxu0 %v1777
    %2216 = vmatpush1.bf16.msra.mxu0 %v1776
    %2217 = vmatprep.subr.bf16.mxu0 %v1773
    %2218 = vmatpush1.bf16.msra.mxu0 %v1772
    %2219 = vmatprep.subr.bf16.mxu0 %v1769
    %2220 = vmatpush1.bf16.msra.mxu0 %v1768
    %2221 = vmatprep.subr.bf16.mxu0 %v1765
    %2222 = vmatpush1.bf16.msra.mxu0 %v1764
    %2223 = vmatprep.subr.bf16.mxu0 %v1825
    %2224 = vmatpush2.bf16.msra.mxu0 %v1824
    %2225 = vmatprep.subr.bf16.mxu0 %v1821
    %2226 = vmatpush2.bf16.msra.mxu0 %v1820
    %2227 = vmatprep.subr.bf16.mxu0 %v1817
    %2228 = vmatpush2.bf16.msra.mxu0 %v1816
    %2229 = vmatprep.subr.bf16.mxu0 %v1813
    %2230 = vmatpush2.bf16.msra.mxu0 %v1812
    %2231 = vmatprep.subr.bf16.mxu0 %v1809
    %2232 = vmatpush2.bf16.msra.mxu0 %v1808
    %2233 = vmatprep.subr.bf16.mxu0 %v1805
    %2234 = vmatpush2.bf16.msra.mxu0 %v1804
    %2235 = vmatprep.subr.bf16.mxu0 %v1801
    %2236 = vmatpush2.bf16.msra.mxu0 %v1800
    %2237 = vmatprep.subr.bf16.mxu0 %v1797
    %2238 = vmatpush2.bf16.msra.mxu0 %v1796
    %2239 = vmatprep.mubr.bf16.mxu0 %v525
    %2240 = vmatmul.mubr.bf16.gmra.mxu0 %v524
    %v2241 = vpop.f32.mrf.mxu0
    %v2242 = vadd.f32 %v2201, %v2241
    %v2243 = vpop.f32.mrf.mxu0
    %v2244 = vadd.f32 %v2203, %v2243
    %v2245 = vpop.f32.mrf.mxu0
    %v2246 = vpop.f32.mrf.mxu0
    %2247 = vdwg.mxu0
    %2248 = vmatprep.subr.bf16.mxu0 %v1603
    %2249 = vmatpush1.bf16.msra.mxu0 %v1602
    %2250 = vmatprep.subr.bf16.mxu0 %v1599
    %2251 = vmatpush1.bf16.msra.mxu0 %v1598
    %2252 = vmatprep.subr.bf16.mxu0 %v1595
    %2253 = vmatpush1.bf16.msra.mxu0 %v1594
    %2254 = vmatprep.subr.bf16.mxu0 %v1591
    %2255 = vmatpush1.bf16.msra.mxu0 %v1590
    %2256 = vmatprep.subr.bf16.mxu0 %v1587
    %2257 = vmatpush1.bf16.msra.mxu0 %v1586
    %2258 = vmatprep.subr.bf16.mxu0 %v1583
    %2259 = vmatpush1.bf16.msra.mxu0 %v1582
    %2260 = vmatprep.subr.bf16.mxu0 %v1579
    %2261 = vmatpush1.bf16.msra.mxu0 %v1578
    %2262 = vmatprep.subr.bf16.mxu0 %v1575
    %2263 = vmatpush1.bf16.msra.mxu0 %v1574
    %2264 = vmatprep.subr.bf16.mxu0 %v1635
    %2265 = vmatpush2.bf16.msra.mxu0 %v1634
    %2266 = vmatprep.subr.bf16.mxu0 %v1631
    %2267 = vmatpush2.bf16.msra.mxu0 %v1630
    %2268 = vmatprep.subr.bf16.mxu0 %v1627
    %2269 = vmatpush2.bf16.msra.mxu0 %v1626
    %2270 = vmatprep.subr.bf16.mxu0 %v1623
    %2271 = vmatpush2.bf16.msra.mxu0 %v1622
    %2272 = vmatprep.subr.bf16.mxu0 %v1619
    %2273 = vmatpush2.bf16.msra.mxu0 %v1618
    %2274 = vmatprep.subr.bf16.mxu0 %v1615
    %2275 = vmatpush2.bf16.msra.mxu0 %v1614
    %2276 = vmatprep.subr.bf16.mxu0 %v1611
    %2277 = vmatpush2.bf16.msra.mxu0 %v1610
    %2278 = vmatprep.subr.bf16.mxu0 %v1607
    %2279 = vmatpush2.bf16.msra.mxu0 %v1606
    %2280 = vmatprep.mubr.bf16.mxu0 %v519
    %2281 = vmatmul.mubr.bf16.gmra.mxu0 %v518
    %v2282 = vpop.f32.mrf.mxu0
    %v2283 = vadd.f32 %v795, %v2282
    %v2284 = vpop.f32.mrf.mxu0
    %v2285 = vadd.f32 %v799, %v2284
    %v2286 = vpop.f32.mrf.mxu0
    %v2287 = vpop.f32.mrf.mxu0
    %2288 = vdwg.mxu0
    %2289 = vmatprep.subr.bf16.mxu0 %v1667
    %2290 = vmatpush1.bf16.msra.mxu0 %v1666
    %2291 = vmatprep.subr.bf16.mxu0 %v1663
    %2292 = vmatpush1.bf16.msra.mxu0 %v1662
    %2293 = vmatprep.subr.bf16.mxu0 %v1659
    %2294 = vmatpush1.bf16.msra.mxu0 %v1658
    %2295 = vmatprep.subr.bf16.mxu0 %v1655
    %2296 = vmatpush1.bf16.msra.mxu0 %v1654
    %2297 = vmatprep.subr.bf16.mxu0 %v1651
    %2298 = vmatpush1.bf16.msra.mxu0 %v1650
    %2299 = vmatprep.subr.bf16.mxu0 %v1647
    %2300 = vmatpush1.bf16.msra.mxu0 %v1646
    %2301 = vmatprep.subr.bf16.mxu0 %v1643
    %2302 = vmatpush1.bf16.msra.mxu0 %v1642
    %2303 = vmatprep.subr.bf16.mxu0 %v1639
    %2304 = vmatpush1.bf16.msra.mxu0 %v1638
    %2305 = vmatprep.subr.bf16.mxu0 %v1699
    %2306 = vmatpush2.bf16.msra.mxu0 %v1698
    %2307 = vmatprep.subr.bf16.mxu0 %v1695
    %2308 = vmatpush2.bf16.msra.mxu0 %v1694
    %2309 = vmatprep.subr.bf16.mxu0 %v1691
    %2310 = vmatpush2.bf16.msra.mxu0 %v1690
    %2311 = vmatprep.subr.bf16.mxu0 %v1687
    %2312 = vmatpush2.bf16.msra.mxu0 %v1686
    %2313 = vmatprep.subr.bf16.mxu0 %v1683
    %2314 = vmatpush2.bf16.msra.mxu0 %v1682
    %2315 = vmatprep.subr.bf16.mxu0 %v1679
    %2316 = vmatpush2.bf16.msra.mxu0 %v1678
    %2317 = vmatprep.subr.bf16.mxu0 %v1675
    %2318 = vmatpush2.bf16.msra.mxu0 %v1674
    %2319 = vmatprep.subr.bf16.mxu0 %v1671
    %2320 = vmatpush2.bf16.msra.mxu0 %v1670
    %2321 = vmatprep.mubr.bf16.mxu0 %v521
    %2322 = vmatmul.mubr.bf16.gmra.mxu0 %v520
    %v2323 = vpop.f32.mrf.mxu0
    %v2324 = vadd.f32 %v2283, %v2323
    %v2325 = vpop.f32.mrf.mxu0
    %v2326 = vadd.f32 %v2285, %v2325
    %v2327 = vpop.f32.mrf.mxu0
    %v2328 = vpop.f32.mrf.mxu0
    %2329 = vdwg.mxu0
    %2330 = vmatprep.subr.bf16.mxu0 %v1731
    %2331 = vmatpush1.bf16.msra.mxu0 %v1730
    %2332 = vmatprep.subr.bf16.mxu0 %v1727
    %2333 = vmatpush1.bf16.msra.mxu0 %v1726
    %2334 = vmatprep.subr.bf16.mxu0 %v1723
    %2335 = vmatpush1.bf16.msra.mxu0 %v1722
    %2336 = vmatprep.subr.bf16.mxu0 %v1719
    %2337 = vmatpush1.bf16.msra.mxu0 %v1718
    %2338 = vmatprep.subr.bf16.mxu0 %v1715
    %2339 = vmatpush1.bf16.msra.mxu0 %v1714
    %2340 = vmatprep.subr.bf16.mxu0 %v1711
    %2341 = vmatpush1.bf16.msra.mxu0 %v1710
    %2342 = vmatprep.subr.bf16.mxu0 %v1707
    %2343 = vmatpush1.bf16.msra.mxu0 %v1706
    %2344 = vmatprep.subr.bf16.mxu0 %v1703
    %2345 = vmatpush1.bf16.msra.mxu0 %v1702
    %2346 = vmatprep.subr.bf16.mxu0 %v1763
    %2347 = vmatpush2.bf16.msra.mxu0 %v1762
    %2348 = vmatprep.subr.bf16.mxu0 %v1759
    %2349 = vmatpush2.bf16.msra.mxu0 %v1758
    %2350 = vmatprep.subr.bf16.mxu0 %v1755
    %2351 = vmatpush2.bf16.msra.mxu0 %v1754
    %2352 = vmatprep.subr.bf16.mxu0 %v1751
    %2353 = vmatpush2.bf16.msra.mxu0 %v1750
    %2354 = vmatprep.subr.bf16.mxu0 %v1747
    %2355 = vmatpush2.bf16.msra.mxu0 %v1746
    %2356 = vmatprep.subr.bf16.mxu0 %v1743
    %2357 = vmatpush2.bf16.msra.mxu0 %v1742
    %2358 = vmatprep.subr.bf16.mxu0 %v1739
    %2359 = vmatpush2.bf16.msra.mxu0 %v1738
    %2360 = vmatprep.subr.bf16.mxu0 %v1735
    %2361 = vmatpush2.bf16.msra.mxu0 %v1734
    %2362 = vmatprep.mubr.bf16.mxu0 %v523
    %2363 = vmatmul.mubr.bf16.gmra.mxu0 %v522
    %v2364 = vpop.f32.mrf.mxu0
    %v2365 = vadd.f32 %v2324, %v2364
    %v2366 = vpop.f32.mrf.mxu0
    %v2367 = vadd.f32 %v2326, %v2366
    %v2368 = vpop.f32.mrf.mxu0
    %v2369 = vpop.f32.mrf.mxu0
    %2370 = vdwg.mxu0
    %2371 = vmatprep.subr.bf16.mxu0 %v1795
    %2372 = vmatpush1.bf16.msra.mxu0 %v1794
    %2373 = vmatprep.subr.bf16.mxu0 %v1791
    %2374 = vmatpush1.bf16.msra.mxu0 %v1790
    %2375 = vmatprep.subr.bf16.mxu0 %v1787
    %2376 = vmatpush1.bf16.msra.mxu0 %v1786
    %2377 = vmatprep.subr.bf16.mxu0 %v1783
    %2378 = vmatpush1.bf16.msra.mxu0 %v1782
    %2379 = vmatprep.subr.bf16.mxu0 %v1779
    %2380 = vmatpush1.bf16.msra.mxu0 %v1778
    %2381 = vmatprep.subr.bf16.mxu0 %v1775
    %2382 = vmatpush1.bf16.msra.mxu0 %v1774
    %2383 = vmatprep.subr.bf16.mxu0 %v1771
    %2384 = vmatpush1.bf16.msra.mxu0 %v1770
    %2385 = vmatprep.subr.bf16.mxu0 %v1767
    %2386 = vmatpush1.bf16.msra.mxu0 %v1766
    %2387 = vmatprep.subr.bf16.mxu0 %v1827
    %2388 = vmatpush2.bf16.msra.mxu0 %v1826
    %2389 = vmatprep.subr.bf16.mxu0 %v1823
    %2390 = vmatpush2.bf16.msra.mxu0 %v1822
    %2391 = vmatprep.subr.bf16.mxu0 %v1819
    %2392 = vmatpush2.bf16.msra.mxu0 %v1818
    %2393 = vmatprep.subr.bf16.mxu0 %v1815
    %2394 = vmatpush2.bf16.msra.mxu0 %v1814
    %2395 = vmatprep.subr.bf16.mxu0 %v1811
    %2396 = vmatpush2.bf16.msra.mxu0 %v1810
    %2397 = vmatprep.subr.bf16.mxu0 %v1807
    %2398 = vmatpush2.bf16.msra.mxu0 %v1806
    %2399 = vmatprep.subr.bf16.mxu0 %v1803
    %2400 = vmatpush2.bf16.msra.mxu0 %v1802
    %2401 = vmatprep.subr.bf16.mxu0 %v1799
    %2402 = vmatpush2.bf16.msra.mxu0 %v1798
    %2403 = vmatprep.mubr.bf16.mxu0 %v525
    %2404 = vmatmul.mubr.bf16.gmra.mxu0 %v524
    %v2405 = vpop.f32.mrf.mxu0
    %v2406 = vadd.f32 %v2365, %v2405
    %v2407 = vpop.f32.mrf.mxu0
    %v2408 = vadd.f32 %v2367, %v2407
    %v2409 = vpop.f32.mrf.mxu0
    %v2410 = vpop.f32.mrf.mxu0
    %2411 = vdwg.mxu0
    %v2412 = vmul.f32 %v2242, 0.2
    %v2413 = vmul.f32 %v2244, 0.2
    %v2414 = vmul.f32 %v2406, 0.2
    %v2415 = vmul.f32 %v2408, 0.2
    %v2416 = vmax.f32 %v2242, %v2412
    %v2417 = vmax.f32 %v2244, %v2413
    %v2418 = vmax.f32 %v2406, %v2414
    %v2419 = vmax.f32 %v2408, %v2415
    %v2420 = vpack.c.bf16 %v2416, %v2416
    %v2421 = vpack.c.bf16 %v2417, %v2417
    %v2422 = vpack.c.bf16 %v2418, %v2418
    %v2423 = vpack.c.bf16 %v2419, %v2419
    %v2424 = vld [vmem:[#allocation10] sm:$0xff]
    %v2425 = vld [vmem:[#allocation10 + $0x8] sm:$0xff]
    %v2426 = vld [vmem:[#allocation10 + $0x10] sm:$0xff]
    %v2427 = vld [vmem:[#allocation10 + $0x18] sm:$0xff]
    %v2428 = vld [vmem:[#allocation10 + $0x20] sm:$0xff]
    %v2429 = vld [vmem:[#allocation10 + $0x28] sm:$0xff]
    %v2430 = vld [vmem:[#allocation10 + $0x30] sm:$0xff]
    %v2431 = vld [vmem:[#allocation10 + $0x38] sm:$0xff]
    %v2432 = vld [vmem:[#allocation10 + $0x40] sm:$0xff]
    %v2433 = vld [vmem:[#allocation10 + $0x48] sm:$0xff]
    %v2434 = vld [vmem:[#allocation10 + $0x50] sm:$0xff]
    %v2435 = vld [vmem:[#allocation10 + $0x58] sm:$0xff]
    %v2436 = vld [vmem:[#allocation10 + $0x60] sm:$0xff]
    %v2437 = vld [vmem:[#allocation10 + $0x68] sm:$0xff]
    %v2438 = vld [vmem:[#allocation10 + $0x70] sm:$0xff]
    %v2439 = vld [vmem:[#allocation10 + $0x78] sm:$0xff]
    %v2440 = vld [vmem:[#allocation10 + $0x80] sm:$0xff]
    %v2441 = vld [vmem:[#allocation10 + $0x88] sm:$0xff]
    %v2442 = vld [vmem:[#allocation10 + $0x90] sm:$0xff]
    %v2443 = vld [vmem:[#allocation10 + $0x98] sm:$0xff]
    %v2444 = vld [vmem:[#allocation10 + $0xa0] sm:$0xff]
    %v2445 = vld [vmem:[#allocation10 + $0xa8] sm:$0xff]
    %v2446 = vld [vmem:[#allocation10 + $0xb0] sm:$0xff]
    %v2447 = vld [vmem:[#allocation10 + $0xb8] sm:$0xff]
    %v2448 = vld [vmem:[#allocation10 + $0xc0] sm:$0xff]
    %v2449 = vld [vmem:[#allocation10 + $0xc8] sm:$0xff]
    %v2450 = vld [vmem:[#allocation10 + $0xd0] sm:$0xff]
    %v2451 = vld [vmem:[#allocation10 + $0xd8] sm:$0xff]
    %v2452 = vld [vmem:[#allocation10 + $0xe0] sm:$0xff]
    %v2453 = vld [vmem:[#allocation10 + $0xe8] sm:$0xff]
    %v2454 = vld [vmem:[#allocation10 + $0xf0] sm:$0xff]
    %v2455 = vld [vmem:[#allocation10 + $0xf8] sm:$0xff]
    %v2456 = vld [vmem:[#allocation10 + $0x100] sm:$0xff]
    %v2457 = vld [vmem:[#allocation10 + $0x108] sm:$0xff]
    %v2458 = vld [vmem:[#allocation10 + $0x110] sm:$0xff]
    %v2459 = vld [vmem:[#allocation10 + $0x118] sm:$0xff]
    %v2460 = vld [vmem:[#allocation10 + $0x120] sm:$0xff]
    %v2461 = vld [vmem:[#allocation10 + $0x128] sm:$0xff]
    %v2462 = vld [vmem:[#allocation10 + $0x130] sm:$0xff]
    %v2463 = vld [vmem:[#allocation10 + $0x138] sm:$0xff]
    %v2464 = vld [vmem:[#allocation10 + $0x140] sm:$0xff]
    %v2465 = vld [vmem:[#allocation10 + $0x148] sm:$0xff]
    %v2466 = vld [vmem:[#allocation10 + $0x150] sm:$0xff]
    %v2467 = vld [vmem:[#allocation10 + $0x158] sm:$0xff]
    %v2468 = vld [vmem:[#allocation10 + $0x160] sm:$0xff]
    %v2469 = vld [vmem:[#allocation10 + $0x168] sm:$0xff]
    %v2470 = vld [vmem:[#allocation10 + $0x170] sm:$0xff]
    %v2471 = vld [vmem:[#allocation10 + $0x178] sm:$0xff]
    %v2472 = vld [vmem:[#allocation10 + $0x180] sm:$0xff]
    %v2473 = vld [vmem:[#allocation10 + $0x188] sm:$0xff]
    %v2474 = vld [vmem:[#allocation10 + $0x190] sm:$0xff]
    %v2475 = vld [vmem:[#allocation10 + $0x198] sm:$0xff]
    %v2476 = vld [vmem:[#allocation10 + $0x1a0] sm:$0xff]
    %v2477 = vld [vmem:[#allocation10 + $0x1a8] sm:$0xff]
    %v2478 = vld [vmem:[#allocation10 + $0x1b0] sm:$0xff]
    %v2479 = vld [vmem:[#allocation10 + $0x1b8] sm:$0xff]
    %v2480 = vld [vmem:[#allocation10 + $0x1c0] sm:$0xff]
    %v2481 = vld [vmem:[#allocation10 + $0x1c8] sm:$0xff]
    %v2482 = vld [vmem:[#allocation10 + $0x1d0] sm:$0xff]
    %v2483 = vld [vmem:[#allocation10 + $0x1d8] sm:$0xff]
    %v2484 = vld [vmem:[#allocation10 + $0x1e0] sm:$0xff]
    %v2485 = vld [vmem:[#allocation10 + $0x1e8] sm:$0xff]
    %v2486 = vld [vmem:[#allocation10 + $0x1f0] sm:$0xff]
    %v2487 = vld [vmem:[#allocation10 + $0x1f8] sm:$0xff]
    %v2488 = vld [vmem:[%s6] sm:$0x3]
    %v2490 = vlaneseq
    %v2491 = vshrl.u32 %v2490, 7
    %v2492 = vsub.s32 0, %v2491
    %v2493 = vrot.slane %v2488, %v2492
    %v2494 = vlaneseq
    %v2495 = vshrl.u32 %v2494, 7
    %v2496 = vsub.s32 1, %v2495
    %v2497 = vrot.slane %v2488, %v2496
    %v2564 = vunpack.c.l.b16 %v2424
    %v2565 = vunpack.c.h.b16 %v2424
    %v2566 = vunpack.c.l.b16 %v2425
    %v2567 = vunpack.c.h.b16 %v2425
    %v2568 = vunpack.c.l.b16 %v2426
    %v2569 = vunpack.c.h.b16 %v2426
    %v2570 = vunpack.c.l.b16 %v2427
    %v2571 = vunpack.c.h.b16 %v2427
    %v2572 = vunpack.c.l.b16 %v2428
    %v2573 = vunpack.c.h.b16 %v2428
    %v2574 = vunpack.c.l.b16 %v2429
    %v2575 = vunpack.c.h.b16 %v2429
    %v2576 = vunpack.c.l.b16 %v2430
    %v2577 = vunpack.c.h.b16 %v2430
    %v2578 = vunpack.c.l.b16 %v2431
    %v2579 = vunpack.c.h.b16 %v2431
    %v2580 = vunpack.c.l.b16 %v2432
    %v2581 = vunpack.c.h.b16 %v2432
    %v2582 = vunpack.c.l.b16 %v2433
    %v2583 = vunpack.c.h.b16 %v2433
    %v2584 = vunpack.c.l.b16 %v2434
    %v2585 = vunpack.c.h.b16 %v2434
    %v2586 = vunpack.c.l.b16 %v2435
    %v2587 = vunpack.c.h.b16 %v2435
    %v2588 = vunpack.c.l.b16 %v2436
    %v2589 = vunpack.c.h.b16 %v2436
    %v2590 = vunpack.c.l.b16 %v2437
    %v2591 = vunpack.c.h.b16 %v2437
    %v2592 = vunpack.c.l.b16 %v2438
    %v2593 = vunpack.c.h.b16 %v2438
    %v2594 = vunpack.c.l.b16 %v2439
    %v2595 = vunpack.c.h.b16 %v2439
    %v2596 = vunpack.c.l.b16 %v2440
    %v2597 = vunpack.c.h.b16 %v2440
    %v2598 = vunpack.c.l.b16 %v2441
    %v2599 = vunpack.c.h.b16 %v2441
    %v2600 = vunpack.c.l.b16 %v2442
    %v2601 = vunpack.c.h.b16 %v2442
    %v2602 = vunpack.c.l.b16 %v2443
    %v2603 = vunpack.c.h.b16 %v2443
    %v2604 = vunpack.c.l.b16 %v2444
    %v2605 = vunpack.c.h.b16 %v2444
    %v2606 = vunpack.c.l.b16 %v2445
    %v2607 = vunpack.c.h.b16 %v2445
    %v2608 = vunpack.c.l.b16 %v2446
    %v2609 = vunpack.c.h.b16 %v2446
    %v2610 = vunpack.c.l.b16 %v2447
    %v2611 = vunpack.c.h.b16 %v2447
    %v2612 = vunpack.c.l.b16 %v2448
    %v2613 = vunpack.c.h.b16 %v2448
    %v2614 = vunpack.c.l.b16 %v2449
    %v2615 = vunpack.c.h.b16 %v2449
    %v2616 = vunpack.c.l.b16 %v2450
    %v2617 = vunpack.c.h.b16 %v2450
    %v2618 = vunpack.c.l.b16 %v2451
    %v2619 = vunpack.c.h.b16 %v2451
    %v2620 = vunpack.c.l.b16 %v2452
    %v2621 = vunpack.c.h.b16 %v2452
    %v2622 = vunpack.c.l.b16 %v2453
    %v2623 = vunpack.c.h.b16 %v2453
    %v2624 = vunpack.c.l.b16 %v2454
    %v2625 = vunpack.c.h.b16 %v2454
    %v2626 = vunpack.c.l.b16 %v2455
    %v2627 = vunpack.c.h.b16 %v2455
    %v2628 = vunpack.c.l.b16 %v2456
    %v2629 = vunpack.c.h.b16 %v2456
    %v2630 = vunpack.c.l.b16 %v2457
    %v2631 = vunpack.c.h.b16 %v2457
    %v2632 = vunpack.c.l.b16 %v2458
    %v2633 = vunpack.c.h.b16 %v2458
    %v2634 = vunpack.c.l.b16 %v2459
    %v2635 = vunpack.c.h.b16 %v2459
    %v2636 = vunpack.c.l.b16 %v2460
    %v2637 = vunpack.c.h.b16 %v2460
    %v2638 = vunpack.c.l.b16 %v2461
    %v2639 = vunpack.c.h.b16 %v2461
    %v2640 = vunpack.c.l.b16 %v2462
    %v2641 = vunpack.c.h.b16 %v2462
    %v2642 = vunpack.c.l.b16 %v2463
    %v2643 = vunpack.c.h.b16 %v2463
    %v2644 = vunpack.c.l.b16 %v2464
    %v2645 = vunpack.c.h.b16 %v2464
    %v2646 = vunpack.c.l.b16 %v2465
    %v2647 = vunpack.c.h.b16 %v2465
    %v2648 = vunpack.c.l.b16 %v2466
    %v2649 = vunpack.c.h.b16 %v2466
    %v2650 = vunpack.c.l.b16 %v2467
    %v2651 = vunpack.c.h.b16 %v2467
    %v2652 = vunpack.c.l.b16 %v2468
    %v2653 = vunpack.c.h.b16 %v2468
    %v2654 = vunpack.c.l.b16 %v2469
    %v2655 = vunpack.c.h.b16 %v2469
    %v2656 = vunpack.c.l.b16 %v2470
    %v2657 = vunpack.c.h.b16 %v2470
    %v2658 = vunpack.c.l.b16 %v2471
    %v2659 = vunpack.c.h.b16 %v2471
    %v2660 = vunpack.c.l.b16 %v2472
    %v2661 = vunpack.c.h.b16 %v2472
    %v2662 = vunpack.c.l.b16 %v2473
    %v2663 = vunpack.c.h.b16 %v2473
    %v2664 = vunpack.c.l.b16 %v2474
    %v2665 = vunpack.c.h.b16 %v2474
    %v2666 = vunpack.c.l.b16 %v2475
    %v2667 = vunpack.c.h.b16 %v2475
    %v2668 = vunpack.c.l.b16 %v2476
    %v2669 = vunpack.c.h.b16 %v2476
    %v2670 = vunpack.c.l.b16 %v2477
    %v2671 = vunpack.c.h.b16 %v2477
    %v2672 = vunpack.c.l.b16 %v2478
    %v2673 = vunpack.c.h.b16 %v2478
    %v2674 = vunpack.c.l.b16 %v2479
    %v2675 = vunpack.c.h.b16 %v2479
    %v2676 = vunpack.c.l.b16 %v2480
    %v2677 = vunpack.c.h.b16 %v2480
    %v2678 = vunpack.c.l.b16 %v2481
    %v2679 = vunpack.c.h.b16 %v2481
    %v2680 = vunpack.c.l.b16 %v2482
    %v2681 = vunpack.c.h.b16 %v2482
    %v2682 = vunpack.c.l.b16 %v2483
    %v2683 = vunpack.c.h.b16 %v2483
    %v2684 = vunpack.c.l.b16 %v2484
    %v2685 = vunpack.c.h.b16 %v2484
    %v2686 = vunpack.c.l.b16 %v2485
    %v2687 = vunpack.c.h.b16 %v2485
    %v2688 = vunpack.c.l.b16 %v2486
    %v2689 = vunpack.c.h.b16 %v2486
    %v2690 = vunpack.c.l.b16 %v2487
    %v2691 = vunpack.c.h.b16 %v2487
    %v2692 = vpack.c.b16 %v2566, %v2564
    %v2693 = vpack.c.b16 %v2567, %v2565
    %v2694 = vpack.c.b16 %v2570, %v2568
    %v2695 = vpack.c.b16 %v2571, %v2569
    %v2696 = vpack.c.b16 %v2574, %v2572
    %v2697 = vpack.c.b16 %v2575, %v2573
    %v2698 = vpack.c.b16 %v2578, %v2576
    %v2699 = vpack.c.b16 %v2579, %v2577
    %v2700 = vpack.c.b16 %v2582, %v2580
    %v2701 = vpack.c.b16 %v2583, %v2581
    %v2702 = vpack.c.b16 %v2586, %v2584
    %v2703 = vpack.c.b16 %v2587, %v2585
    %v2704 = vpack.c.b16 %v2590, %v2588
    %v2705 = vpack.c.b16 %v2591, %v2589
    %v2706 = vpack.c.b16 %v2594, %v2592
    %v2707 = vpack.c.b16 %v2595, %v2593
    %v2708 = vpack.c.b16 %v2598, %v2596
    %v2709 = vpack.c.b16 %v2599, %v2597
    %v2710 = vpack.c.b16 %v2602, %v2600
    %v2711 = vpack.c.b16 %v2603, %v2601
    %v2712 = vpack.c.b16 %v2606, %v2604
    %v2713 = vpack.c.b16 %v2607, %v2605
    %v2714 = vpack.c.b16 %v2610, %v2608
    %v2715 = vpack.c.b16 %v2611, %v2609
    %v2716 = vpack.c.b16 %v2614, %v2612
    %v2717 = vpack.c.b16 %v2615, %v2613
    %v2718 = vpack.c.b16 %v2618, %v2616
    %v2719 = vpack.c.b16 %v2619, %v2617
    %v2720 = vpack.c.b16 %v2622, %v2620
    %v2721 = vpack.c.b16 %v2623, %v2621
    %v2722 = vpack.c.b16 %v2626, %v2624
    %v2723 = vpack.c.b16 %v2627, %v2625
    %v2724 = vpack.c.b16 %v2630, %v2628
    %v2725 = vpack.c.b16 %v2631, %v2629
    %v2726 = vpack.c.b16 %v2634, %v2632
    %v2727 = vpack.c.b16 %v2635, %v2633
    %v2728 = vpack.c.b16 %v2638, %v2636
    %v2729 = vpack.c.b16 %v2639, %v2637
    %v2730 = vpack.c.b16 %v2642, %v2640
    %v2731 = vpack.c.b16 %v2643, %v2641
    %v2732 = vpack.c.b16 %v2646, %v2644
    %v2733 = vpack.c.b16 %v2647, %v2645
    %v2734 = vpack.c.b16 %v2650, %v2648
    %v2735 = vpack.c.b16 %v2651, %v2649
    %v2736 = vpack.c.b16 %v2654, %v2652
    %v2737 = vpack.c.b16 %v2655, %v2653
    %v2738 = vpack.c.b16 %v2658, %v2656
    %v2739 = vpack.c.b16 %v2659, %v2657
    %v2740 = vpack.c.b16 %v2662, %v2660
    %v2741 = vpack.c.b16 %v2663, %v2661
    %v2742 = vpack.c.b16 %v2666, %v2664
    %v2743 = vpack.c.b16 %v2667, %v2665
    %v2744 = vpack.c.b16 %v2670, %v2668
    %v2745 = vpack.c.b16 %v2671, %v2669
    %v2746 = vpack.c.b16 %v2674, %v2672
    %v2747 = vpack.c.b16 %v2675, %v2673
    %v2748 = vpack.c.b16 %v2678, %v2676
    %v2749 = vpack.c.b16 %v2679, %v2677
    %v2750 = vpack.c.b16 %v2682, %v2680
    %v2751 = vpack.c.b16 %v2683, %v2681
    %v2752 = vpack.c.b16 %v2686, %v2684
    %v2753 = vpack.c.b16 %v2687, %v2685
    %v2754 = vpack.c.b16 %v2690, %v2688
    %v2755 = vpack.c.b16 %v2691, %v2689
    %2820 = vmatprep.subr.bf16.mxu0 %v2707
    %2821 = vmatpush1.bf16.msra.mxu0 %v2706
    %2822 = vmatprep.subr.bf16.mxu0 %v2705
    %2823 = vmatpush1.bf16.msra.mxu0 %v2704
    %2824 = vmatprep.subr.bf16.mxu0 %v2703
    %2825 = vmatpush1.bf16.msra.mxu0 %v2702
    %2826 = vmatprep.subr.bf16.mxu0 %v2701
    %2827 = vmatpush1.bf16.msra.mxu0 %v2700
    %2828 = vmatprep.subr.bf16.mxu0 %v2699
    %2829 = vmatpush1.bf16.msra.mxu0 %v2698
    %2830 = vmatprep.subr.bf16.mxu0 %v2697
    %2831 = vmatpush1.bf16.msra.mxu0 %v2696
    %2832 = vmatprep.subr.bf16.mxu0 %v2695
    %2833 = vmatpush1.bf16.msra.mxu0 %v2694
    %2834 = vmatprep.subr.bf16.mxu0 %v2693
    %2835 = vmatpush1.bf16.msra.mxu0 %v2692
    %2836 = vmatprep.subr.bf16.mxu0 %v2723
    %2837 = vmatpush2.bf16.msra.mxu0 %v2722
    %2838 = vmatprep.subr.bf16.mxu0 %v2721
    %2839 = vmatpush2.bf16.msra.mxu0 %v2720
    %2840 = vmatprep.subr.bf16.mxu0 %v2719
    %2841 = vmatpush2.bf16.msra.mxu0 %v2718
    %2842 = vmatprep.subr.bf16.mxu0 %v2717
    %2843 = vmatpush2.bf16.msra.mxu0 %v2716
    %2844 = vmatprep.subr.bf16.mxu0 %v2715
    %2845 = vmatpush2.bf16.msra.mxu0 %v2714
    %2846 = vmatprep.subr.bf16.mxu0 %v2713
    %2847 = vmatpush2.bf16.msra.mxu0 %v2712
    %2848 = vmatprep.subr.bf16.mxu0 %v2711
    %2849 = vmatpush2.bf16.msra.mxu0 %v2710
    %2850 = vmatprep.subr.bf16.mxu0 %v2709
    %2851 = vmatpush2.bf16.msra.mxu0 %v2708
    %2852 = vmatprep.mubr.bf16.mxu0 %v2421
    %2853 = vmatmul.mubr.bf16.gmra.mxu0 %v2420
    %v2854 = vpop.f32.mrf.mxu0
    %v2855 = vadd.f32 %v2493, %v2854
    %v2856 = vpop.f32.mrf.mxu0
    %v2857 = vadd.f32 %v2497, %v2856
    %v2858 = vpop.f32.mrf.mxu0
    %v2859 = vpop.f32.mrf.mxu0
    %2860 = vdwg.mxu0
    %2861 = vmatprep.subr.bf16.mxu0 %v2739
    %2862 = vmatpush1.bf16.msra.mxu0 %v2738
    %2863 = vmatprep.subr.bf16.mxu0 %v2737
    %2864 = vmatpush1.bf16.msra.mxu0 %v2736
    %2865 = vmatprep.subr.bf16.mxu0 %v2735
    %2866 = vmatpush1.bf16.msra.mxu0 %v2734
    %2867 = vmatprep.subr.bf16.mxu0 %v2733
    %2868 = vmatpush1.bf16.msra.mxu0 %v2732
    %2869 = vmatprep.subr.bf16.mxu0 %v2731
    %2870 = vmatpush1.bf16.msra.mxu0 %v2730
    %2871 = vmatprep.subr.bf16.mxu0 %v2729
    %2872 = vmatpush1.bf16.msra.mxu0 %v2728
    %2873 = vmatprep.subr.bf16.mxu0 %v2727
    %2874 = vmatpush1.bf16.msra.mxu0 %v2726
    %2875 = vmatprep.subr.bf16.mxu0 %v2725
    %2876 = vmatpush1.bf16.msra.mxu0 %v2724
    %2877 = vmatprep.subr.bf16.mxu0 %v2755
    %2878 = vmatpush2.bf16.msra.mxu0 %v2754
    %2879 = vmatprep.subr.bf16.mxu0 %v2753
    %2880 = vmatpush2.bf16.msra.mxu0 %v2752
    %2881 = vmatprep.subr.bf16.mxu0 %v2751
    %2882 = vmatpush2.bf16.msra.mxu0 %v2750
    %2883 = vmatprep.subr.bf16.mxu0 %v2749
    %2884 = vmatpush2.bf16.msra.mxu0 %v2748
    %2885 = vmatprep.subr.bf16.mxu0 %v2747
    %2886 = vmatpush2.bf16.msra.mxu0 %v2746
    %2887 = vmatprep.subr.bf16.mxu0 %v2745
    %2888 = vmatpush2.bf16.msra.mxu0 %v2744
    %2889 = vmatprep.subr.bf16.mxu0 %v2743
    %2890 = vmatpush2.bf16.msra.mxu0 %v2742
    %2891 = vmatprep.subr.bf16.mxu0 %v2741
    %2892 = vmatpush2.bf16.msra.mxu0 %v2740
    %2893 = vmatprep.mubr.bf16.mxu0 %v2423
    %2894 = vmatmul.mubr.bf16.gmra.mxu0 %v2422
    %v2895 = vpop.f32.mrf.mxu0
    %v2896 = vadd.f32 %v2855, %v2895
    %v2897 = vpop.f32.mrf.mxu0
    %v2898 = vadd.f32 %v2857, %v2897
    %v2899 = vpop.f32.mrf.mxu0
    %v2900 = vpop.f32.mrf.mxu0
    %2901 = vdwg.mxu0
    %v2902 = vmul.f32 %v2896, 0.2
    %v2903 = vmul.f32 %v2898, 0.2
    %v2904 = vmax.f32 %v2896, %v2902
    %v2905 = vmax.f32 %v2898, %v2903
    %v2906 = vld [vmem:[%s7] sm:$0x3]
    %v2908 = vlaneseq
    %v2909 = vshrl.u32 %v2908, 7
    %v2910 = vsub.s32 0, %v2909
    %v2911 = vrot.slane %v2906, %v2910
    %v2912 = vlaneseq
    %v2913 = vshrl.u32 %v2912, 7
    %v2914 = vsub.s32 1, %v2913
    %v2915 = vrot.slane %v2906, %v2914
    %v2918 = vmul.f32 %v2904, %v2911
    %v2919 = vmul.f32 %v2905, %v2915
    %v2920 = vadd.f32 %v2918, %v2919
    %2921 = vadd.xlane.f32.xlu0 %v2920
    %v2922 = vpop.xlane.xlu0 %2921
    %v2923 = vld [vmem:[#allocation2] sm:$0x1]
    %v2925 = vlaneseq
    %v2926 = vshrl.u32 %v2925, 7
    %v2927 = vsub.s32 0, %v2926
    %v2928 = vrot.slane %v2923, %v2927
    %v2930 = vadd.f32 %v2922, %v2928
    %vm2931 = vcmask 7168
    %2932 = vst.msk [vmem:[%s9] sm:$0xff] %vm2931, %v2930
    // Predicated region
    $region58: #{_critic_pallas.1} parent=1 // pred_check
      _
    $region59: #{_critic_pallas.1} parent=1 // pred_check_branch
      %2934 = sbr.rel (0) target = $region61
    $region60: #{_critic_pallas.1} parent=1 // pred_region
      _
    $region61: #{_critic_pallas.1} parent=1 // pred_fallthru
      _
    // Predicated region
    $region62: #{_critic_pallas.1} parent=1 // pred_check
      _
    $region63: #{_critic_pallas.1} parent=1 // pred_check_branch
      %2936 = sbr.rel (0) target = $region65
    $region64: #{_critic_pallas.1} parent=1 // pred_region
      _
    $region65: #{_critic_pallas.1} parent=1 // pred_fallthru
      _
    %2937 = vsyncpa [#allocation4], 1
    %2938 = vsyncpa [#allocation6], 1
    %2939 = vsyncpa [#allocation9], 1

// kernel: _critic_pallas.1
$region0: #{_critic_pallas.1}
  #allocation0 [shape = 'u32[]', space=smem, size = 0x4, offset = 0x4, fixed_abs, tag = 'smem constant byte address 0x4 - core index']
  #allocation1 [shape = 'u32[144,128]{1,0:T(1,128)}', space=vmem, size = 0x12000, scoped, tag = 'internal scratch']
  #allocation2 [shape = 'f32[1,1]{1,0:T(1,128)S(1)}', space=vmem, size = 0x200, scoped, tag = 'scoped memory for _critic_pallas.1']
  %s0 = inlined_call_operand.hbm [shape: bf16[8,64], index: 0, kind: input, shape index: {}]
  %s1 = inlined_call_operand.hbm [shape: bf16[64,1024], index: 1, kind: input, shape index: {}]
  %s2 = inlined_call_operand.hbm [shape: f32[1,1024], index: 2, kind: input, shape index: {}]
  %s3 = inlined_call_operand.hbm [shape: bf16[1024,512], index: 3, kind: input, shape index: {}]
  %s4 = inlined_call_operand.vmem [shape: f32[1,512], index: 4, kind: input, shape index: {}]
  %s5 = inlined_call_operand.hbm [shape: bf16[512,256], index: 5, kind: input, shape index: {}]
  %s6 = inlined_call_operand.vmem [shape: f32[1,256], index: 6, kind: input, shape index: {}]
  %s7 = inlined_call_operand.vmem [shape: f32[1,256], index: 7, kind: input, shape index: {}]
  %s8 = inlined_call_operand.<no memory space> [shape: f32[1,1], index: 8, kind: input, shape index: {}]
  %s9 = inlined_call_operand.vmem [shape: f32[8,1], index: 9, kind: output, shape index: {}]
  %s10 = sld [smem:[#allocation0]]
  $region66: #{_critic_pallas.1} parent=0
    _
  %s12 = ssub.s32 1, %s10
  %s13 = scalar_select 0, %s12, %s10
  %v14 = vstv %s8
  %15 = vst [vmem:[#allocation2] sm:$0x1] %v14
  $region1: #{_critic_pallas.1} parent=0
    #allocation3 [shape = 'u8[2048]{0}', space=vmem, size = 0x800, scoped, tag = 'input window, operand 0, single buffered']
    #allocation4 [shape = 's32[1]{0}', space=sflag, size = 0x4, scoped, tag = 'scoped memory for _critic_pallas.1']
    #allocation5 [shape = 'u8[131072]{0}', space=vmem, size = 0x20000, scoped, tag = 'input window, operand 1, single buffered']
    #allocation6 [shape = 's32[1]{0}', space=sflag, size = 0x4, scoped, tag = 'scoped memory for _critic_pallas.1']
    #allocation7 [shape = 'u8[4096]{0}', space=vmem, size = 0x1000, scoped, tag = 'input window, operand 2, single buffered']
    #allocation8 [shape = 'u8[1048576]{0}', space=vmem, size = 0x100000, scoped, tag = 'input window, operand 3, single buffered']
    #allocation9 [shape = 's32[1]{0}', space=sflag, size = 0x4, scoped, tag = 'scoped memory for _critic_pallas.1']
    #allocation10 [shape = 'u8[262144]{0}', space=vmem, size = 0x40000, scoped, tag = 'input window, operand 5, single buffered']
    %16 = vsyncpa [#allocation4], 0
    %17 = vsyncpa [#allocation6], 0
    %18 = vsyncpa [#allocation9], 0
    // Predicated region
    $region2: #{_critic_pallas.1} parent=1 // pred_check
      _
    $region3: #{_critic_pallas.1} parent=1 // pred_check_branch
      %20 = sbr.rel (0) target = $region5
    $region4: #{_critic_pallas.1} parent=1 // pred_region
      %s22 = ssub.s32 64, 64
      %23 = vsyncadd [#allocation4], %s22
      %s25 = sshll.u32 [#allocation3], 4
      %s26 = int_to_ptr.vmem [resolvable:$true] %s25
      %28 = dma.hbm_to_vmem [thread:$0]  %s0, 64, %s26, [#allocation4]
    $region5: #{_critic_pallas.1} parent=1 // pred_fallthru
      _
    // Predicated region
    $region6: #{_critic_pallas.1} parent=1 // pred_check
      _
    $region7: #{_critic_pallas.1} parent=1 // pred_check_branch
      %30 = sbr.rel (0) target = $region9
    $region8: #{_critic_pallas.1} parent=1 // pred_region
      %s32 = ssub.s32 4096, 4096
      %33 = vsyncadd [#allocation6], %s32
      %s34 = sshll.u32 [#allocation5], 4
      %s35 = int_to_ptr.vmem [resolvable:$true] %s34
      %40 = dma.hbm_to_vmem [thread:$0]  %s1, 4096, %s35, [#allocation6], 512, 512, 32
    $region9: #{_critic_pallas.1} parent=1 // pred_fallthru
      _
    // Predicated region
    $region10: #{_critic_pallas.1} parent=1 // pred_check
      _
    $region11: #{_critic_pallas.1} parent=1 // pred_check_branch
      %42 = sbr.rel (0) target = $region13
    $region12: #{_critic_pallas.1} parent=1 // pred_region
      %s44 = ssub.s32 128, 128
      %45 = vsyncadd [#allocation6], %s44
      %s47 = sshll.u32 [#allocation7], 4
      %s48 = int_to_ptr.vmem [resolvable:$true] %s47
      %50 = dma.hbm_to_vmem [thread:$0]  %s2, 128, %s48, [#allocation6]
    $region13: #{_critic_pallas.1} parent=1 // pred_fallthru
      _
    // Predicated region
    $region14: #{_critic_pallas.1} parent=1 // pred_check
      _
    $region15: #{_critic_pallas.1} parent=1 // pred_check_branch
      %52 = sbr.rel (0) target = $region17
    $region16: #{_critic_pallas.1} parent=1 // pred_region
      %s54 = ssub.s32 32768, 32768
      %55 = vsyncadd [#allocation9], %s54
      %s56 = sshll.u32 [#allocation8], 4
      %s57 = int_to_ptr.vmem [resolvable:$true] %s56
      %62 = dma.hbm_to_vmem [thread:$0]  %s3, 32768, %s57, [#allocation9], 256, 256, 16
    $region17: #{_critic_pallas.1} parent=1 // pred_fallthru
      _
    // Predicated region
    $region18: #{_critic_pallas.1} parent=1 // pred_check
      _
    $region19: #{_critic_pallas.1} parent=1 // pred_check_branch
      %64 = sbr.rel (0) target = $region21
    $region20: #{_critic_pallas.1} parent=1 // pred_region
      _
    $region21: #{_critic_pallas.1} parent=1 // pred_fallthru
      _
    // Predicated region
    $region22: #{_critic_pallas.1} parent=1 // pred_check
      _
    $region23: #{_critic_pallas.1} parent=1 // pred_check_branch
      %66 = sbr.rel (0) target = $region25
    $region24: #{_critic_pallas.1} parent=1 // pred_region
      %s68 = ssub.s32 8192, 8192
      %69 = vsyncadd [#allocation9], %s68
      %s70 = sshll.u32 [#allocation10], 4
      %s71 = int_to_ptr.vmem [resolvable:$true] %s70
      %76 = dma.hbm_to_vmem [thread:$0]  %s5, 8192, %s71, [#allocation9], 128, 128, 8
    $region25: #{_critic_pallas.1} parent=1 // pred_fallthru
      _
    // Predicated region
    $region26: #{_critic_pallas.1} parent=1 // pred_check
      _
    $region27: #{_critic_pallas.1} parent=1 // pred_check_branch
      %78 = sbr.rel (0) target = $region29
    $region28: #{_critic_pallas.1} parent=1 // pred_region
      _
    $region29: #{_critic_pallas.1} parent=1 // pred_fallthru
      _
    // Predicated region
    $region30: #{_critic_pallas.1} parent=1 // pred_check
      _
    $region31: #{_critic_pallas.1} parent=1 // pred_check_branch
      %80 = sbr.rel (0) target = $region33
    $region32: #{_critic_pallas.1} parent=1 // pred_region
      _
    $region33: #{_critic_pallas.1} parent=1 // pred_fallthru
      _
    // Predicated region
    $region34: #{_critic_pallas.1} parent=1 // pred_check
      _
    $region35: #{_critic_pallas.1} parent=1 // pred_check_branch
      %82 = sbr.rel (0) target = $region37
    $region36: #{_critic_pallas.1} parent=1 // pred_region
      _
    $region37: #{_critic_pallas.1} parent=1 // pred_fallthru
      _
    // Predicated region
    $region38: #{_critic_pallas.1} parent=1 // pred_check
      _
    $region39: #{_critic_pallas.1} parent=1 // pred_check_branch
      %84 = sbr.rel (0) target = $region41
    $region40: #{_critic_pallas.1} parent=1 // pred_region
      %85 = dma.done [#allocation4], 64
    $region41: #{_critic_pallas.1} parent=1 // pred_fallthru
      _
    // Predicated region
    $region42: #{_critic_pallas.1} parent=1 // pred_check
      _
    $region43: #{_critic_pallas.1} parent=1 // pred_check_branch
      %87 = sbr.rel (0) target = $region45
    $region44: #{_critic_pallas.1} parent=1 // pred_region
      %88 = dma.done [#allocation6], 4096
    $region45: #{_critic_pallas.1} parent=1 // pred_fallthru
      _
    // Predicated region
    $region46: #{_critic_pallas.1} parent=1 // pred_check
      _
    $region47: #{_critic_pallas.1} parent=1 // pred_check_branch
      %90 = sbr.rel (0) target = $region49
    $region48: #{_critic_pallas.1} parent=1 // pred_region
      %91 = dma.done [#allocation6], 128
    $region49: #{_critic_pallas.1} parent=1 // pred_fallthru
      _
    // Predicated region
    $region50: #{_critic_pallas.1} parent=1 // pred_check
      _
    $region51: #{_critic_pallas.1} parent=1 // pred_check_branch
      %93 = sbr.rel (0) target = $region53
    $region52: #{_critic_pallas.1} parent=1 // pred_region
      %94 = dma.done [#allocation9], 32768
    $region53: #{_critic_pallas.1} parent=1 // pred_fallthru
      _
    // Predicated region
    $region54: #{_critic_pallas.1} parent=1 // pred_check
      _
    $region55: #{_critic_pallas.1} parent=1 // pred_check_branch
      %96 = sbr.rel (0) target = $region57
    $region56: #{_critic_pallas.1} parent=1 // pred_region
      %97 = dma.done [#allocation9], 8192
    $region57: #{_critic_pallas.1} parent=1 // pred_fallthru
      _
    %v99 = vld [vmem:[#allocation3] sm:$0xf]
    %v100 = vld [vmem:[#allocation5] sm:$0xff]
    %v101 = vld [vmem:[#allocation5 + $0x8] sm:$0xff]
    %v102 = vld [vmem:[#allocation5 + $0x10] sm:$0xff]
    %v103 = vld [vmem:[#allocation5 + $0x18] sm:$0xff]
    %v104 = vld [vmem:[#allocation5 + $0x20] sm:$0xff]
    %v105 = vld [vmem:[#allocation5 + $0x28] sm:$0xff]
    %v106 = vld [vmem:[#allocation5 + $0x30] sm:$0xff]
    %v107 = vld [vmem:[#allocation5 + $0x38] sm:$0xff]
    %v108 = vld [vmem:[#allocation5 + $0x40] sm:$0xff]
    %v109 = vld [vmem:[#allocation5 + $0x48] sm:$0xff]
    %v110 = vld [vmem:[#allocation5 + $0x50] sm:$0xff]
    %v111 = vld [vmem:[#allocation5 + $0x58] sm:$0xff]
    %v112 = vld [vmem:[#allocation5 + $0x60] sm:$0xff]
    %v113 = vld [vmem:[#allocation5 + $0x68] sm:$0xff]
    %v114 = vld [vmem:[#allocation5 + $0x70] sm:$0xff]
    %v115 = vld [vmem:[#allocation5 + $0x78] sm:$0xff]
    %v116 = vld [vmem:[#allocation5 + $0x80] sm:$0xff]
    %v117 = vld [vmem:[#allocation5 + $0x88] sm:$0xff]
    %v118 = vld [vmem:[#allocation5 + $0x90] sm:$0xff]
    %v119 = vld [vmem:[#allocation5 + $0x98] sm:$0xff]
    %v120 = vld [vmem:[#allocation5 + $0xa0] sm:$0xff]
    %v121 = vld [vmem:[#allocation5 + $0xa8] sm:$0xff]
    %v122 = vld [vmem:[#allocation5 + $0xb0] sm:$0xff]
    %v123 = vld [vmem:[#allocation5 + $0xb8] sm:$0xff]
    %v124 = vld [vmem:[#allocation5 + $0xc0] sm:$0xff]
    %v125 = vld [vmem:[#allocation5 + $0xc8] sm:$0xff]
    %v126 = vld [vmem:[#allocation5 + $0xd0] sm:$0xff]
    %v127 = vld [vmem:[#allocation5 + $0xd8] sm:$0xff]
    %v128 = vld [vmem:[#allocation5 + $0xe0] sm:$0xff]
    %v129 = vld [vmem:[#allocation5 + $0xe8] sm:$0xff]
    %v130 = vld [vmem:[#allocation5 + $0xf0] sm:$0xff]
    %v131 = vld [vmem:[#allocation5 + $0xf8] sm:$0xff]
    %v132 = vld [vmem:[#allocation7] sm:$0xff]
    %v134 = vlaneseq
    %v135 = vshrl.u32 %v134, 7
    %v136 = vsub.s32 0, %v135
    %v137 = vrot.slane %v132, %v136
    %v138 = vlaneseq
    %v139 = vshrl.u32 %v138, 7
    %v140 = vsub.s32 1, %v139
    %v141 = vrot.slane %v132, %v140
    %v142 = vlaneseq
    %v143 = vshrl.u32 %v142, 7
    %v144 = vsub.s32 2, %v143
    %v145 = vrot.slane %v132, %v144
    %v146 = vlaneseq
    %v147 = vshrl.u32 %v146, 7
    %v148 = vsub.s32 3, %v147
    %v149 = vrot.slane %v132, %v148
    %v150 = vlaneseq
    %v151 = vshrl.u32 %v150, 7
    %v152 = vsub.s32 4, %v151
    %v153 = vrot.slane %v132, %v152
    %v154 = vlaneseq
    %v155 = vshrl.u32 %v154, 7
    %v156 = vsub.s32 5, %v155
    %v157 = vrot.slane %v132, %v156
    %v158 = vlaneseq
    %v159 = vshrl.u32 %v158, 7
    %v160 = vsub.s32 6, %v159
    %v161 = vrot.slane %v132, %v160
    %v162 = vlaneseq
    %v163 = vshrl.u32 %v162, 7
    %v164 = vsub.s32 7, %v163
    %v165 = vrot.slane %v132, %v164
    %v206 = vunpack.c.l.b16 %v100
    %v207 = vunpack.c.h.b16 %v100
    %v208 = vunpack.c.l.b16 %v101
    %v209 = vunpack.c.h.b16 %v101
    %v210 = vunpack.c.l.b16 %v102
    %v211 = vunpack.c.h.b16 %v102
    %v212 = vunpack.c.l.b16 %v103
    %v213 = vunpack.c.h.b16 %v103
    %v214 = vunpack.c.l.b16 %v104
    %v215 = vunpack.c.h.b16 %v104
    %v216 = vunpack.c.l.b16 %v105
    %v217 = vunpack.c.h.b16 %v105
    %v218 = vunpack.c.l.b16 %v106
    %v219 = vunpack.c.h.b16 %v106
    %v220 = vunpack.c.l.b16 %v107
    %v221 = vunpack.c.h.b16 %v107
    %v222 = vunpack.c.l.b16 %v108
    %v223 = vunpack.c.h.b16 %v108
    %v224 = vunpack.c.l.b16 %v109
    %v225 = vunpack.c.h.b16 %v109
    %v226 = vunpack.c.l.b16 %v110
    %v227 = vunpack.c.h.b16 %v110
    %v228 = vunpack.c.l.b16 %v111
    %v229 = vunpack.c.h.b16 %v111
    %v230 = vunpack.c.l.b16 %v112
    %v231 = vunpack.c.h.b16 %v112
    %v232 = vunpack.c.l.b16 %v113
    %v233 = vunpack.c.h.b16 %v113
    %v234 = vunpack.c.l.b16 %v114
    %v235 = vunpack.c.h.b16 %v114
    %v236 = vunpack.c.l.b16 %v115
    %v237 = vunpack.c.h.b16 %v115
    %v238 = vunpack.c.l.b16 %v116
    %v239 = vunpack.c.h.b16 %v116
    %v240 = vunpack.c.l.b16 %v117
    %v241 = vunpack.c.h.b16 %v117
    %v242 = vunpack.c.l.b16 %v118
    %v243 = vunpack.c.h.b16 %v118
    %v244 = vunpack.c.l.b16 %v119
    %v245 = vunpack.c.h.b16 %v119
    %v246 = vunpack.c.l.b16 %v120
    %v247 = vunpack.c.h.b16 %v120
    %v248 = vunpack.c.l.b16 %v121
    %v249 = vunpack.c.h.b16 %v121
    %v250 = vunpack.c.l.b16 %v122
    %v251 = vunpack.c.h.b16 %v122
    %v252 = vunpack.c.l.b16 %v123
    %v253 = vunpack.c.h.b16 %v123
    %v254 = vunpack.c.l.b16 %v124
    %v255 = vunpack.c.h.b16 %v124
    %v256 = vunpack.c.l.b16 %v125
    %v257 = vunpack.c.h.b16 %v125
    %v258 = vunpack.c.l.b16 %v126
    %v259 = vunpack.c.h.b16 %v126
    %v260 = vunpack.c.l.b16 %v127
    %v261 = vunpack.c.h.b16 %v127
    %v262 = vunpack.c.l.b16 %v128
    %v263 = vunpack.c.h.b16 %v128
    %v264 = vunpack.c.l.b16 %v129
    %v265 = vunpack.c.h.b16 %v129
    %v266 = vunpack.c.l.b16 %v130
    %v267 = vunpack.c.h.b16 %v130
    %v268 = vunpack.c.l.b16 %v131
    %v269 = vunpack.c.h.b16 %v131
    %v270 = vpack.c.b16 %v214, %v206
    %v271 = vpack.c.b16 %v215, %v207
    %v272 = vpack.c.b16 %v216, %v208
    %v273 = vpack.c.b16 %v217, %v209
    %v274 = vpack.c.b16 %v218, %v210
    %v275 = vpack.c.b16 %v219, %v211
    %v276 = vpack.c.b16 %v220, %v212
    %v277 = vpack.c.b16 %v221, %v213
    %v278 = vpack.c.b16 %v230, %v222
    %v279 = vpack.c.b16 %v231, %v223
    %v280 = vpack.c.b16 %v232, %v224
    %v281 = vpack.c.b16 %v233, %v225
    %v282 = vpack.c.b16 %v234, %v226
    %v283 = vpack.c.b16 %v235, %v227
    %v284 = vpack.c.b16 %v236, %v228
    %v285 = vpack.c.b16 %v237, %v229
    %v286 = vpack.c.b16 %v246, %v238
    %v287 = vpack.c.b16 %v247, %v239
    %v288 = vpack.c.b16 %v248, %v240
    %v289 = vpack.c.b16 %v249, %v241
    %v290 = vpack.c.b16 %v250, %v242
    %v291 = vpack.c.b16 %v251, %v243
    %v292 = vpack.c.b16 %v252, %v244
    %v293 = vpack.c.b16 %v253, %v245
    %v294 = vpack.c.b16 %v262, %v254
    %v295 = vpack.c.b16 %v263, %v255
    %v296 = vpack.c.b16 %v264, %v256
    %v297 = vpack.c.b16 %v265, %v257
    %v298 = vpack.c.b16 %v266, %v258
    %v299 = vpack.c.b16 %v267, %v259
    %v300 = vpack.c.b16 %v268, %v260
    %v301 = vpack.c.b16 %v269, %v261
    %vm334 = vcmask 523264
    %v336 = vsel %vm334, %v99, 0
    %338 = vmatprep.subr.bf16.mxu0 0
    %339 = vmatpush1.bf16.msra.mxu0 0
    %340 = vmatprep.subr.bf16.mxu0 0
    %341 = vmatpush1.bf16.msra.mxu0 0
    %342 = vmatprep.subr.bf16.mxu0 0
    %343 = vmatpush1.bf16.msra.mxu0 0
    %344 = vmatprep.subr.bf16.mxu0 0
    %345 = vmatpush1.bf16.msra.mxu0 0
    %346 = vmatprep.subr.bf16.mxu0 %v295
    %347 = vmatpush1.bf16.msra.mxu0 %v294
    %348 = vmatprep.subr.bf16.mxu0 %v287
    %349 = vmatpush1.bf16.msra.mxu0 %v286
    %350 = vmatprep.subr.bf16.mxu0 %v279
    %351 = vmatpush1.bf16.msra.mxu0 %v278
    %352 = vmatprep.subr.bf16.mxu0 %v271
    %353 = vmatpush1.bf16.msra.mxu0 %v270
    %354 = vmatprep.subr.bf16.mxu0 0
    %355 = vmatpush2.bf16.msra.mxu0 0
    %356 = vmatprep.subr.bf16.mxu0 0
    %357 = vmatpush2.bf16.msra.mxu0 0
    %358 = vmatprep.subr.bf16.mxu0 0
    %359 = vmatpush2.bf16.msra.mxu0 0
    %360 = vmatprep.subr.bf16.mxu0 0
    %361 = vmatpush2.bf16.msra.mxu0 0
    %362 = vmatprep.subr.bf16.mxu0 0
    %363 = vmatpush2.bf16.msra.mxu0 0
    %364 = vmatprep.subr.bf16.mxu0 0
    %365 = vmatpush2.bf16.msra.mxu0 0
    %366 = vmatprep.subr.bf16.mxu0 0
    %367 = vmatpush2.bf16.msra.mxu0 0
    %368 = vmatprep.subr.bf16.mxu0 0
    %369 = vmatpush2.bf16.msra.mxu0 0
    %370 = vmatprep.mubr.bf16.mxu0 0
    %371 = vmatmul.mubr.bf16.gmra.mxu0 %v336
    %v372 = vpop.f32.mrf.mxu0
    %v373 = vadd.f32 %v137, %v372
    %v374 = vpop.f32.mrf.mxu0
    %v375 = vadd.f32 %v141, %v374
    %v376 = vpop.f32.mrf.mxu0
    %v377 = vpop.f32.mrf.mxu0
    %378 = vdwg.mxu0
    %379 = vmatprep.subr.bf16.mxu0 0
    %380 = vmatpush1.bf16.msra.mxu0 0
    %381 = vmatprep.subr.bf16.mxu0 0
    %382 = vmatpush1.bf16.msra.mxu0 0
    %383 = vmatprep.subr.bf16.mxu0 0
    %384 = vmatpush1.bf16.msra.mxu0 0
    %385 = vmatprep.subr.bf16.mxu0 0
    %386 = vmatpush1.bf16.msra.mxu0 0
    %387 = vmatprep.subr.bf16.mxu0 %v297
    %388 = vmatpush1.bf16.msra.mxu0 %v296
    %389 = vmatprep.subr.bf16.mxu0 %v289
    %390 = vmatpush1.bf16.msra.mxu0 %v288
    %391 = vmatprep.subr.bf16.mxu0 %v281
    %392 = vmatpush1.bf16.msra.mxu0 %v280
    %393 = vmatprep.subr.bf16.mxu0 %v273
    %394 = vmatpush1.bf16.msra.mxu0 %v272
    %395 = vmatprep.subr.bf16.mxu0 0
    %396 = vmatpush2.bf16.msra.mxu0 0
    %397 = vmatprep.subr.bf16.mxu0 0
    %398 = vmatpush2.bf16.msra.mxu0 0
    %399 = vmatprep.subr.bf16.mxu0 0
    %400 = vmatpush2.bf16.msra.mxu0 0
    %401 = vmatprep.subr.bf16.mxu0 0
    %402 = vmatpush2.bf16.msra.mxu0 0
    %403 = vmatprep.subr.bf16.mxu0 0
    %404 = vmatpush2.bf16.msra.mxu0 0
    %405 = vmatprep.subr.bf16.mxu0 0
    %406 = vmatpush2.bf16.msra.mxu0 0
    %407 = vmatprep.subr.bf16.mxu0 0
    %408 = vmatpush2.bf16.msra.mxu0 0
    %409 = vmatprep.subr.bf16.mxu0 0
    %410 = vmatpush2.bf16.msra.mxu0 0
    %411 = vmatprep.mubr.bf16.mxu0 0
    %412 = vmatmul.mubr.bf16.gmra.mxu0 %v336
    %v413 = vpop.f32.mrf.mxu0
    %v414 = vadd.f32 %v145, %v413
    %v415 = vpop.f32.mrf.mxu0
    %v416 = vadd.f32 %v149, %v415
    %v417 = vpop.f32.mrf.mxu0
    %v418 = vpop.f32.mrf.mxu0
    %419 = vdwg.mxu0
    %420 = vmatprep.subr.bf16.mxu0 0
    %421 = vmatpush1.bf16.msra.mxu0 0
    %422 = vmatprep.subr.bf16.mxu0 0
    %423 = vmatpush1.bf16.msra.mxu0 0
    %424 = vmatprep.subr.bf16.mxu0 0
    %425 = vmatpush1.bf16.msra.mxu0 0
    %426 = vmatprep.subr.bf16.mxu0 0
    %427 = vmatpush1.bf16.msra.mxu0 0
    %428 = vmatprep.subr.bf16.mxu0 %v299
    %429 = vmatpush1.bf16.msra.mxu0 %v298
    %430 = vmatprep.subr.bf16.mxu0 %v291
    %431 = vmatpush1.bf16.msra.mxu0 %v290
    %432 = vmatprep.subr.bf16.mxu0 %v283
    %433 = vmatpush1.bf16.msra.mxu0 %v282
    %434 = vmatprep.subr.bf16.mxu0 %v275
    %435 = vmatpush1.bf16.msra.mxu0 %v274
    %436 = vmatprep.subr.bf16.mxu0 0
    %437 = vmatpush2.bf16.msra.mxu0 0
    %438 = vmatprep.subr.bf16.mxu0 0
    %439 = vmatpush2.bf16.msra.mxu0 0
    %440 = vmatprep.subr.bf16.mxu0 0
    %441 = vmatpush2.bf16.msra.mxu0 0
    %442 = vmatprep.subr.bf16.mxu0 0
    %443 = vmatpush2.bf16.msra.mxu0 0
    %444 = vmatprep.subr.bf16.mxu0 0
    %445 = vmatpush2.bf16.msra.mxu0 0
    %446 = vmatprep.subr.bf16.mxu0 0
    %447 = vmatpush2.bf16.msra.mxu0 0
    %448 = vmatprep.subr.bf16.mxu0 0
    %449 = vmatpush2.bf16.msra.mxu0 0
    %450 = vmatprep.subr.bf16.mxu0 0
    %451 = vmatpush2.bf16.msra.mxu0 0
    %452 = vmatprep.mubr.bf16.mxu0 0
    %453 = vmatmul.mubr.bf16.gmra.mxu0 %v336
    %v454 = vpop.f32.mrf.mxu0
    %v455 = vadd.f32 %v153, %v454
    %v456 = vpop.f32.mrf.mxu0
    %v457 = vadd.f32 %v157, %v456
    %v458 = vpop.f32.mrf.mxu0
    %v459 = vpop.f32.mrf.mxu0
    %460 = vdwg.mxu0
    %461 = vmatprep.subr.bf16.mxu0 0
    %462 = vmatpush1.bf16.msra.mxu0 0
    %463 = vmatprep.subr.bf16.mxu0 0
    %464 = vmatpush1.bf16.msra.mxu0 0
    %465 = vmatprep.subr.bf16.mxu0 0
    %466 = vmatpush1.bf16.msra.mxu0 0
    %467 = vmatprep.subr.bf16.mxu0 0
    %468 = vmatpush1.bf16.msra.mxu0 0
    %469 = vmatprep.subr.bf16.mxu0 %v301
    %470 = vmatpush1.bf16.msra.mxu0 %v300
    %471 = vmatprep.subr.bf16.mxu0 %v293
    %472 = vmatpush1.bf16.msra.mxu0 %v292
    %473 = vmatprep.subr.bf16.mxu0 %v285
    %474 = vmatpush1.bf16.msra.mxu0 %v284
    %475 = vmatprep.subr.bf16.mxu0 %v277
    %476 = vmatpush1.bf16.msra.mxu0 %v276
    %477 = vmatprep.subr.bf16.mxu0 0
    %478 = vmatpush2.bf16.msra.mxu0 0
    %479 = vmatprep.subr.bf16.mxu0 0
    %480 = vmatpush2.bf16.msra.mxu0 0
    %481 = vmatprep.subr.bf16.mxu0 0
    %482 = vmatpush2.bf16.msra.mxu0 0
    %483 = vmatprep.subr.bf16.mxu0 0
    %484 = vmatpush2.bf16.msra.mxu0 0
    %485 = vmatprep.subr.bf16.mxu0 0
    %486 = vmatpush2.bf16.msra.mxu0 0
    %487 = vmatprep.subr.bf16.mxu0 0
    %488 = vmatpush2.bf16.msra.mxu0 0
    %489 = vmatprep.subr.bf16.mxu0 0
    %490 = vmatpush2.bf16.msra.mxu0 0
    %491 = vmatprep.subr.bf16.mxu0 0
    %492 = vmatpush2.bf16.msra.mxu0 0
    %493 = vmatprep.mubr.bf16.mxu0 0
    %494 = vmatmul.mubr.bf16.gmra.mxu0 %v336
    %v495 = vpop.f32.mrf.mxu0
    %v496 = vadd.f32 %v161, %v495
    %v497 = vpop.f32.mrf.mxu0
    %v498 = vadd.f32 %v165, %v497
    %v499 = vpop.f32.mrf.mxu0
    %v500 = vpop.f32.mrf.mxu0
    %501 = vdwg.mxu0
    %v502 = vmul.f32 %v373, 0.2
    %v503 = vmul.f32 %v375, 0.2
    %v504 = vmul.f32 %v414, 0.2
    %v505 = vmul.f32 %v416, 0.2
    %v506 = vmul.f32 %v455, 0.2
    %v507 = vmul.f32 %v457, 0.2
    %v508 = vmul.f32 %v496, 0.2
    %v509 = vmul.f32 %v498, 0.2
    %v510 = vmax.f32 %v373, %v502
    %v511 = vmax.f32 %v375, %v503
    %v512 = vmax.f32 %v414, %v504
    %v513 = vmax.f32 %v416, %v505
    %v514 = vmax.f32 %v455, %v506
    %v515 = vmax.f32 %v457, %v507
    %v516 = vmax.f32 %v496, %v508
    %v517 = vmax.f32 %v498, %v509
    %v518 = vpack.c.bf16 %v510, %v510
    %v519 = vpack.c.bf16 %v511, %v511
    %v520 = vpack.c.bf16 %v512, %v512
    %v521 = vpack.c.bf16 %v513, %v513
    %v522 = vpack.c.bf16 %v514, %v514
    %v523 = vpack.c.bf16 %v515, %v515
    %v524 = vpack.c.bf16 %v516, %v516
    %v525 = vpack.c.bf16 %v517, %v517
    %v526 = vld [vmem:[#allocation8] sm:$0xff]
    %v527 = vld [vmem:[#allocation8 + $0x8] sm:$0xff]
    %v528 = vld [vmem:[#allocation8 + $0x10] sm:$0xff]
    %v529 = vld [vmem:[#allocation8 + $0x18] sm:$0xff]
    %v530 = vld [vmem:[#allocation8 + $0x20] sm:$0xff]
    %v531 = vld [vmem:[#allocation8 + $0x28] sm:$0xff]
    %v532 = vld [vmem:[#allocation8 + $0x30] sm:$0xff]
    %v533 = vld [vmem:[#allocation8 + $0x38] sm:$0xff]
    %v534 = vld [vmem:[#allocation8 + $0x40] sm:$0xff]
    %v535 = vld [vmem:[#allocation8 + $0x48] sm:$0xff]
    %v536 = vld [vmem:[#allocation8 + $0x50] sm:$0xff]
    %v537 = vld [vmem:[#allocation8 + $0x58] sm:$0xff]
    %v538 = vld [vmem:[#allocation8 + $0x60] sm:$0xff]
    %v539 = vld [vmem:[#allocation8 + $0x68] sm:$0xff]
    %v540 = vld [vmem:[#allocation8 + $0x70] sm:$0xff]
    %v541 = vld [vmem:[#allocation8 + $0x78] sm:$0xff]
    %v542 = vld [vmem:[#allocation8 + $0x80] sm:$0xff]
    %v543 = vld [vmem:[#allocation8 + $0x88] sm:$0xff]
    %v544 = vld [vmem:[#allocation8 + $0x90] sm:$0xff]
    %v545 = vld [vmem:[#allocation8 + $0x98] sm:$0xff]
    %v546 = vld [vmem:[#allocation8 + $0xa0] sm:$0xff]
    %v547 = vld [vmem:[#allocation8 + $0xa8] sm:$0xff]
    %v548 = vld [vmem:[#allocation8 + $0xb0] sm:$0xff]
    %v549 = vld [vmem:[#allocation8 + $0xb8] sm:$0xff]
    %v550 = vld [vmem:[#allocation8 + $0xc0] sm:$0xff]
    %v551 = vld [vmem:[#allocation8 + $0xc8] sm:$0xff]
    %v552 = vld [vmem:[#allocation8 + $0xd0] sm:$0xff]
    %v553 = vld [vmem:[#allocation8 + $0xd8] sm:$0xff]
    %v554 = vld [vmem:[#allocation8 + $0xe0] sm:$0xff]
    %v555 = vld [vmem:[#allocation8 + $0xe8] sm:$0xff]
    %v556 = vld [vmem:[#allocation8 + $0xf0] sm:$0xff]
    %v557 = vld [vmem:[#allocation8 + $0xf8] sm:$0xff]
    %v558 = vld [vmem:[#allocation8 + $0x100] sm:$0xff]
    %v559 = vld [vmem:[#allocation8 + $0x108] sm:$0xff]
    %v560 = vld [vmem:[#allocation8 + $0x110] sm:$0xff]
    %v561 = vld [vmem:[#allocation8 + $0x118] sm:$0xff]
    %v562 = vld [vmem:[#allocation8 + $0x120] sm:$0xff]
    %v563 = vld [vmem:[#allocation8 + $0x128] sm:$0xff]
    %v564 = vld [vmem:[#allocation8 + $0x130] sm:$0xff]
    %v565 = vld [vmem:[#allocation8 + $0x138] sm:$0xff]
    %v566 = vld [vmem:[#allocation8 + $0x140] sm:$0xff]
    %v567 = vld [vmem:[#allocation8 + $0x148] sm:$0xff]
    %v568 = vld [vmem:[#allocation8 + $0x150] sm:$0xff]
    %v569 = vld [vmem:[#allocation8 + $0x158] sm:$0xff]
    %v570 = vld [vmem:[#allocation8 + $0x160] sm:$0xff]
    %v571 = vld [vmem:[#allocation8 + $0x168] sm:$0xff]
    %v572 = vld [vmem:[#allocation8 + $0x170] sm:$0xff]
    %v573 = vld [vmem:[#allocation8 + $0x178] sm:$0xff]
    %v574 = vld [vmem:[#allocation8 + $0x180] sm:$0xff]
    %v575 = vld [vmem:[#allocation8 + $0x188] sm:$0xff]
    %v576 = vld [vmem:[#allocation8 + $0x190] sm:$0xff]
    %v577 = vld [vmem:[#allocation8 + $0x198] sm:$0xff]
    %v578 = vld [vmem:[#allocation8 + $0x1a0] sm:$0xff]
    %v579 = vld [vmem:[#allocation8 + $0x1a8] sm:$0xff]
    %v580 = vld [vmem:[#allocation8 + $0x1b0] sm:$0xff]
    %v581 = vld [vmem:[#allocation8 + $0x1b8] sm:$0xff]
    %v582 = vld [vmem:[#allocation8 + $0x1c0] sm:$0xff]
    %v583 = vld [vmem:[#allocation8 + $0x1c8] sm:$0xff]
    %v584 = vld [vmem:[#allocation8 + $0x1d0] sm:$0xff]
    %v585 = vld [vmem:[#allocation8 + $0x1d8] sm:$0xff]
    %v586 = vld [vmem:[#allocation8 + $0x1e0] sm:$0xff]
    %v587 = vld [vmem:[#allocation8 + $0x1e8] sm:$0xff]
    %v588 = vld [vmem:[#allocation8 + $0x1f0] sm:$0xff]
    %v589 = vld [vmem:[#allocation8 + $0x1f8] sm:$0xff]
    %v590 = vld [vmem:[#allocation8 + $0x200] sm:$0xff]
    %v591 = vld [vmem:[#allocation8 + $0x208] sm:$0xff]
    %v592 = vld [vmem:[#allocation8 + $0x210] sm:$0xff]
    %v593 = vld [vmem:[#allocation8 + $0x218] sm:$0xff]
    %v594 = vld [vmem:[#allocation8 + $0x220] sm:$0xff]
    %v595 = vld [vmem:[#allocation8 + $0x228] sm:$0xff]
    %v596 = vld [vmem:[#allocation8 + $0x230] sm:$0xff]
    %v597 = vld [vmem:[#allocation8 + $0x238] sm:$0xff]
    %v598 = vld [vmem:[#allocation8 + $0x240] sm:$0xff]
    %v599 = vld [vmem:[#allocation8 + $0x248] sm:$0xff]
    %v600 = vld [vmem:[#allocation8 + $0x250] sm:$0xff]
    %v601 = vld [vmem:[#allocation8 + $0x258] sm:$0xff]
    %v602 = vld [vmem:[#allocation8 + $0x260] sm:$0xff]
    %v603 = vld [vmem:[#allocation8 + $0x268] sm:$0xff]
    %v604 = vld [vmem:[#allocation8 + $0x270] sm:$0xff]
    %v605 = vld [vmem:[#allocation8 + $0x278] sm:$0xff]
    %v606 = vld [vmem:[#allocation8 + $0x280] sm:$0xff]
    %v607 = vld [vmem:[#allocation8 + $0x288] sm:$0xff]
    %v608 = vld [vmem:[#allocation8 + $0x290] sm:$0xff]
    %v609 = vld [vmem:[#allocation8 + $0x298] sm:$0xff]
    %v610 = vld [vmem:[#allocation8 + $0x2a0] sm:$0xff]
    %v611 = vld [vmem:[#allocation8 + $0x2a8] sm:$0xff]
    %v612 = vld [vmem:[#allocation8 + $0x2b0] sm:$0xff]
    %v613 = vld [vmem:[#allocation8 + $0x2b8] sm:$0xff]
    %v614 = vld [vmem:[#allocation8 + $0x2c0] sm:$0xff]
    %v615 = vld [vmem:[#allocation8 + $0x2c8] sm:$0xff]
    %v616 = vld [vmem:[#allocation8 + $0x2d0] sm:$0xff]
    %v617 = vld [vmem:[#allocation8 + $0x2d8] sm:$0xff]
    %v618 = vld [vmem:[#allocation8 + $0x2e0] sm:$0xff]
    %v619 = vld [vmem:[#allocation8 + $0x2e8] sm:$0xff]
    %v620 = vld [vmem:[#allocation8 + $0x2f0] sm:$0xff]
    %v621 = vld [vmem:[#allocation8 + $0x2f8] sm:$0xff]
    %v622 = vld [vmem:[#allocation8 + $0x300] sm:$0xff]
    %v623 = vld [vmem:[#allocation8 + $0x308] sm:$0xff]
    %v624 = vld [vmem:[#allocation8 + $0x310] sm:$0xff]
    %v625 = vld [vmem:[#allocation8 + $0x318] sm:$0xff]
    %v626 = vld [vmem:[#allocation8 + $0x320] sm:$0xff]
    %v627 = vld [vmem:[#allocation8 + $0x328] sm:$0xff]
    %v628 = vld [vmem:[#allocation8 + $0x330] sm:$0xff]
    %v629 = vld [vmem:[#allocation8 + $0x338] sm:$0xff]
    %v630 = vld [vmem:[#allocation8 + $0x340] sm:$0xff]
    %v631 = vld [vmem:[#allocation8 + $0x348] sm:$0xff]
    %v632 = vld [vmem:[#allocation8 + $0x350] sm:$0xff]
    %v633 = vld [vmem:[#allocation8 + $0x358] sm:$0xff]
    %v634 = vld [vmem:[#allocation8 + $0x360] sm:$0xff]
    %v635 = vld [vmem:[#allocation8 + $0x368] sm:$0xff]
    %v636 = vld [vmem:[#allocation8 + $0x370] sm:$0xff]
    %v637 = vld [vmem:[#allocation8 + $0x378] sm:$0xff]
    %v638 = vld [vmem:[#allocation8 + $0x380] sm:$0xff]
    %v639 = vld [vmem:[#allocation8 + $0x388] sm:$0xff]
    %v640 = vld [vmem:[#allocation8 + $0x390] sm:$0xff]
    %v641 = vld [vmem:[#allocation8 + $0x398] sm:$0xff]
    %v642 = vld [vmem:[#allocation8 + $0x3a0] sm:$0xff]
    %v643 = vld [vmem:[#allocation8 + $0x3a8] sm:$0xff]
    %v644 = vld [vmem:[#allocation8 + $0x3b0] sm:$0xff]
    %v645 = vld [vmem:[#allocation8 + $0x3b8] sm:$0xff]
    %v646 = vld [vmem:[#allocation8 + $0x3c0] sm:$0xff]
    %v647 = vld [vmem:[#allocation8 + $0x3c8] sm:$0xff]
    %v648 = vld [vmem:[#allocation8 + $0x3d0] sm:$0xff]
    %v649 = vld [vmem:[#allocation8 + $0x3d8] sm:$0xff]
    %v650 = vld [vmem:[#allocation8 + $0x3e0] sm:$0xff]
    %v651 = vld [vmem:[#allocation8 + $0x3e8] sm:$0xff]
    %v652 = vld [vmem:[#allocation8 + $0x3f0] sm:$0xff]
    %v653 = vld [vmem:[#allocation8 + $0x3f8] sm:$0xff]
    %v654 = vld [vmem:[#allocation8 + $0x400] sm:$0xff]
    %v655 = vld [vmem:[#allocation8 + $0x408] sm:$0xff]
    %v656 = vld [vmem:[#allocation8 + $0x410] sm:$0xff]
    %v657 = vld [vmem:[#allocation8 + $0x418] sm:$0xff]
    %v658 = vld [vmem:[#allocation8 + $0x420] sm:$0xff]
    %v659 = vld [vmem:[#allocation8 + $0x428] sm:$0xff]
    %v660 = vld [vmem:[#allocation8 + $0x430] sm:$0xff]
    %v661 = vld [vmem:[#allocation8 + $0x438] sm:$0xff]
    %v662 = vld [vmem:[#allocation8 + $0x440] sm:$0xff]
    %v663 = vld [vmem:[#allocation8 + $0x448] sm:$0xff]
    %v664 = vld [vmem:[#allocation8 + $0x450] sm:$0xff]
    %v665 = vld [vmem:[#allocation8 + $0x458] sm:$0xff]
    %v666 = vld [vmem:[#allocation8 + $0x460] sm:$0xff]
    %v667 = vld [vmem:[#allocation8 + $0x468] sm:$0xff]
    %v668 = vld [vmem:[#allocation8 + $0x470] sm:$0xff]
    %v669 = vld [vmem:[#allocation8 + $0x478] sm:$0xff]
    %v670 = vld [vmem:[#allocation8 + $0x480] sm:$0xff]
    %v671 = vld [vmem:[#allocation8 + $0x488] sm:$0xff]
    %v672 = vld [vmem:[#allocation8 + $0x490] sm:$0xff]
    %v673 = vld [vmem:[#allocation8 + $0x498] sm:$0xff]
    %v674 = vld [vmem:[#allocation8 + $0x4a0] sm:$0xff]
    %v675 = vld [vmem:[#allocation8 + $0x4a8] sm:$0xff]
    %v676 = vld [vmem:[#allocation8 + $0x4b0] sm:$0xff]
    %v677 = vld [vmem:[#allocation8 + $0x4b8] sm:$0xff]
    %v678 = vld [vmem:[#allocation8 + $0x4c0] sm:$0xff]
    %v679 = vld [vmem:[#allocation8 + $0x4c8] sm:$0xff]
    %v680 = vld [vmem:[#allocation8 + $0x4d0] sm:$0xff]
    %v681 = vld [vmem:[#allocation8 + $0x4d8] sm:$0xff]
    %v682 = vld [vmem:[#allocation8 + $0x4e0] sm:$0xff]
    %v683 = vld [vmem:[#allocation8 + $0x4e8] sm:$0xff]
    %v684 = vld [vmem:[#allocation8 + $0x4f0] sm:$0xff]
    %v685 = vld [vmem:[#allocation8 + $0x4f8] sm:$0xff]
    %v686 = vld [vmem:[#allocation8 + $0x500] sm:$0xff]
    %v687 = vld [vmem:[#allocation8 + $0x508] sm:$0xff]
    %v688 = vld [vmem:[#allocation8 + $0x510] sm:$0xff]
    %v689 = vld [vmem:[#allocation8 + $0x518] sm:$0xff]
    %v690 = vld [vmem:[#allocation8 + $0x520] sm:$0xff]
    %v691 = vld [vmem:[#allocation8 + $0x528] sm:$0xff]
    %v692 = vld [vmem:[#allocation8 + $0x530] sm:$0xff]
    %v693 = vld [vmem:[#allocation8 + $0x538] sm:$0xff]
    %v694 = vld [vmem:[#allocation8 + $0x540] sm:$0xff]
    %v695 = vld [vmem:[#allocation8 + $0x548] sm:$0xff]
    %v696 = vld [vmem:[#allocation8 + $0x550] sm:$0xff]
    %v697 = vld [vmem:[#allocation8 + $0x558] sm:$0xff]
    %v698 = vld [vmem:[#allocation8 + $0x560] sm:$0xff]
    %v699 = vld [vmem:[#allocation8 + $0x568] sm:$0xff]
    %v700 = vld [vmem:[#allocation8 + $0x570] sm:$0xff]
    %v701 = vld [vmem:[#allocation8 + $0x578] sm:$0xff]
    %v702 = vld [vmem:[#allocation8 + $0x580] sm:$0xff]
    %v703 = vld [vmem:[#allocation8 + $0x588] sm:$0xff]
    %v704 = vld [vmem:[#allocation8 + $0x590] sm:$0xff]
    %v705 = vld [vmem:[#allocation8 + $0x598] sm:$0xff]
    %v706 = vld [vmem:[#allocation8 + $0x5a0] sm:$0xff]
    %v707 = vld [vmem:[#allocation8 + $0x5a8] sm:$0xff]
    %v708 = vld [vmem:[#allocation8 + $0x5b0] sm:$0xff]
    %v709 = vld [vmem:[#allocation8 + $0x5b8] sm:$0xff]
    %v710 = vld [vmem:[#allocation8 + $0x5c0] sm:$0xff]
    %v711 = vld [vmem:[#allocation8 + $0x5c8] sm:$0xff]
    %v712 = vld [vmem:[#allocation8 + $0x5d0] sm:$0xff]
    %v713 = vld [vmem:[#allocation8 + $0x5d8] sm:$0xff]
    %v714 = vld [vmem:[#allocation8 + $0x5e0] sm:$0xff]
    %v715 = vld [vmem:[#allocation8 + $0x5e8] sm:$0xff]
    %v716 = vld [vmem:[#allocation8 + $0x5f0] sm:$0xff]
    %v717 = vld [vmem:[#allocation8 + $0x5f8] sm:$0xff]
    %v718 = vld [vmem:[#allocation8 + $0x600] sm:$0xff]
    %v719 = vld [vmem:[#allocation8 + $0x608] sm:$0xff]
    %v720 = vld [vmem:[#allocation8 + $0x610] sm:$0xff]
    %v721 = vld [vmem:[#allocation8 + $0x618] sm:$0xff]
    %v722 = vld [vmem:[#allocation8 + $0x620] sm:$0xff]
    %v723 = vld [vmem:[#allocation8 + $0x628] sm:$0xff]
    %v724 = vld [vmem:[#allocation8 + $0x630] sm:$0xff]
    %v725 = vld [vmem:[#allocation8 + $0x638] sm:$0xff]
    %v726 = vld [vmem:[#allocation8 + $0x640] sm:$0xff]
    %v727 = vld [vmem:[#allocation8 + $0x648] sm:$0xff]
    %v728 = vld [vmem:[#allocation8 + $0x650] sm:$0xff]
    %v729 = vld [vmem:[#allocation8 + $0x658] sm:$0xff]
    %v730 = vld [vmem:[#allocation8 + $0x660] sm:$0xff]
    %v731 = vld [vmem:[#allocation8 + $0x668] sm:$0xff]
    %v732 = vld [vmem:[#allocation8 + $0x670] sm:$0xff]
    %v733 = vld [vmem:[#allocation8 + $0x678] sm:$0xff]
    %v734 = vld [vmem:[#allocation8 + $0x680] sm:$0xff]
    %v735 = vld [vmem:[#allocation8 + $0x688] sm:$0xff]
    %v736 = vld [vmem:[#allocation8 + $0x690] sm:$0xff]
    %v737 = vld [vmem:[#allocation8 + $0x698] sm:$0xff]
    %v738 = vld [vmem:[#allocation8 + $0x6a0] sm:$0xff]
    %v739 = vld [vmem:[#allocation8 + $0x6a8] sm:$0xff]
    %v740 = vld [vmem:[#allocation8 + $0x6b0] sm:$0xff]
    %v741 = vld [vmem:[#allocation8 + $0x6b8] sm:$0xff]
    %v742 = vld [vmem:[#allocation8 + $0x6c0] sm:$0xff]
    %v743 = vld [vmem:[#allocation8 + $0x6c8] sm:$0xff]
    %v744 = vld [vmem:[#allocation8 + $0x6d0] sm:$0xff]
    %v745 = vld [vmem:[#allocation8 + $0x6d8] sm:$0xff]
    %v746 = vld [vmem:[#allocation8 + $0x6e0] sm:$0xff]
    %v747 = vld [vmem:[#allocation8 + $0x6e8] sm:$0xff]
    %v748 = vld [vmem:[#allocation8 + $0x6f0] sm:$0xff]
    %v749 = vld [vmem:[#allocation8 + $0x6f8] sm:$0xff]
    %v750 = vld [vmem:[#allocation8 + $0x700] sm:$0xff]
    %v751 = vld [vmem:[#allocation8 + $0x708] sm:$0xff]
    %v752 = vld [vmem:[#allocation8 + $0x710] sm:$0xff]
    %v753 = vld [vmem:[#allocation8 + $0x718] sm:$0xff]
    %v754 = vld [vmem:[#allocation8 + $0x720] sm:$0xff]
    %v755 = vld [vmem:[#allocation8 + $0x728] sm:$0xff]
    %v756 = vld [vmem:[#allocation8 + $0x730] sm:$0xff]
    %v757 = vld [vmem:[#allocation8 + $0x738] sm:$0xff]
    %v758 = vld [vmem:[#allocation8 + $0x740] sm:$0xff]
    %v759 = vld [vmem:[#allocation8 + $0x748] sm:$0xff]
    %v760 = vld [vmem:[#allocation8 + $0x750] sm:$0xff]
    %v761 = vld [vmem:[#allocation8 + $0x758] sm:$0xff]
    %v762 = vld [vmem:[#allocation8 + $0x760] sm:$0xff]
    %v763 = vld [vmem:[#allocation8 + $0x768] sm:$0xff]
    %v764 = vld [vmem:[#allocation8 + $0x770] sm:$0xff]
    %v765 = vld [vmem:[#allocation8 + $0x778] sm:$0xff]
    %v766 = vld [vmem:[#allocation8 + $0x780] sm:$0xff]
    %v767 = vld [vmem:[#allocation8 + $0x788] sm:$0xff]
    %v768 = vld [vmem:[#allocation8 + $0x790] sm:$0xff]
    %v769 = vld [vmem:[#allocation8 + $0x798] sm:$0xff]
    %v770 = vld [vmem:[#allocation8 + $0x7a0] sm:$0xff]
    %v771 = vld [vmem:[#allocation8 + $0x7a8] sm:$0xff]
    %v772 = vld [vmem:[#allocation8 + $0x7b0] sm:$0xff]
    %v773 = vld [vmem:[#allocation8 + $0x7b8] sm:$0xff]
    %v774 = vld [vmem:[#allocation8 + $0x7c0] sm:$0xff]
    %v775 = vld [vmem:[#allocation8 + $0x7c8] sm:$0xff]
    %v776 = vld [vmem:[#allocation8 + $0x7d0] sm:$0xff]
    %v777 = vld [vmem:[#allocation8 + $0x7d8] sm:$0xff]
    %v778 = vld [vmem:[#allocation8 + $0x7e0] sm:$0xff]
    %v779 = vld [vmem:[#allocation8 + $0x7e8] sm:$0xff]
    %v780 = vld [vmem:[#allocation8 + $0x7f0] sm:$0xff]
    %v781 = vld [vmem:[#allocation8 + $0x7f8] sm:$0xff]
    %v782 = vld [vmem:[%s4] sm:$0xf]
    %v784 = vlaneseq
    %v785 = vshrl.u32 %v784, 7
    %v786 = vsub.s32 0, %v785
    %v787 = vrot.slane %v782, %v786
    %v788 = vlaneseq
    %v789 = vshrl.u32 %v788, 7
    %v790 = vsub.s32 1, %v789
    %v791 = vrot.slane %v782, %v790
    %v792 = vlaneseq
    %v793 = vshrl.u32 %v792, 7
    %v794 = vsub.s32 2, %v793
    %v795 = vrot.slane %v782, %v794
    %v796 = vlaneseq
    %v797 = vshrl.u32 %v796, 7
    %v798 = vsub.s32 3, %v797
    %v799 = vrot.slane %v782, %v798
    %v1060 = vunpack.c.l.b16 %v526
    %v1061 = vunpack.c.h.b16 %v526
    %v1062 = vunpack.c.l.b16 %v527
    %v1063 = vunpack.c.h.b16 %v527
    %v1064 = vunpack.c.l.b16 %v528
    %v1065 = vunpack.c.h.b16 %v528
    %v1066 = vunpack.c.l.b16 %v529
    %v1067 = vunpack.c.h.b16 %v529
    %v1068 = vunpack.c.l.b16 %v530
    %v1069 = vunpack.c.h.b16 %v530
    %v1070 = vunpack.c.l.b16 %v531
    %v1071 = vunpack.c.h.b16 %v531
    %v1072 = vunpack.c.l.b16 %v532
    %v1073 = vunpack.c.h.b16 %v532
    %v1074 = vunpack.c.l.b16 %v533
    %v1075 = vunpack.c.h.b16 %v533
    %v1076 = vunpack.c.l.b16 %v534
    %v1077 = vunpack.c.h.b16 %v534
    %v1078 = vunpack.c.l.b16 %v535
    %v1079 = vunpack.c.h.b16 %v535
    %v1080 = vunpack.c.l.b16 %v536
    %v1081 = vunpack.c.h.b16 %v536
    %v1082 = vunpack.c.l.b16 %v537
    %v1083 = vunpack.c.h.b16 %v537
    %v1084 = vunpack.c.l.b16 %v538
    %v1085 = vunpack.c.h.b16 %v538
    %v1086 = vunpack.c.l.b16 %v539
    %v1087 = vunpack.c.h.b16 %v539
    %v1088 = vunpack.c.l.b16 %v540
    %v1089 = vunpack.c.h.b16 %v540
    %v1090 = vunpack.c.l.b16 %v541
    %v1091 = vunpack.c.h.b16 %v541
    %v1092 = vunpack.c.l.b16 %v542
    %v1093 = vunpack.c.h.b16 %v542
    %v1094 = vunpack.c.l.b16 %v543
    %v1095 = vunpack.c.h.b16 %v543
    %v1096 = vunpack.c.l.b16 %v544
    %v1097 = vunpack.c.h.b16 %v544
    %v1098 = vunpack.c.l.b16 %v545
    %v1099 = vunpack.c.h.b16 %v545
    %v1100 = vunpack.c.l.b16 %v546
    %v1101 = vunpack.c.h.b16 %v546
    %v1102 = vunpack.c.l.b16 %v547
    %v1103 = vunpack.c.h.b16 %v547
    %v1104 = vunpack.c.l.b16 %v548
    %v1105 = vunpack.c.h.b16 %v548
    %v1106 = vunpack.c.l.b16 %v549
    %v1107 = vunpack.c.h.b16 %v549
    %v1108 = vunpack.c.l.b16 %v550
    %v1109 = vunpack.c.h.b16 %v550
    %v1110 = vunpack.c.l.b16 %v551
    %v1111 = vunpack.c.h.b16 %v551
    %v1112 = vunpack.c.l.b16 %v552
    %v1113 = vunpack.c.h.b16 %v552
    %v1114 = vunpack.c.l.b16 %v553
    %v1115 = vunpack.c.h.b16 %v553
    %v1116 = vunpack.c.l.b16 %v554
    %v1117 = vunpack.c.h.b16 %v554
    %v1118 = vunpack.c.l.b16 %v555
    %v1119 = vunpack.c.h.b16 %v555
    %v1120 = vunpack.c.l.b16 %v556
    %v1121 = vunpack.c.h.b16 %v556
    %v1122 = vunpack.c.l.b16 %v557
    %v1123 = vunpack.c.h.b16 %v557
    %v1124 = vunpack.c.l.b16 %v558
    %v1125 = vunpack.c.h.b16 %v558
    %v1126 = vunpack.c.l.b16 %v559
    %v1127 = vunpack.c.h.b16 %v559
    %v1128 = vunpack.c.l.b16 %v560
    %v1129 = vunpack.c.h.b16 %v560
    %v1130 = vunpack.c.l.b16 %v561
    %v1131 = vunpack.c.h.b16 %v561
    %v1132 = vunpack.c.l.b16 %v562
    %v1133 = vunpack.c.h.b16 %v562
    %v1134 = vunpack.c.l.b16 %v563
    %v1135 = vunpack.c.h.b16 %v563
    %v1136 = vunpack.c.l.b16 %v564
    %v1137 = vunpack.c.h.b16 %v564
    %v1138 = vunpack.c.l.b16 %v565
    %v1139 = vunpack.c.h.b16 %v565
    %v1140 = vunpack.c.l.b16 %v566
    %v1141 = vunpack.c.h.b16 %v566
    %v1142 = vunpack.c.l.b16 %v567
    %v1143 = vunpack.c.h.b16 %v567
    %v1144 = vunpack.c.l.b16 %v568
    %v1145 = vunpack.c.h.b16 %v568
    %v1146 = vunpack.c.l.b16 %v569
    %v1147 = vunpack.c.h.b16 %v569
    %v1148 = vunpack.c.l.b16 %v570
    %v1149 = vunpack.c.h.b16 %v570
    %v1150 = vunpack.c.l.b16 %v571
    %v1151 = vunpack.c.h.b16 %v571
    %v1152 = vunpack.c.l.b16 %v572
    %v1153 = vunpack.c.h.b16 %v572
    %v1154 = vunpack.c.l.b16 %v573
    %v1155 = vunpack.c.h.b16 %v573
    %v1156 = vunpack.c.l.b16 %v574
    %v1157 = vunpack.c.h.b16 %v574
    %v1158 = vunpack.c.l.b16 %v575
    %v1159 = vunpack.c.h.b16 %v575
    %v1160 = vunpack.c.l.b16 %v576
    %v1161 = vunpack.c.h.b16 %v576
    %v1162 = vunpack.c.l.b16 %v577
    %v1163 = vunpack.c.h.b16 %v577
    %v1164 = vunpack.c.l.b16 %v578
    %v1165 = vunpack.c.h.b16 %v578
    %v1166 = vunpack.c.l.b16 %v579
    %v1167 = vunpack.c.h.b16 %v579
    %v1168 = vunpack.c.l.b16 %v580
    %v1169 = vunpack.c.h.b16 %v580
    %v1170 = vunpack.c.l.b16 %v581
    %v1171 = vunpack.c.h.b16 %v581
    %v1172 = vunpack.c.l.b16 %v582
    %v1173 = vunpack.c.h.b16 %v582
    %v1174 = vunpack.c.l.b16 %v583
    %v1175 = vunpack.c.h.b16 %v583
    %v1176 = vunpack.c.l.b16 %v584
    %v1177 = vunpack.c.h.b16 %v584
    %v1178 = vunpack.c.l.b16 %v585
    %v1179 = vunpack.c.h.b16 %v585
    %v1180 = vunpack.c.l.b16 %v586
    %v1181 = vunpack.c.h.b16 %v586
    %v1182 = vunpack.c.l.b16 %v587
    %v1183 = vunpack.c.h.b16 %v587
    %v1184 = vunpack.c.l.b16 %v588
    %v1185 = vunpack.c.h.b16 %v588
    %v1186 = vunpack.c.l.b16 %v589
    %v1187 = vunpack.c.h.b16 %v589
    %v1188 = vunpack.c.l.b16 %v590
    %v1189 = vunpack.c.h.b16 %v590
    %v1190 = vunpack.c.l.b16 %v591
    %v1191 = vunpack.c.h.b16 %v591
    %v1192 = vunpack.c.l.b16 %v592
    %v1193 = vunpack.c.h.b16 %v592
    %v1194 = vunpack.c.l.b16 %v593
    %v1195 = vunpack.c.h.b16 %v593
    %v1196 = vunpack.c.l.b16 %v594
    %v1197 = vunpack.c.h.b16 %v594
    %v1198 = vunpack.c.l.b16 %v595
    %v1199 = vunpack.c.h.b16 %v595
    %v1200 = vunpack.c.l.b16 %v596
    %v1201 = vunpack.c.h.b16 %v596
    %v1202 = vunpack.c.l.b16 %v597
    %v1203 = vunpack.c.h.b16 %v597
    %v1204 = vunpack.c.l.b16 %v598
    %v1205 = vunpack.c.h.b16 %v598
    %v1206 = vunpack.c.l.b16 %v599
    %v1207 = vunpack.c.h.b16 %v599
    %v1208 = vunpack.c.l.b16 %v600
    %v1209 = vunpack.c.h.b16 %v600
    %v1210 = vunpack.c.l.b16 %v601
    %v1211 = vunpack.c.h.b16 %v601
    %v1212 = vunpack.c.l.b16 %v602
    %v1213 = vunpack.c.h.b16 %v602
    %v1214 = vunpack.c.l.b16 %v603
    %v1215 = vunpack.c.h.b16 %v603
    %v1216 = vunpack.c.l.b16 %v604
    %v1217 = vunpack.c.h.b16 %v604
    %v1218 = vunpack.c.l.b16 %v605
    %v1219 = vunpack.c.h.b16 %v605
    %v1220 = vunpack.c.l.b16 %v606
    %v1221 = vunpack.c.h.b16 %v606
    %v1222 = vunpack.c.l.b16 %v607
    %v1223 = vunpack.c.h.b16 %v607
    %v1224 = vunpack.c.l.b16 %v608
    %v1225 = vunpack.c.h.b16 %v608
    %v1226 = vunpack.c.l.b16 %v609
    %v1227 = vunpack.c.h.b16 %v609
    %v1228 = vunpack.c.l.b16 %v610
    %v1229 = vunpack.c.h.b16 %v610
    %v1230 = vunpack.c.l.b16 %v611
    %v1231 = vunpack.c.h.b16 %v611
    %v1232 = vunpack.c.l.b16 %v612
    %v1233 = vunpack.c.h.b16 %v612
    %v1234 = vunpack.c.l.b16 %v613
    %v1235 = vunpack.c.h.b16 %v613
    %v1236 = vunpack.c.l.b16 %v614
    %v1237 = vunpack.c.h.b16 %v614
    %v1238 = vunpack.c.l.b16 %v615
    %v1239 = vunpack.c.h.b16 %v615
    %v1240 = vunpack.c.l.b16 %v616
    %v1241 = vunpack.c.h.b16 %v616
    %v1242 = vunpack.c.l.b16 %v617
    %v1243 = vunpack.c.h.b16 %v617
    %v1244 = vunpack.c.l.b16 %v618
    %v1245 = vunpack.c.h.b16 %v618
    %v1246 = vunpack.c.l.b16 %v619
    %v1247 = vunpack.c.h.b16 %v619
    %v1248 = vunpack.c.l.b16 %v620
    %v1249 = vunpack.c.h.b16 %v620
    %v1250 = vunpack.c.l.b16 %v621
    %v1251 = vunpack.c.h.b16 %v621
    %v1252 = vunpack.c.l.b16 %v622
    %v1253 = vunpack.c.h.b16 %v622
    %v1254 = vunpack.c.l.b16 %v623
    %v1255 = vunpack.c.h.b16 %v623
    %v1256 = vunpack.c.l.b16 %v624
    %v1257 = vunpack.c.h.b16 %v624
    %v1258 = vunpack.c.l.b16 %v625
    %v1259 = vunpack.c.h.b16 %v625
    %v1260 = vunpack.c.l.b16 %v626
    %v1261 = vunpack.c.h.b16 %v626
    %v1262 = vunpack.c.l.b16 %v627
    %v1263 = vunpack.c.h.b16 %v627
    %v1264 = vunpack.c.l.b16 %v628
    %v1265 = vunpack.c.h.b16 %v628
    %v1266 = vunpack.c.l.b16 %v629
    %v1267 = vunpack.c.h.b16 %v629
    %v1268 = vunpack.c.l.b16 %v630
    %v1269 = vunpack.c.h.b16 %v630
    %v1270 = vunpack.c.l.b16 %v631
    %v1271 = vunpack.c.h.b16 %v631
    %v1272 = vunpack.c.l.b16 %v632
    %v1273 = vunpack.c.h.b16 %v632
    %v1274 = vunpack.c.l.b16 %v633
    %v1275 = vunpack.c.h.b16 %v633
    %v1276 = vunpack.c.l.b16 %v634
    %v1277 = vunpack.c.h.b16 %v634
    %v1278 = vunpack.c.l.b16 %v635
    %v1279 = vunpack.c.h.b16 %v635
    %v1280 = vunpack.c.l.b16 %v636
    %v1281 = vunpack.c.h.b16 %v636
    %v1282 = vunpack.c.l.b16 %v637
    %v1283 = vunpack.c.h.b16 %v637
    %v1284 = vunpack.c.l.b16 %v638
    %v1285 = vunpack.c.h.b16 %v638
    %v1286 = vunpack.c.l.b16 %v639
    %v1287 = vunpack.c.h.b16 %v639
    %v1288 = vunpack.c.l.b16 %v640
    %v1289 = vunpack.c.h.b16 %v640
    %v1290 = vunpack.c.l.b16 %v641
    %v1291 = vunpack.c.h.b16 %v641
    %v1292 = vunpack.c.l.b16 %v642
    %v1293 = vunpack.c.h.b16 %v642
    %v1294 = vunpack.c.l.b16 %v643
    %v1295 = vunpack.c.h.b16 %v643
    %v1296 = vunpack.c.l.b16 %v644
    %v1297 = vunpack.c.h.b16 %v644
    %v1298 = vunpack.c.l.b16 %v645
    %v1299 = vunpack.c.h.b16 %v645
    %v1300 = vunpack.c.l.b16 %v646
    %v1301 = vunpack.c.h.b16 %v646
    %v1302 = vunpack.c.l.b16 %v647
    %v1303 = vunpack.c.h.b16 %v647
    %v1304 = vunpack.c.l.b16 %v648
    %v1305 = vunpack.c.h.b16 %v648
    %v1306 = vunpack.c.l.b16 %v649
    %v1307 = vunpack.c.h.b16 %v649
    %v1308 = vunpack.c.l.b16 %v650
    %v1309 = vunpack.c.h.b16 %v650
    %v1310 = vunpack.c.l.b16 %v651
    %v1311 = vunpack.c.h.b16 %v651
    %v1312 = vunpack.c.l.b16 %v652
    %v1313 = vunpack.c.h.b16 %v652
    %v1314 = vunpack.c.l.b16 %v653
    %v1315 = vunpack.c.h.b16 %v653
    %v1316 = vunpack.c.l.b16 %v654
    %v1317 = vunpack.c.h.b16 %v654
    %v1318 = vunpack.c.l.b16 %v655
    %v1319 = vunpack.c.h.b16 %v655
    %v1320 = vunpack.c.l.b16 %v656
    %v1321 = vunpack.c.h.b16 %v656
    %v1322 = vunpack.c.l.b16 %v657
    %v1323 = vunpack.c.h.b16 %v657
    %v1324 = vunpack.c.l.b16 %v658
    %v1325 = vunpack.c.h.b16 %v658
    %v1326 = vunpack.c.l.b16 %v659
    %v1327 = vunpack.c.h.b16 %v659
    %v1328 = vunpack.c.l.b16 %v660
    %v1329 = vunpack.c.h.b16 %v660
    %v1330 = vunpack.c.l.b16 %v661
    %v1331 = vunpack.c.h.b16 %v661
    %v1332 = vunpack.c.l.b16 %v662
    %v1333 = vunpack.c.h.b16 %v662
    %v1334 = vunpack.c.l.b16 %v663
    %v1335 = vunpack.c.h.b16 %v663
    %v1336 = vunpack.c.l.b16 %v664
    %v1337 = vunpack.c.h.b16 %v664
    %v1338 = vunpack.c.l.b16 %v665
    %v1339 = vunpack.c.h.b16 %v665
    %v1340 = vunpack.c.l.b16 %v666
    %v1341 = vunpack.c.h.b16 %v666
    %v1342 = vunpack.c.l.b16 %v667
    %v1343 = vunpack.c.h.b16 %v667
    %v1344 = vunpack.c.l.b16 %v668
    %v1345 = vunpack.c.h.b16 %v668
    %v1346 = vunpack.c.l.b16 %v669
    %v1347 = vunpack.c.h.b16 %v669
    %v1348 = vunpack.c.l.b16 %v670
    %v1349 = vunpack.c.h.b16 %v670
    %v1350 = vunpack.c.l.b16 %v671
    %v1351 = vunpack.c.h.b16 %v671
    %v1352 = vunpack.c.l.b16 %v672
    %v1353 = vunpack.c.h.b16 %v672
    %v1354 = vunpack.c.l.b16 %v673
    %v1355 = vunpack.c.h.b16 %v673
    %v1356 = vunpack.c.l.b16 %v674
    %v1357 = vunpack.c.h.b16 %v674
    %v1358 = vunpack.c.l.b16 %v675
    %v1359 = vunpack.c.h.b16 %v675
    %v1360 = vunpack.c.l.b16 %v676
    %v1361 = vunpack.c.h.b16 %v676
    %v1362 = vunpack.c.l.b16 %v677
    %v1363 = vunpack.c.h.b16 %v677
    %v1364 = vunpack.c.l.b16 %v678
    %v1365 = vunpack.c.h.b16 %v678
    %v1366 = vunpack.c.l.b16 %v679
    %v1367 = vunpack.c.h.b16 %v679
    %v1368 = vunpack.c.l.b16 %v680
    %v1369 = vunpack.c.h.b16 %v680
    %v1370 = vunpack.c.l.b16 %v681
    %v1371 = vunpack.c.h.b16 %v681
    %v1372 = vunpack.c.l.b16 %v682
    %v1373 = vunpack.c.h.b16 %v682
    %v1374 = vunpack.c.l.b16 %v683
    %v1375 = vunpack.c.h.b16 %v683
    %v1376 = vunpack.c.l.b16 %v684
    %v1377 = vunpack.c.h.b16 %v684
    %v1378 = vunpack.c.l.b16 %v685
    %v1379 = vunpack.c.h.b16 %v685
    %v1380 = vunpack.c.l.b16 %v686
    %v1381 = vunpack.c.h.b16 %v686
    %v1382 = vunpack.c.l.b16 %v687
    %v1383 = vunpack.c.h.b16 %v687
    %v1384 = vunpack.c.l.b16 %v688
    %v1385 = vunpack.c.h.b16 %v688
    %v1386 = vunpack.c.l.b16 %v689
    %v1387 = vunpack.c.h.b16 %v689
    %v1388 = vunpack.c.l.b16 %v690
    %v1389 = vunpack.c.h.b16 %v690
    %v1390 = vunpack.c.l.b16 %v691
    %v1391 = vunpack.c.h.b16 %v691
    %v1392 = vunpack.c.l.b16 %v692
    %v1393 = vunpack.c.h.b16 %v692
    %v1394 = vunpack.c.l.b16 %v693
    %v1395 = vunpack.c.h.b16 %v693
    %v1396 = vunpack.c.l.b16 %v694
    %v1397 = vunpack.c.h.b16 %v694
    %v1398 = vunpack.c.l.b16 %v695
    %v1399 = vunpack.c.h.b16 %v695
    %v1400 = vunpack.c.l.b16 %v696
    %v1401 = vunpack.c.h.b16 %v696
    %v1402 = vunpack.c.l.b16 %v697
    %v1403 = vunpack.c.h.b16 %v697
    %v1404 = vunpack.c.l.b16 %v698
    %v1405 = vunpack.c.h.b16 %v698
    %v1406 = vunpack.c.l.b16 %v699
    %v1407 = vunpack.c.h.b16 %v699
    %v1408 = vunpack.c.l.b16 %v700
    %v1409 = vunpack.c.h.b16 %v700
    %v1410 = vunpack.c.l.b16 %v701
    %v1411 = vunpack.c.h.b16 %v701
    %v1412 = vunpack.c.l.b16 %v702
    %v1413 = vunpack.c.h.b16 %v702
    %v1414 = vunpack.c.l.b16 %v703
    %v1415 = vunpack.c.h.b16 %v703
    %v1416 = vunpack.c.l.b16 %v704
    %v1417 = vunpack.c.h.b16 %v704
    %v1418 = vunpack.c.l.b16 %v705
    %v1419 = vunpack.c.h.b16 %v705
    %v1420 = vunpack.c.l.b16 %v706
    %v1421 = vunpack.c.h.b16 %v706
    %v1422 = vunpack.c.l.b16 %v707
    %v1423 = vunpack.c.h.b16 %v707
    %v1424 = vunpack.c.l.b16 %v708
    %v1425 = vunpack.c.h.b16 %v708
    %v1426 = vunpack.c.l.b16 %v709
    %v1427 = vunpack.c.h.b16 %v709
    %v1428 = vunpack.c.l.b16 %v710
    %v1429 = vunpack.c.h.b16 %v710
    %v1430 = vunpack.c.l.b16 %v711
    %v1431 = vunpack.c.h.b16 %v711
    %v1432 = vunpack.c.l.b16 %v712
    %v1433 = vunpack.c.h.b16 %v712
    %v1434 = vunpack.c.l.b16 %v713
    %v1435 = vunpack.c.h.b16 %v713
    %v1436 = vunpack.c.l.b16 %v714
    %v1437 = vunpack.c.h.b16 %v714
    %v1438 = vunpack.c.l.b16 %v715
    %v1439 = vunpack.c.h.b16 %v715
    %v1440 = vunpack.c.l.b16 %v716
    %v1441 = vunpack.c.h.b16 %v716
    %v1442 = vunpack.c.l.b16 %v717
    %v1443 = vunpack.c.h.b16 %v717
    %v1444 = vunpack.c.l.b16 %v718
    %v1445 = vunpack.c.h.b16 %v718
    %v1446 = vunpack.c.l.b16 %v719
    %v1447 = vunpack.c.h.b16 %v719
    %v1448 = vunpack.c.l.b16 %v720
    %v1449 = vunpack.c.h.b16 %v720
    %v1450 = vunpack.c.l.b16 %v721
    %v1451 = vunpack.c.h.b16 %v721
    %v1452 = vunpack.c.l.b16 %v722
    %v1453 = vunpack.c.h.b16 %v722
    %v1454 = vunpack.c.l.b16 %v723
    %v1455 = vunpack.c.h.b16 %v723
    %v1456 = vunpack.c.l.b16 %v724
    %v1457 = vunpack.c.h.b16 %v724
    %v1458 = vunpack.c.l.b16 %v725
    %v1459 = vunpack.c.h.b16 %v725
    %v1460 = vunpack.c.l.b16 %v726
    %v1461 = vunpack.c.h.b16 %v726
    %v1462 = vunpack.c.l.b16 %v727
    %v1463 = vunpack.c.h.b16 %v727
    %v1464 = vunpack.c.l.b16 %v728
    %v1465 = vunpack.c.h.b16 %v728
    %v1466 = vunpack.c.l.b16 %v729
    %v1467 = vunpack.c.h.b16 %v729
    %v1468 = vunpack.c.l.b16 %v730
    %v1469 = vunpack.c.h.b16 %v730
    %v1470 = vunpack.c.l.b16 %v731
    %v1471 = vunpack.c.h.b16 %v731
    %v1472 = vunpack.c.l.b16 %v732
    %v1473 = vunpack.c.h.b16 %v732
    %v1474 = vunpack.c.l.b16 %v733
    %v1475 = vunpack.c.h.b16 %v733
    %v1476 = vunpack.c.l.b16 %v734
    %v1477 = vunpack.c.h.b16 %v734
    %v1478 = vunpack.c.l.b16 %v735
    %v1479 = vunpack.c.h.b16 %v735
    %v1480 = vunpack.c.l.b16 %v736
    %v1481 = vunpack.c.h.b16 %v736
    %v1482 = vunpack.c.l.b16 %v737
    %v1483 = vunpack.c.h.b16 %v737
    %v1484 = vunpack.c.l.b16 %v738
    %v1485 = vunpack.c.h.b16 %v738
    %v1486 = vunpack.c.l.b16 %v739
    %v1487 = vunpack.c.h.b16 %v739
    %v1488 = vunpack.c.l.b16 %v740
    %v1489 = vunpack.c.h.b16 %v740
    %v1490 = vunpack.c.l.b16 %v741
    %v1491 = vunpack.c.h.b16 %v741
    %v1492 = vunpack.c.l.b16 %v742
    %v1493 = vunpack.c.h.b16 %v742
    %v1494 = vunpack.c.l.b16 %v743
    %v1495 = vunpack.c.h.b16 %v743
    %v1496 = vunpack.c.l.b16 %v744
    %v1497 = vunpack.c.h.b16 %v744
    %v1498 = vunpack.c.l.b16 %v745
    %v1499 = vunpack.c.h.b16 %v745
    %v1500 = vunpack.c.l.b16 %v746
    %v1501 = vunpack.c.h.b16 %v746
    %v1502 = vunpack.c.l.b16 %v747
    %v1503 = vunpack.c.h.b16 %v747
    %v1504 = vunpack.c.l.b16 %v748
    %v1505 = vunpack.c.h.b16 %v748
    %v1506 = vunpack.c.l.b16 %v749
    %v1507 = vunpack.c.h.b16 %v749
    %v1508 = vunpack.c.l.b16 %v750
    %v1509 = vunpack.c.h.b16 %v750
    %v1510 = vunpack.c.l.b16 %v751
    %v1511 = vunpack.c.h.b16 %v751
    %v1512 = vunpack.c.l.b16 %v752
    %v1513 = vunpack.c.h.b16 %v752
    %v1514 = vunpack.c.l.b16 %v753
    %v1515 = vunpack.c.h.b16 %v753
    %v1516 = vunpack.c.l.b16 %v754
    %v1517 = vunpack.c.h.b16 %v754
    %v1518 = vunpack.c.l.b16 %v755
    %v1519 = vunpack.c.h.b16 %v755
    %v1520 = vunpack.c.l.b16 %v756
    %v1521 = vunpack.c.h.b16 %v756
    %v1522 = vunpack.c.l.b16 %v757
    %v1523 = vunpack.c.h.b16 %v757
    %v1524 = vunpack.c.l.b16 %v758
    %v1525 = vunpack.c.h.b16 %v758
    %v1526 = vunpack.c.l.b16 %v759
    %v1527 = vunpack.c.h.b16 %v759
    %v1528 = vunpack.c.l.b16 %v760
    %v1529 = vunpack.c.h.b16 %v760
    %v1530 = vunpack.c.l.b16 %v761
    %v1531 = vunpack.c.h.b16 %v761
    %v1532 = vunpack.c.l.b16 %v762
    %v1533 = vunpack.c.h.b16 %v762
    %v1534 = vunpack.c.l.b16 %v763
    %v1535 = vunpack.c.h.b16 %v763
    %v1536 = vunpack.c.l.b16 %v764
    %v1537 = vunpack.c.h.b16 %v764
    %v1538 = vunpack.c.l.b16 %v765
    %v1539 = vunpack.c.h.b16 %v765
    %v1540 = vunpack.c.l.b16 %v766
    %v1541 = vunpack.c.h.b16 %v766
    %v1542 = vunpack.c.l.b16 %v767
    %v1543 = vunpack.c.h.b16 %v767
    %v1544 = vunpack.c.l.b16 %v768
    %v1545 = vunpack.c.h.b16 %v768
    %v1546 = vunpack.c.l.b16 %v769
    %v1547 = vunpack.c.h.b16 %v769
    %v1548 = vunpack.c.l.b16 %v770
    %v1549 = vunpack.c.h.b16 %v770
    %v1550 = vunpack.c.l.b16 %v771
    %v1551 = vunpack.c.h.b16 %v771
    %v1552 = vunpack.c.l.b16 %v772
    %v1553 = vunpack.c.h.b16 %v772
    %v1554 = vunpack.c.l.b16 %v773
    %v1555 = vunpack.c.h.b16 %v773
    %v1556 = vunpack.c.l.b16 %v774
    %v1557 = vunpack.c.h.b16 %v774
    %v1558 = vunpack.c.l.b16 %v775
    %v1559 = vunpack.c.h.b16 %v775
    %v1560 = vunpack.c.l.b16 %v776
    %v1561 = vunpack.c.h.b16 %v776
    %v1562 = vunpack.c.l.b16 %v777
    %v1563 = vunpack.c.h.b16 %v777
    %v1564 = vunpack.c.l.b16 %v778
    %v1565 = vunpack.c.h.b16 %v778
    %v1566 = vunpack.c.l.b16 %v779
    %v1567 = vunpack.c.h.b16 %v779
    %v1568 = vunpack.c.l.b16 %v780
    %v1569 = vunpack.c.h.b16 %v780
    %v1570 = vunpack.c.l.b16 %v781
    %v1571 = vunpack.c.h.b16 %v781
    %v1572 = vpack.c.b16 %v1064, %v1060
    %v1573 = vpack.c.b16 %v1065, %v1061
    %v1574 = vpack.c.b16 %v1066, %v1062
    %v1575 = vpack.c.b16 %v1067, %v1063
    %v1576 = vpack.c.b16 %v1072, %v1068
    %v1577 = vpack.c.b16 %v1073, %v1069
    %v1578 = vpack.c.b16 %v1074, %v1070
    %v1579 = vpack.c.b16 %v1075, %v1071
    %v1580 = vpack.c.b16 %v1080, %v1076
    %v1581 = vpack.c.b16 %v1081, %v1077
    %v1582 = vpack.c.b16 %v1082, %v1078
    %v1583 = vpack.c.b16 %v1083, %v1079
    %v1584 = vpack.c.b16 %v1088, %v1084
    %v1585 = vpack.c.b16 %v1089, %v1085
    %v1586 = vpack.c.b16 %v1090, %v1086
    %v1587 = vpack.c.b16 %v1091, %v1087
    %v1588 = vpack.c.b16 %v1096, %v1092
    %v1589 = vpack.c.b16 %v1097, %v1093
    %v1590 = vpack.c.b16 %v1098, %v1094
    %v1591 = vpack.c.b16 %v1099, %v1095
    %v1592 = vpack.c.b16 %v1104, %v1100
    %v1593 = vpack.c.b16 %v1105, %v1101
    %v1594 = vpack.c.b16 %v1106, %v1102
    %v1595 = vpack.c.b16 %v1107, %v1103
    %v1596 = vpack.c.b16 %v1112, %v1108
    %v1597 = vpack.c.b16 %v1113, %v1109
    %v1598 = vpack.c.b16 %v1114, %v1110
    %v1599 = vpack.c.b16 %v1115, %v1111
    %v1600 = vpack.c.b16 %v1120, %v1116
    %v1601 = vpack.c.b16 %v1121, %v1117
    %v1602 = vpack.c.b16 %v1122, %v1118
    %v1603 = vpack.c.b16 %v1123, %v1119
    %v1604 = vpack.c.b16 %v1128, %v1124
    %v1605 = vpack.c.b16 %v1129, %v1125
    %v1606 = vpack.c.b16 %v1130, %v1126
    %v1607 = vpack.c.b16 %v1131, %v1127
    %v1608 = vpack.c.b16 %v1136, %v1132
    %v1609 = vpack.c.b16 %v1137, %v1133
    %v1610 = vpack.c.b16 %v1138, %v1134
    %v1611 = vpack.c.b16 %v1139, %v1135
    %v1612 = vpack.c.b16 %v1144, %v1140
    %v1613 = vpack.c.b16 %v1145, %v1141
    %v1614 = vpack.c.b16 %v1146, %v1142
    %v1615 = vpack.c.b16 %v1147, %v1143
    %v1616 = vpack.c.b16 %v1152, %v1148
    %v1617 = vpack.c.b16 %v1153, %v1149
    %v1618 = vpack.c.b16 %v1154, %v1150
    %v1619 = vpack.c.b16 %v1155, %v1151
    %v1620 = vpack.c.b16 %v1160, %v1156
    %v1621 = vpack.c.b16 %v1161, %v1157
    %v1622 = vpack.c.b16 %v1162, %v1158
    %v1623 = vpack.c.b16 %v1163, %v1159
    %v1624 = vpack.c.b16 %v1168, %v1164
    %v1625 = vpack.c.b16 %v1169, %v1165
    %v1626 = vpack.c.b16 %v1170, %v1166
    %v1627 = vpack.c.b16 %v1171, %v1167
    %v1628 = vpack.c.b16 %v1176, %v1172
    %v1629 = vpack.c.b16 %v1177, %v1173
    %v1630 = vpack.c.b16 %v1178, %v1174
    %v1631 = vpack.c.b16 %v1179, %v1175
    %v1632 = vpack.c.b16 %v1184, %v1180
    %v1633 = vpack.c.b16 %v1185, %v1181
    %v1634 = vpack.c.b16 %v1186, %v1182
    %v1635 = vpack.c.b16 %v1187, %v1183
    %v1636 = vpack.c.b16 %v1192, %v1188
    %v1637 = vpack.c.b16 %v1193, %v1189
    %v1638 = vpack.c.b16 %v1194, %v1190
    %v1639 = vpack.c.b16 %v1195, %v1191
    %v1640 = vpack.c.b16 %v1200, %v1196
    %v1641 = vpack.c.b16 %v1201, %v1197
    %v1642 = vpack.c.b16 %v1202, %v1198
    %v1643 = vpack.c.b16 %v1203, %v1199
    %v1644 = vpack.c.b16 %v1208, %v1204
    %v1645 = vpack.c.b16 %v1209, %v1205
    %v1646 = vpack.c.b16 %v1210, %v1206
    %v1647 = vpack.c.b16 %v1211, %v1207
    %v1648 = vpack.c.b16 %v1216, %v1212
    %v1649 = vpack.c.b16 %v1217, %v1213
    %v1650 = vpack.c.b16 %v1218, %v1214
    %v1651 = vpack.c.b16 %v1219, %v1215
    %v1652 = vpack.c.b16 %v1224, %v1220
    %v1653 = vpack.c.b16 %v1225, %v1221
    %v1654 = vpack.c.b16 %v1226, %v1222
    %v1655 = vpack.c.b16 %v1227, %v1223
    %v1656 = vpack.c.b16 %v1232, %v1228
    %v1657 = vpack.c.b16 %v1233, %v1229
    %v1658 = vpack.c.b16 %v1234, %v1230
    %v1659 = vpack.c.b16 %v1235, %v1231
    %v1660 = vpack.c.b16 %v1240, %v1236
    %v1661 = vpack.c.b16 %v1241, %v1237
    %v1662 = vpack.c.b16 %v1242, %v1238
    %v1663 = vpack.c.b16 %v1243, %v1239
    %v1664 = vpack.c.b16 %v1248, %v1244
    %v1665 = vpack.c.b16 %v1249, %v1245
    %v1666 = vpack.c.b16 %v1250, %v1246
    %v1667 = vpack.c.b16 %v1251, %v1247
    %v1668 = vpack.c.b16 %v1256, %v1252
    %v1669 = vpack.c.b16 %v1257, %v1253
    %v1670 = vpack.c.b16 %v1258, %v1254
    %v1671 = vpack.c.b16 %v1259, %v1255
    %v1672 = vpack.c.b16 %v1264, %v1260
    %v1673 = vpack.c.b16 %v1265, %v1261
    %v1674 = vpack.c.b16 %v1266, %v1262
    %v1675 = vpack.c.b16 %v1267, %v1263
    %v1676 = vpack.c.b16 %v1272, %v1268
    %v1677 = vpack.c.b16 %v1273, %v1269
    %v1678 = vpack.c.b16 %v1274, %v1270
    %v1679 = vpack.c.b16 %v1275, %v1271
    %v1680 = vpack.c.b16 %v1280, %v1276
    %v1681 = vpack.c.b16 %v1281, %v1277
    %v1682 = vpack.c.b16 %v1282, %v1278
    %v1683 = vpack.c.b16 %v1283, %v1279
    %v1684 = vpack.c.b16 %v1288, %v1284
    %v1685 = vpack.c.b16 %v1289, %v1285
    %v1686 = vpack.c.b16 %v1290, %v1286
    %v1687 = vpack.c.b16 %v1291, %v1287
    %v1688 = vpack.c.b16 %v1296, %v1292
    %v1689 = vpack.c.b16 %v1297, %v1293
    %v1690 = vpack.c.b16 %v1298, %v1294
    %v1691 = vpack.c.b16 %v1299, %v1295
    %v1692 = vpack.c.b16 %v1304, %v1300
    %v1693 = vpack.c.b16 %v1305, %v1301
    %v1694 = vpack.c.b16 %v1306, %v1302
    %v1695 = vpack.c.b16 %v1307, %v1303
    %v1696 = vpack.c.b16 %v1312, %v1308
    %v1697 = vpack.c.b16 %v1313, %v1309
    %v1698 = vpack.c.b16 %v1314, %v1310
    %v1699 = vpack.c.b16 %v1315, %v1311
    %v1700 = vpack.c.b16 %v1320, %v1316
    %v1701 = vpack.c.b16 %v1321, %v1317
    %v1702 = vpack.c.b16 %v1322, %v1318
    %v1703 = vpack.c.b16 %v1323, %v1319
    %v1704 = vpack.c.b16 %v1328, %v1324
    %v1705 = vpack.c.b16 %v1329, %v1325
    %v1706 = vpack.c.b16 %v1330, %v1326
    %v1707 = vpack.c.b16 %v1331, %v1327
    %v1708 = vpack.c.b16 %v1336, %v1332
    %v1709 = vpack.c.b16 %v1337, %v1333
    %v1710 = vpack.c.b16 %v1338, %v1334
    %v1711 = vpack.c.b16 %v1339, %v1335
    %v1712 = vpack.c.b16 %v1344, %v1340
    %v1713 = vpack.c.b16 %v1345, %v1341
    %v1714 = vpack.c.b16 %v1346, %v1342
    %v1715 = vpack.c.b16 %v1347, %v1343
    %v1716 = vpack.c.b16 %v1352, %v1348
    %v1717 = vpack.c.b16 %v1353, %v1349
    %v1718 = vpack.c.b16 %v1354, %v1350
    %v1719 = vpack.c.b16 %v1355, %v1351
    %v1720 = vpack.c.b16 %v1360, %v1356
    %v1721 = vpack.c.b16 %v1361, %v1357
    %v1722 = vpack.c.b16 %v1362, %v1358
    %v1723 = vpack.c.b16 %v1363, %v1359
    %v1724 = vpack.c.b16 %v1368, %v1364
    %v1725 = vpack.c.b16 %v1369, %v1365
    %v1726 = vpack.c.b16 %v1370, %v1366
    %v1727 = vpack.c.b16 %v1371, %v1367
    %v1728 = vpack.c.b16 %v1376, %v1372
    %v1729 = vpack.c.b16 %v1377, %v1373
    %v1730 = vpack.c.b16 %v1378, %v1374
    %v1731 = vpack.c.b16 %v1379, %v1375
    %v1732 = vpack.c.b16 %v1384, %v1380
    %v1733 = vpack.c.b16 %v1385, %v1381
    %v1734 = vpack.c.b16 %v1386, %v1382
    %v1735 = vpack.c.b16 %v1387, %v1383
    %v1736 = vpack.c.b16 %v1392, %v1388
    %v1737 = vpack.c.b16 %v1393, %v1389
    %v1738 = vpack.c.b16 %v1394, %v1390
    %v1739 = vpack.c.b16 %v1395, %v1391
    %v1740 = vpack.c.b16 %v1400, %v1396
    %v1741 = vpack.c.b16 %v1401, %v1397
    %v1742 = vpack.c.b16 %v1402, %v1398
    %v1743 = vpack.c.b16 %v1403, %v1399
    %v1744 = vpack.c.b16 %v1408, %v1404
    %v1745 = vpack.c.b16 %v1409, %v1405
    %v1746 = vpack.c.b16 %v1410, %v1406
    %v1747 = vpack.c.b16 %v1411, %v1407
    %v1748 = vpack.c.b16 %v1416, %v1412
    %v1749 = vpack.c.b16 %v1417, %v1413
    %v1750 = vpack.c.b16 %v1418, %v1414
    %v1751 = vpack.c.b16 %v1419, %v1415
    %v1752 = vpack.c.b16 %v1424, %v1420
    %v1753 = vpack.c.b16 %v1425, %v1421
    %v1754 = vpack.c.b16 %v1426, %v1422
    %v1755 = vpack.c.b16 %v1427, %v1423
    %v1756 = vpack.c.b16 %v1432, %v1428
    %v1757 = vpack.c.b16 %v1433, %v1429
    %v1758 = vpack.c.b16 %v1434, %v1430
    %v1759 = vpack.c.b16 %v1435, %v1431
    %v1760 = vpack.c.b16 %v1440, %v1436
    %v1761 = vpack.c.b16 %v1441, %v1437
    %v1762 = vpack.c.b16 %v1442, %v1438
    %v1763 = vpack.c.b16 %v1443, %v1439
    %v1764 = vpack.c.b16 %v1448, %v1444
    %v1765 = vpack.c.b16 %v1449, %v1445
    %v1766 = vpack.c.b16 %v1450, %v1446
    %v1767 = vpack.c.b16 %v1451, %v1447
    %v1768 = vpack.c.b16 %v1456, %v1452
    %v1769 = vpack.c.b16 %v1457, %v1453
    %v1770 = vpack.c.b16 %v1458, %v1454
    %v1771 = vpack.c.b16 %v1459, %v1455
    %v1772 = vpack.c.b16 %v1464, %v1460
    %v1773 = vpack.c.b16 %v1465, %v1461
    %v1774 = vpack.c.b16 %v1466, %v1462
    %v1775 = vpack.c.b16 %v1467, %v1463
    %v1776 = vpack.c.b16 %v1472, %v1468
    %v1777 = vpack.c.b16 %v1473, %v1469
    %v1778 = vpack.c.b16 %v1474, %v1470
    %v1779 = vpack.c.b16 %v1475, %v1471
    %v1780 = vpack.c.b16 %v1480, %v1476
    %v1781 = vpack.c.b16 %v1481, %v1477
    %v1782 = vpack.c.b16 %v1482, %v1478
    %v1783 = vpack.c.b16 %v1483, %v1479
    %v1784 = vpack.c.b16 %v1488, %v1484
    %v1785 = vpack.c.b16 %v1489, %v1485
    %v1786 = vpack.c.b16 %v1490, %v1486
    %v1787 = vpack.c.b16 %v1491, %v1487
    %v1788 = vpack.c.b16 %v1496, %v1492
    %v1789 = vpack.c.b16 %v1497, %v1493
    %v1790 = vpack.c.b16 %v1498, %v1494
    %v1791 = vpack.c.b16 %v1499, %v1495
    %v1792 = vpack.c.b16 %v1504, %v1500
    %v1793 = vpack.c.b16 %v1505, %v1501
    %v1794 = vpack.c.b16 %v1506, %v1502
    %v1795 = vpack.c.b16 %v1507, %v1503
    %v1796 = vpack.c.b16 %v1512, %v1508
    %v1797 = vpack.c.b16 %v1513, %v1509
    %v1798 = vpack.c.b16 %v1514, %v1510
    %v1799 = vpack.c.b16 %v1515, %v1511
    %v1800 = vpack.c.b16 %v1520, %v1516
    %v1801 = vpack.c.b16 %v1521, %v1517
    %v1802 = vpack.c.b16 %v1522, %v1518
    %v1803 = vpack.c.b16 %v1523, %v1519
    %v1804 = vpack.c.b16 %v1528, %v1524
    %v1805 = vpack.c.b16 %v1529, %v1525
    %v1806 = vpack.c.b16 %v1530, %v1526
    %v1807 = vpack.c.b16 %v1531, %v1527
    %v1808 = vpack.c.b16 %v1536, %v1532
    %v1809 = vpack.c.b16 %v1537, %v1533
    %v1810 = vpack.c.b16 %v1538, %v1534
    %v1811 = vpack.c.b16 %v1539, %v1535
    %v1812 = vpack.c.b16 %v1544, %v1540
    %v1813 = vpack.c.b16 %v1545, %v1541
    %v1814 = vpack.c.b16 %v1546, %v1542
    %v1815 = vpack.c.b16 %v1547, %v1543
    %v1816 = vpack.c.b16 %v1552, %v1548
    %v1817 = vpack.c.b16 %v1553, %v1549
    %v1818 = vpack.c.b16 %v1554, %v1550
    %v1819 = vpack.c.b16 %v1555, %v1551
    %v1820 = vpack.c.b16 %v1560, %v1556
    %v1821 = vpack.c.b16 %v1561, %v1557
    %v1822 = vpack.c.b16 %v1562, %v1558
    %v1823 = vpack.c.b16 %v1563, %v1559
    %v1824 = vpack.c.b16 %v1568, %v1564
    %v1825 = vpack.c.b16 %v1569, %v1565
    %v1826 = vpack.c.b16 %v1570, %v1566
    %v1827 = vpack.c.b16 %v1571, %v1567
    %2084 = vmatprep.subr.bf16.mxu0 %v1601
    %2085 = vmatpush1.bf16.msra.mxu0 %v1600
    %2086 = vmatprep.subr.bf16.mxu0 %v1597
    %2087 = vmatpush1.bf16.msra.mxu0 %v1596
    %2088 = vmatprep.subr.bf16.mxu0 %v1593
    %2089 = vmatpush1.bf16.msra.mxu0 %v1592
    %2090 = vmatprep.subr.bf16.mxu0 %v1589
    %2091 = vmatpush1.bf16.msra.mxu0 %v1588
    %2092 = vmatprep.subr.bf16.mxu0 %v1585
    %2093 = vmatpush1.bf16.msra.mxu0 %v1584
    %2094 = vmatprep.subr.bf16.mxu0 %v1581
    %2095 = vmatpush1.bf16.msra.mxu0 %v1580
    %2096 = vmatprep.subr.bf16.mxu0 %v1577
    %2097 = vmatpush1.bf16.msra.mxu0 %v1576
    %2098 = vmatprep.subr.bf16.mxu0 %v1573
    %2099 = vmatpush1.bf16.msra.mxu0 %v1572
    %2100 = vmatprep.subr.bf16.mxu0 %v1633
    %2101 = vmatpush2.bf16.msra.mxu0 %v1632
    %2102 = vmatprep.subr.bf16.mxu0 %v1629
    %2103 = vmatpush2.bf16.msra.mxu0 %v1628
    %2104 = vmatprep.subr.bf16.mxu0 %v1625
    %2105 = vmatpush2.bf16.msra.mxu0 %v1624
    %2106 = vmatprep.subr.bf16.mxu0 %v1621
    %2107 = vmatpush2.bf16.msra.mxu0 %v1620
    %2108 = vmatprep.subr.bf16.mxu0 %v1617
    %2109 = vmatpush2.bf16.msra.mxu0 %v1616
    %2110 = vmatprep.subr.bf16.mxu0 %v1613
    %2111 = vmatpush2.bf16.msra.mxu0 %v1612
    %2112 = vmatprep.subr.bf16.mxu0 %v1609
    %2113 = vmatpush2.bf16.msra.mxu0 %v1608
    %2114 = vmatprep.subr.bf16.mxu0 %v1605
    %2115 = vmatpush2.bf16.msra.mxu0 %v1604
    %2116 = vmatprep.mubr.bf16.mxu0 %v519
    %2117 = vmatmul.mubr.bf16.gmra.mxu0 %v518
    %v2118 = vpop.f32.mrf.mxu0
    %v2119 = vadd.f32 %v787, %v2118
    %v2120 = vpop.f32.mrf.mxu0
    %v2121 = vadd.f32 %v791, %v2120
    %v2122 = vpop.f32.mrf.mxu0
    %v2123 = vpop.f32.mrf.mxu0
    %2124 = vdwg.mxu0
    %2125 = vmatprep.subr.bf16.mxu0 %v1665
    %2126 = vmatpush1.bf16.msra.mxu0 %v1664
    %2127 = vmatprep.subr.bf16.mxu0 %v1661
    %2128 = vmatpush1.bf16.msra.mxu0 %v1660
    %2129 = vmatprep.subr.bf16.mxu0 %v1657
    %2130 = vmatpush1.bf16.msra.mxu0 %v1656
    %2131 = vmatprep.subr.bf16.mxu0 %v1653
    %2132 = vmatpush1.bf16.msra.mxu0 %v1652
    %2133 = vmatprep.subr.bf16.mxu0 %v1649
    %2134 = vmatpush1.bf16.msra.mxu0 %v1648
    %2135 = vmatprep.subr.bf16.mxu0 %v1645
    %2136 = vmatpush1.bf16.msra.mxu0 %v1644
    %2137 = vmatprep.subr.bf16.mxu0 %v1641
    %2138 = vmatpush1.bf16.msra.mxu0 %v1640
    %2139 = vmatprep.subr.bf16.mxu0 %v1637
    %2140 = vmatpush1.bf16.msra.mxu0 %v1636
    %2141 = vmatprep.subr.bf16.mxu0 %v1697
    %2142 = vmatpush2.bf16.msra.mxu0 %v1696
    %2143 = vmatprep.subr.bf16.mxu0 %v1693
    %2144 = vmatpush2.bf16.msra.mxu0 %v1692
    %2145 = vmatprep.subr.bf16.mxu0 %v1689
    %2146 = vmatpush2.bf16.msra.mxu0 %v1688
    %2147 = vmatprep.subr.bf16.mxu0 %v1685
    %2148 = vmatpush2.bf16.msra.mxu0 %v1684
    %2149 = vmatprep.subr.bf16.mxu0 %v1681
    %2150 = vmatpush2.bf16.msra.mxu0 %v1680
    %2151 = vmatprep.subr.bf16.mxu0 %v1677
    %2152 = vmatpush2.bf16.msra.mxu0 %v1676
    %2153 = vmatprep.subr.bf16.mxu0 %v1673
    %2154 = vmatpush2.bf16.msra.mxu0 %v1672
    %2155 = vmatprep.subr.bf16.mxu0 %v1669
    %2156 = vmatpush2.bf16.msra.mxu0 %v1668
    %2157 = vmatprep.mubr.bf16.mxu0 %v521
    %2158 = vmatmul.mubr.bf16.gmra.mxu0 %v520
    %v2159 = vpop.f32.mrf.mxu0
    %v2160 = vadd.f32 %v2119, %v2159
    %v2161 = vpop.f32.mrf.mxu0
    %v2162 = vadd.f32 %v2121, %v2161
    %v2163 = vpop.f32.mrf.mxu0
    %v2164 = vpop.f32.mrf.mxu0
    %2165 = vdwg.mxu0
    %2166 = vmatprep.subr.bf16.mxu0 %v1729
    %2167 = vmatpush1.bf16.msra.mxu0 %v1728
    %2168 = vmatprep.subr.bf16.mxu0 %v1725
    %2169 = vmatpush1.bf16.msra.mxu0 %v1724
    %2170 = vmatprep.subr.bf16.mxu0 %v1721
    %2171 = vmatpush1.bf16.msra.mxu0 %v1720
    %2172 = vmatprep.subr.bf16.mxu0 %v1717
    %2173 = vmatpush1.bf16.msra.mxu0 %v1716
    %2174 = vmatprep.subr.bf16.mxu0 %v1713
    %2175 = vmatpush1.bf16.msra.mxu0 %v1712
    %2176 = vmatprep.subr.bf16.mxu0 %v1709
    %2177 = vmatpush1.bf16.msra.mxu0 %v1708
    %2178 = vmatprep.subr.bf16.mxu0 %v1705
    %2179 = vmatpush1.bf16.msra.mxu0 %v1704
    %2180 = vmatprep.subr.bf16.mxu0 %v1701
    %2181 = vmatpush1.bf16.msra.mxu0 %v1700
    %2182 = vmatprep.subr.bf16.mxu0 %v1761
    %2183 = vmatpush2.bf16.msra.mxu0 %v1760
    %2184 = vmatprep.subr.bf16.mxu0 %v1757
    %2185 = vmatpush2.bf16.msra.mxu0 %v1756
    %2186 = vmatprep.subr.bf16.mxu0 %v1753
    %2187 = vmatpush2.bf16.msra.mxu0 %v1752
    %2188 = vmatprep.subr.bf16.mxu0 %v1749
    %2189 = vmatpush2.bf16.msra.mxu0 %v1748
    %2190 = vmatprep.subr.bf16.mxu0 %v1745
    %2191 = vmatpush2.bf16.msra.mxu0 %v1744
    %2192 = vmatprep.subr.bf16.mxu0 %v1741
    %2193 = vmatpush2.bf16.msra.mxu0 %v1740
    %2194 = vmatprep.subr.bf16.mxu0 %v1737
    %2195 = vmatpush2.bf16.msra.mxu0 %v1736
    %2196 = vmatprep.subr.bf16.mxu0 %v1733
    %2197 = vmatpush2.bf16.msra.mxu0 %v1732
    %2198 = vmatprep.mubr.bf16.mxu0 %v523
    %2199 = vmatmul.mubr.bf16.gmra.mxu0 %v522
    %v2200 = vpop.f32.mrf.mxu0
    %v2201 = vadd.f32 %v2160, %v2200
    %v2202 = vpop.f32.mrf.mxu0
    %v2203 = vadd.f32 %v2162, %v2202
    %v2204 = vpop.f32.mrf.mxu0
    %v2205 = vpop.f32.mrf.mxu0
    %2206 = vdwg.mxu0
    %2207 = vmatprep.subr.bf16.mxu0 %v1793
    %2208 = vmatpush1.bf16.msra.mxu0 %v1792
    %2209 = vmatprep.subr.bf16.mxu0 %v1789
    %2210 = vmatpush1.bf16.msra.mxu0 %v1788
    %2211 = vmatprep.subr.bf16.mxu0 %v1785
    %2212 = vmatpush1.bf16.msra.mxu0 %v1784
    %2213 = vmatprep.subr.bf16.mxu0 %v1781
    %2214 = vmatpush1.bf16.msra.mxu0 %v1780
    %2215 = vmatprep.subr.bf16.mxu0 %v1777
    %2216 = vmatpush1.bf16.msra.mxu0 %v1776
    %2217 = vmatprep.subr.bf16.mxu0 %v1773
    %2218 = vmatpush1.bf16.msra.mxu0 %v1772
    %2219 = vmatprep.subr.bf16.mxu0 %v1769
    %2220 = vmatpush1.bf16.msra.mxu0 %v1768
    %2221 = vmatprep.subr.bf16.mxu0 %v1765
    %2222 = vmatpush1.bf16.msra.mxu0 %v1764
    %2223 = vmatprep.subr.bf16.mxu0 %v1825
    %2224 = vmatpush2.bf16.msra.mxu0 %v1824
    %2225 = vmatprep.subr.bf16.mxu0 %v1821
    %2226 = vmatpush2.bf16.msra.mxu0 %v1820
    %2227 = vmatprep.subr.bf16.mxu0 %v1817
    %2228 = vmatpush2.bf16.msra.mxu0 %v1816
    %2229 = vmatprep.subr.bf16.mxu0 %v1813
    %2230 = vmatpush2.bf16.msra.mxu0 %v1812
    %2231 = vmatprep.subr.bf16.mxu0 %v1809
    %2232 = vmatpush2.bf16.msra.mxu0 %v1808
    %2233 = vmatprep.subr.bf16.mxu0 %v1805
    %2234 = vmatpush2.bf16.msra.mxu0 %v1804
    %2235 = vmatprep.subr.bf16.mxu0 %v1801
    %2236 = vmatpush2.bf16.msra.mxu0 %v1800
    %2237 = vmatprep.subr.bf16.mxu0 %v1797
    %2238 = vmatpush2.bf16.msra.mxu0 %v1796
    %2239 = vmatprep.mubr.bf16.mxu0 %v525
    %2240 = vmatmul.mubr.bf16.gmra.mxu0 %v524
    %v2241 = vpop.f32.mrf.mxu0
    %v2242 = vadd.f32 %v2201, %v2241
    %v2243 = vpop.f32.mrf.mxu0
    %v2244 = vadd.f32 %v2203, %v2243
    %v2245 = vpop.f32.mrf.mxu0
    %v2246 = vpop.f32.mrf.mxu0
    %2247 = vdwg.mxu0
    %2248 = vmatprep.subr.bf16.mxu0 %v1603
    %2249 = vmatpush1.bf16.msra.mxu0 %v1602
    %2250 = vmatprep.subr.bf16.mxu0 %v1599
    %2251 = vmatpush1.bf16.msra.mxu0 %v1598
    %2252 = vmatprep.subr.bf16.mxu0 %v1595
    %2253 = vmatpush1.bf16.msra.mxu0 %v1594
    %2254 = vmatprep.subr.bf16.mxu0 %v1591
    %2255 = vmatpush1.bf16.msra.mxu0 %v1590
    %2256 = vmatprep.subr.bf16.mxu0 %v1587
    %2257 = vmatpush1.bf16.msra.mxu0 %v1586
    %2258 = vmatprep.subr.bf16.mxu0 %v1583
    %2259 = vmatpush1.bf16.msra.mxu0 %v1582
    %2260 = vmatprep.subr.bf16.mxu0 %v1579
    %2261 = vmatpush1.bf16.msra.mxu0 %v1578
    %2262 = vmatprep.subr.bf16.mxu0 %v1575
    %2263 = vmatpush1.bf16.msra.mxu0 %v1574
    %2264 = vmatprep.subr.bf16.mxu0 %v1635
    %2265 = vmatpush2.bf16.msra.mxu0 %v1634
    %2266 = vmatprep.subr.bf16.mxu0 %v1631
    %2267 = vmatpush2.bf16.msra.mxu0 %v1630
    %2268 = vmatprep.subr.bf16.mxu0 %v1627
    %2269 = vmatpush2.bf16.msra.mxu0 %v1626
    %2270 = vmatprep.subr.bf16.mxu0 %v1623
    %2271 = vmatpush2.bf16.msra.mxu0 %v1622
    %2272 = vmatprep.subr.bf16.mxu0 %v1619
    %2273 = vmatpush2.bf16.msra.mxu0 %v1618
    %2274 = vmatprep.subr.bf16.mxu0 %v1615
    %2275 = vmatpush2.bf16.msra.mxu0 %v1614
    %2276 = vmatprep.subr.bf16.mxu0 %v1611
    %2277 = vmatpush2.bf16.msra.mxu0 %v1610
    %2278 = vmatprep.subr.bf16.mxu0 %v1607
    %2279 = vmatpush2.bf16.msra.mxu0 %v1606
    %2280 = vmatprep.mubr.bf16.mxu0 %v519
    %2281 = vmatmul.mubr.bf16.gmra.mxu0 %v518
    %v2282 = vpop.f32.mrf.mxu0
    %v2283 = vadd.f32 %v795, %v2282
    %v2284 = vpop.f32.mrf.mxu0
    %v2285 = vadd.f32 %v799, %v2284
    %v2286 = vpop.f32.mrf.mxu0
    %v2287 = vpop.f32.mrf.mxu0
    %2288 = vdwg.mxu0
    %2289 = vmatprep.subr.bf16.mxu0 %v1667
    %2290 = vmatpush1.bf16.msra.mxu0 %v1666
    %2291 = vmatprep.subr.bf16.mxu0 %v1663
    %2292 = vmatpush1.bf16.msra.mxu0 %v1662
    %2293 = vmatprep.subr.bf16.mxu0 %v1659
    %2294 = vmatpush1.bf16.msra.mxu0 %v1658
    %2295 = vmatprep.subr.bf16.mxu0 %v1655
    %2296 = vmatpush1.bf16.msra.mxu0 %v1654
    %2297 = vmatprep.subr.bf16.mxu0 %v1651
    %2298 = vmatpush1.bf16.msra.mxu0 %v1650
    %2299 = vmatprep.subr.bf16.mxu0 %v1647
    %2300 = vmatpush1.bf16.msra.mxu0 %v1646
    %2301 = vmatprep.subr.bf16.mxu0 %v1643
    %2302 = vmatpush1.bf16.msra.mxu0 %v1642
    %2303 = vmatprep.subr.bf16.mxu0 %v1639
    %2304 = vmatpush1.bf16.msra.mxu0 %v1638
    %2305 = vmatprep.subr.bf16.mxu0 %v1699
    %2306 = vmatpush2.bf16.msra.mxu0 %v1698
    %2307 = vmatprep.subr.bf16.mxu0 %v1695
    %2308 = vmatpush2.bf16.msra.mxu0 %v1694
    %2309 = vmatprep.subr.bf16.mxu0 %v1691
    %2310 = vmatpush2.bf16.msra.mxu0 %v1690
    %2311 = vmatprep.subr.bf16.mxu0 %v1687
    %2312 = vmatpush2.bf16.msra.mxu0 %v1686
    %2313 = vmatprep.subr.bf16.mxu0 %v1683
    %2314 = vmatpush2.bf16.msra.mxu0 %v1682
    %2315 = vmatprep.subr.bf16.mxu0 %v1679
    %2316 = vmatpush2.bf16.msra.mxu0 %v1678
    %2317 = vmatprep.subr.bf16.mxu0 %v1675
    %2318 = vmatpush2.bf16.msra.mxu0 %v1674
    %2319 = vmatprep.subr.bf16.mxu0 %v1671
    %2320 = vmatpush2.bf16.msra.mxu0 %v1670
    %2321 = vmatprep.mubr.bf16.mxu0 %v521
    %2322 = vmatmul.mubr.bf16.gmra.mxu0 %v520
    %v2323 = vpop.f32.mrf.mxu0
    %v2324 = vadd.f32 %v2283, %v2323
    %v2325 = vpop.f32.mrf.mxu0
    %v2326 = vadd.f32 %v2285, %v2325
    %v2327 = vpop.f32.mrf.mxu0
    %v2328 = vpop.f32.mrf.mxu0
    %2329 = vdwg.mxu0
    %2330 = vmatprep.subr.bf16.mxu0 %v1731
    %2331 = vmatpush1.bf16.msra.mxu0 %v1730
    %2332 = vmatprep.subr.bf16.mxu0 %v1727
    %2333 = vmatpush1.bf16.msra.mxu0 %v1726
    %2334 = vmatprep.subr.bf16.mxu0 %v1723
    %2335 = vmatpush1.bf16.msra.mxu0 %v1722
    %2336 = vmatprep.subr.bf16.mxu0 %v1719
    %2337 = vmatpush1.bf16.msra.mxu0 %v1718
    %2338 = vmatprep.subr.bf16.mxu0 %v1715
    %2339 = vmatpush1.bf16.msra.mxu0 %v1714
    %2340 = vmatprep.subr.bf16.mxu0 %v1711
    %2341 = vmatpush1.bf16.msra.mxu0 %v1710
    %2342 = vmatprep.subr.bf16.mxu0 %v1707
    %2343 = vmatpush1.bf16.msra.mxu0 %v1706
    %2344 = vmatprep.subr.bf16.mxu0 %v1703
    %2345 = vmatpush1.bf16.msra.mxu0 %v1702
    %2346 = vmatprep.subr.bf16.mxu0 %v1763
    %2347 = vmatpush2.bf16.msra.mxu0 %v1762
    %2348 = vmatprep.subr.bf16.mxu0 %v1759
    %2349 = vmatpush2.bf16.msra.mxu0 %v1758
    %2350 = vmatprep.subr.bf16.mxu0 %v1755
    %2351 = vmatpush2.bf16.msra.mxu0 %v1754
    %2352 = vmatprep.subr.bf16.mxu0 %v1751
    %2353 = vmatpush2.bf16.msra.mxu0 %v1750
    %2354 = vmatprep.subr.bf16.mxu0 %v1747
    %2355 = vmatpush2.bf16.msra.mxu0 %v1746
    %2356 = vmatprep.subr.bf16.mxu0 %v1743
    %2357 = vmatpush2.bf16.msra.mxu0 %v1742
    %2358 = vmatprep.subr.bf16.mxu0 %v1739
    %2359 = vmatpush2.bf16.msra.mxu0 %v1738
    %2360 = vmatprep.subr.bf16.mxu0 %v1735
    %2361 = vmatpush2.bf16.msra.mxu0 %v1734
    %2362 = vmatprep.mubr.bf16.mxu0 %v523
    %2363 = vmatmul.mubr.bf16.gmra.mxu0 %v522
    %v2364 = vpop.f32.mrf.mxu0
    %v2365 = vadd.f32 %v2324, %v2364
    %v2366 = vpop.f32.mrf.mxu0
    %v2367 = vadd.f32 %v2326, %v2366
    %v2368 = vpop.f32.mrf.mxu0
    %v2369 = vpop.f32.mrf.mxu0
    %2370 = vdwg.mxu0
    %2371 = vmatprep.subr.bf16.mxu0 %v1795
    %2372 = vmatpush1.bf16.msra.mxu0 %v1794
    %2373 = vmatprep.subr.bf16.mxu0 %v1791
    %2374 = vmatpush1.bf16.msra.mxu0 %v1790
    %2375 = vmatprep.subr.bf16.mxu0 %v1787
    %2376 = vmatpush1.bf16.msra.mxu0 %v1786
    %2377 = vmatprep.subr.bf16.mxu0 %v1783
    %2378 = vmatpush1.bf16.msra.mxu0 %v1782
    %2379 = vmatprep.subr.bf16.mxu0 %v1779
    %2380 = vmatpush1.bf16.msra.mxu0 %v1778
    %2381 = vmatprep.subr.bf16.mxu0 %v1775
    %2382 = vmatpush1.bf16.msra.mxu0 %v1774
    %2383 = vmatprep.subr.bf16.mxu0 %v1771
    %2384 = vmatpush1.bf16.msra.mxu0 %v1770
    %2385 = vmatprep.subr.bf16.mxu0 %v1767
    %2386 = vmatpush1.bf16.msra.mxu0 %v1766
    %2387 = vmatprep.subr.bf16.mxu0 %v1827
    %2388 = vmatpush2.bf16.msra.mxu0 %v1826
    %2389 = vmatprep.subr.bf16.mxu0 %v1823
    %2390 = vmatpush2.bf16.msra.mxu0 %v1822
    %2391 = vmatprep.subr.bf16.mxu0 %v1819
    %2392 = vmatpush2.bf16.msra.mxu0 %v1818
    %2393 = vmatprep.subr.bf16.mxu0 %v1815
    %2394 = vmatpush2.bf16.msra.mxu0 %v1814
    %2395 = vmatprep.subr.bf16.mxu0 %v1811
    %2396 = vmatpush2.bf16.msra.mxu0 %v1810
    %2397 = vmatprep.subr.bf16.mxu0 %v1807
    %2398 = vmatpush2.bf16.msra.mxu0 %v1806
    %2399 = vmatprep.subr.bf16.mxu0 %v1803
    %2400 = vmatpush2.bf16.msra.mxu0 %v1802
    %2401 = vmatprep.subr.bf16.mxu0 %v1799
    %2402 = vmatpush2.bf16.msra.mxu0 %v1798
    %2403 = vmatprep.mubr.bf16.mxu0 %v525
    %2404 = vmatmul.mubr.bf16.gmra.mxu0 %v524
    %v2405 = vpop.f32.mrf.mxu0
    %v2406 = vadd.f32 %v2365, %v2405
    %v2407 = vpop.f32.mrf.mxu0
    %v2408 = vadd.f32 %v2367, %v2407
    %v2409 = vpop.f32.mrf.mxu0
    %v2410 = vpop.f32.mrf.mxu0
    %2411 = vdwg.mxu0
    %v2412 = vmul.f32 %v2242, 0.2
    %v2413 = vmul.f32 %v2244, 0.2
    %v2414 = vmul.f32 %v2406, 0.2
    %v2415 = vmul.f32 %v2408, 0.2
    %v2416 = vmax.f32 %v2242, %v2412
    %v2417 = vmax.f32 %v2244, %v2413
    %v2418 = vmax.f32 %v2406, %v2414
    %v2419 = vmax.f32 %v2408, %v2415
    %v2420 = vpack.c.bf16 %v2416, %v2416
    %v2421 = vpack.c.bf16 %v2417, %v2417
    %v2422 = vpack.c.bf16 %v2418, %v2418
    %v2423 = vpack.c.bf16 %v2419, %v2419
    %v2424 = vld [vmem:[#allocation10] sm:$0xff]
    %v2425 = vld [vmem:[#allocation10 + $0x8] sm:$0xff]
    %v2426 = vld [vmem:[#allocation10 + $0x10] sm:$0xff]
    %v2427 = vld [vmem:[#allocation10 + $0x18] sm:$0xff]
    %v2428 = vld [vmem:[#allocation10 + $0x20] sm:$0xff]
    %v2429 = vld [vmem:[#allocation10 + $0x28] sm:$0xff]
    %v2430 = vld [vmem:[#allocation10 + $0x30] sm:$0xff]
    %v2431 = vld [vmem:[#allocation10 + $0x38] sm:$0xff]
    %v2432 = vld [vmem:[#allocation10 + $0x40] sm:$0xff]
    %v2433 = vld [vmem:[#allocation10 + $0x48] sm:$0xff]
    %v2434 = vld [vmem:[#allocation10 + $0x50] sm:$0xff]
    %v2435 = vld [vmem:[#allocation10 + $0x58] sm:$0xff]
    %v2436 = vld [vmem:[#allocation10 + $0x60] sm:$0xff]
    %v2437 = vld [vmem:[#allocation10 + $0x68] sm:$0xff]
    %v2438 = vld [vmem:[#allocation10 + $0x70] sm:$0xff]
    %v2439 = vld [vmem:[#allocation10 + $0x78] sm:$0xff]
    %v2440 = vld [vmem:[#allocation10 + $0x80] sm:$0xff]
    %v2441 = vld [vmem:[#allocation10 + $0x88] sm:$0xff]
    %v2442 = vld [vmem:[#allocation10 + $0x90] sm:$0xff]
    %v2443 = vld [vmem:[#allocation10 + $0x98] sm:$0xff]
    %v2444 = vld [vmem:[#allocation10 + $0xa0] sm:$0xff]
    %v2445 = vld [vmem:[#allocation10 + $0xa8] sm:$0xff]
    %v2446 = vld [vmem:[#allocation10 + $0xb0] sm:$0xff]
    %v2447 = vld [vmem:[#allocation10 + $0xb8] sm:$0xff]
    %v2448 = vld [vmem:[#allocation10 + $0xc0] sm:$0xff]
    %v2449 = vld [vmem:[#allocation10 + $0xc8] sm:$0xff]
    %v2450 = vld [vmem:[#allocation10 + $0xd0] sm:$0xff]
    %v2451 = vld [vmem:[#allocation10 + $0xd8] sm:$0xff]
    %v2452 = vld [vmem:[#allocation10 + $0xe0] sm:$0xff]
    %v2453 = vld [vmem:[#allocation10 + $0xe8] sm:$0xff]
    %v2454 = vld [vmem:[#allocation10 + $0xf0] sm:$0xff]
    %v2455 = vld [vmem:[#allocation10 + $0xf8] sm:$0xff]
    %v2456 = vld [vmem:[#allocation10 + $0x100] sm:$0xff]
    %v2457 = vld [vmem:[#allocation10 + $0x108] sm:$0xff]
    %v2458 = vld [vmem:[#allocation10 + $0x110] sm:$0xff]
    %v2459 = vld [vmem:[#allocation10 + $0x118] sm:$0xff]
    %v2460 = vld [vmem:[#allocation10 + $0x120] sm:$0xff]
    %v2461 = vld [vmem:[#allocation10 + $0x128] sm:$0xff]
    %v2462 = vld [vmem:[#allocation10 + $0x130] sm:$0xff]
    %v2463 = vld [vmem:[#allocation10 + $0x138] sm:$0xff]
    %v2464 = vld [vmem:[#allocation10 + $0x140] sm:$0xff]
    %v2465 = vld [vmem:[#allocation10 + $0x148] sm:$0xff]
    %v2466 = vld [vmem:[#allocation10 + $0x150] sm:$0xff]
    %v2467 = vld [vmem:[#allocation10 + $0x158] sm:$0xff]
    %v2468 = vld [vmem:[#allocation10 + $0x160] sm:$0xff]
    %v2469 = vld [vmem:[#allocation10 + $0x168] sm:$0xff]
    %v2470 = vld [vmem:[#allocation10 + $0x170] sm:$0xff]
    %v2471 = vld [vmem:[#allocation10 + $0x178] sm:$0xff]
    %v2472 = vld [vmem:[#allocation10 + $0x180] sm:$0xff]
    %v2473 = vld [vmem:[#allocation10 + $0x188] sm:$0xff]
    %v2474 = vld [vmem:[#allocation10 + $0x190] sm:$0xff]
    %v2475 = vld [vmem:[#allocation10 + $0x198] sm:$0xff]
    %v2476 = vld [vmem:[#allocation10 + $0x1a0] sm:$0xff]
    %v2477 = vld [vmem:[#allocation10 + $0x1a8] sm:$0xff]
    %v2478 = vld [vmem:[#allocation10 + $0x1b0] sm:$0xff]
    %v2479 = vld [vmem:[#allocation10 + $0x1b8] sm:$0xff]
    %v2480 = vld [vmem:[#allocation10 + $0x1c0] sm:$0xff]
    %v2481 = vld [vmem:[#allocation10 + $0x1c8] sm:$0xff]
    %v2482 = vld [vmem:[#allocation10 + $0x1d0] sm:$0xff]
    %v2483 = vld [vmem:[#allocation10 + $0x1d8] sm:$0xff]
    %v2484 = vld [vmem:[#allocation10 + $0x1e0] sm:$0xff]
    %v2485 = vld [vmem:[#allocation10 + $0x1e8] sm:$0xff]
    %v2486 = vld [vmem:[#allocation10 + $0x1f0] sm:$0xff]
    %v2487 = vld [vmem:[#allocation10 + $0x1f8] sm:$0xff]
    %v2488 = vld [vmem:[%s6] sm:$0x3]
    %v2490 = vlaneseq
    %v2491 = vshrl.u32 %v2490, 7
    %v2492 = vsub.s32 0, %v2491
    %v2493 = vrot.slane %v2488, %v2492
    %v2494 = vlaneseq
    %v2495 = vshrl.u32 %v2494, 7
    %v2496 = vsub.s32 1, %v2495
    %v2497 = vrot.slane %v2488, %v2496
    %v2564 = vunpack.c.l.b16 %v2424
    %v2565 = vunpack.c.h.b16 %v2424
    %v2566 = vunpack.c.l.b16 %v2425
    %v2567 = vunpack.c.h.b16 %v2425
    %v2568 = vunpack.c.l.b16 %v2426
    %v2569 = vunpack.c.h.b16 %v2426
    %v2570 = vunpack.c.l.b16 %v2427
    %v2571 = vunpack.c.h.b16 %v2427
    %v2572 = vunpack.c.l.b16 %v2428
    %v2573 = vunpack.c.h.b16 %v2428
    %v2574 = vunpack.c.l.b16 %v2429
    %v2575 = vunpack.c.h.b16 %v2429
    %v2576 = vunpack.c.l.b16 %v2430
    %v2577 = vunpack.c.h.b16 %v2430
    %v2578 = vunpack.c.l.b16 %v2431
    %v2579 = vunpack.c.h.b16 %v2431
    %v2580 = vunpack.c.l.b16 %v2432
    %v2581 = vunpack.c.h.b16 %v2432
    %v2582 = vunpack.c.l.b16 %v2433
    %v2583 = vunpack.c.h.b16 %v2433
    %v2584 = vunpack.c.l.b16 %v2434
    %v2585 = vunpack.c.h.b16 %v2434
    %v2586 = vunpack.c.l.b16 %v2435
    %v2587 = vunpack.c.h.b16 %v2435
    %v2588 = vunpack.c.l.b16 %v2436
    %v2589 = vunpack.c.h.b16 %v2436
    %v2590 = vunpack.c.l.b16 %v2437
    %v2591 = vunpack.c.h.b16 %v2437
    %v2592 = vunpack.c.l.b16 %v2438
    %v2593 = vunpack.c.h.b16 %v2438
    %v2594 = vunpack.c.l.b16 %v2439
    %v2595 = vunpack.c.h.b16 %v2439
    %v2596 = vunpack.c.l.b16 %v2440
    %v2597 = vunpack.c.h.b16 %v2440
    %v2598 = vunpack.c.l.b16 %v2441
    %v2599 = vunpack.c.h.b16 %v2441
    %v2600 = vunpack.c.l.b16 %v2442
    %v2601 = vunpack.c.h.b16 %v2442
    %v2602 = vunpack.c.l.b16 %v2443
    %v2603 = vunpack.c.h.b16 %v2443
    %v2604 = vunpack.c.l.b16 %v2444
    %v2605 = vunpack.c.h.b16 %v2444
    %v2606 = vunpack.c.l.b16 %v2445
    %v2607 = vunpack.c.h.b16 %v2445
    %v2608 = vunpack.c.l.b16 %v2446
    %v2609 = vunpack.c.h.b16 %v2446
    %v2610 = vunpack.c.l.b16 %v2447
    %v2611 = vunpack.c.h.b16 %v2447
    %v2612 = vunpack.c.l.b16 %v2448
    %v2613 = vunpack.c.h.b16 %v2448
    %v2614 = vunpack.c.l.b16 %v2449
    %v2615 = vunpack.c.h.b16 %v2449
    %v2616 = vunpack.c.l.b16 %v2450
    %v2617 = vunpack.c.h.b16 %v2450
    %v2618 = vunpack.c.l.b16 %v2451
    %v2619 = vunpack.c.h.b16 %v2451
    %v2620 = vunpack.c.l.b16 %v2452
    %v2621 = vunpack.c.h.b16 %v2452
    %v2622 = vunpack.c.l.b16 %v2453
    %v2623 = vunpack.c.h.b16 %v2453
    %v2624 = vunpack.c.l.b16 %v2454
    %v2625 = vunpack.c.h.b16 %v2454
    %v2626 = vunpack.c.l.b16 %v2455
    %v2627 = vunpack.c.h.b16 %v2455
    %v2628 = vunpack.c.l.b16 %v2456
    %v2629 = vunpack.c.h.b16 %v2456
    %v2630 = vunpack.c.l.b16 %v2457
    %v2631 = vunpack.c.h.b16 %v2457
    %v2632 = vunpack.c.l.b16 %v2458
    %v2633 = vunpack.c.h.b16 %v2458
    %v2634 = vunpack.c.l.b16 %v2459
    %v2635 = vunpack.c.h.b16 %v2459
    %v2636 = vunpack.c.l.b16 %v2460
    %v2637 = vunpack.c.h.b16 %v2460
    %v2638 = vunpack.c.l.b16 %v2461
    %v2639 = vunpack.c.h.b16 %v2461
    %v2640 = vunpack.c.l.b16 %v2462
    %v2641 = vunpack.c.h.b16 %v2462
    %v2642 = vunpack.c.l.b16 %v2463
    %v2643 = vunpack.c.h.b16 %v2463
    %v2644 = vunpack.c.l.b16 %v2464
    %v2645 = vunpack.c.h.b16 %v2464
    %v2646 = vunpack.c.l.b16 %v2465
    %v2647 = vunpack.c.h.b16 %v2465
    %v2648 = vunpack.c.l.b16 %v2466
    %v2649 = vunpack.c.h.b16 %v2466
    %v2650 = vunpack.c.l.b16 %v2467
    %v2651 = vunpack.c.h.b16 %v2467
    %v2652 = vunpack.c.l.b16 %v2468
    %v2653 = vunpack.c.h.b16 %v2468
    %v2654 = vunpack.c.l.b16 %v2469
    %v2655 = vunpack.c.h.b16 %v2469
    %v2656 = vunpack.c.l.b16 %v2470
    %v2657 = vunpack.c.h.b16 %v2470
    %v2658 = vunpack.c.l.b16 %v2471
    %v2659 = vunpack.c.h.b16 %v2471
    %v2660 = vunpack.c.l.b16 %v2472
    %v2661 = vunpack.c.h.b16 %v2472
    %v2662 = vunpack.c.l.b16 %v2473
    %v2663 = vunpack.c.h.b16 %v2473
    %v2664 = vunpack.c.l.b16 %v2474
    %v2665 = vunpack.c.h.b16 %v2474
    %v2666 = vunpack.c.l.b16 %v2475
    %v2667 = vunpack.c.h.b16 %v2475
    %v2668 = vunpack.c.l.b16 %v2476
    %v2669 = vunpack.c.h.b16 %v2476
    %v2670 = vunpack.c.l.b16 %v2477
    %v2671 = vunpack.c.h.b16 %v2477
    %v2672 = vunpack.c.l.b16 %v2478
    %v2673 = vunpack.c.h.b16 %v2478
    %v2674 = vunpack.c.l.b16 %v2479
    %v2675 = vunpack.c.h.b16 %v2479
    %v2676 = vunpack.c.l.b16 %v2480
    %v2677 = vunpack.c.h.b16 %v2480
    %v2678 = vunpack.c.l.b16 %v2481
    %v2679 = vunpack.c.h.b16 %v2481
    %v2680 = vunpack.c.l.b16 %v2482
    %v2681 = vunpack.c.h.b16 %v2482
    %v2682 = vunpack.c.l.b16 %v2483
    %v2683 = vunpack.c.h.b16 %v2483
    %v2684 = vunpack.c.l.b16 %v2484
    %v2685 = vunpack.c.h.b16 %v2484
    %v2686 = vunpack.c.l.b16 %v2485
    %v2687 = vunpack.c.h.b16 %v2485
    %v2688 = vunpack.c.l.b16 %v2486
    %v2689 = vunpack.c.h.b16 %v2486
    %v2690 = vunpack.c.l.b16 %v2487
    %v2691 = vunpack.c.h.b16 %v2487
    %v2692 = vpack.c.b16 %v2566, %v2564
    %v2693 = vpack.c.b16 %v2567, %v2565
    %v2694 = vpack.c.b16 %v2570, %v2568
    %v2695 = vpack.c.b16 %v2571, %v2569
    %v2696 = vpack.c.b16 %v2574, %v2572
    %v2697 = vpack.c.b16 %v2575, %v2573
    %v2698 = vpack.c.b16 %v2578, %v2576
    %v2699 = vpack.c.b16 %v2579, %v2577
    %v2700 = vpack.c.b16 %v2582, %v2580
    %v2701 = vpack.c.b16 %v2583, %v2581
    %v2702 = vpack.c.b16 %v2586, %v2584
    %v2703 = vpack.c.b16 %v2587, %v2585
    %v2704 = vpack.c.b16 %v2590, %v2588
    %v2705 = vpack.c.b16 %v2591, %v2589
    %v2706 = vpack.c.b16 %v2594, %v2592
    %v2707 = vpack.c.b16 %v2595, %v2593
    %v2708 = vpack.c.b16 %v2598, %v2596
    %v2709 = vpack.c.b16 %v2599, %v2597
    %v2710 = vpack.c.b16 %v2602, %v2600
    %v2711 = vpack.c.b16 %v2603, %v2601
    %v2712 = vpack.c.b16 %v2606, %v2604
    %v2713 = vpack.c.b16 %v2607, %v2605
    %v2714 = vpack.c.b16 %v2610, %v2608
    %v2715 = vpack.c.b16 %v2611, %v2609
    %v2716 = vpack.c.b16 %v2614, %v2612
    %v2717 = vpack.c.b16 %v2615, %v2613
    %v2718 = vpack.c.b16 %v2618, %v2616
    %v2719 = vpack.c.b16 %v2619, %v2617
    %v2720 = vpack.c.b16 %v2622, %v2620
    %v2721 = vpack.c.b16 %v2623, %v2621
    %v2722 = vpack.c.b16 %v2626, %v2624
    %v2723 = vpack.c.b16 %v2627, %v2625
    %v2724 = vpack.c.b16 %v2630, %v2628
    %v2725 = vpack.c.b16 %v2631, %v2629
    %v2726 = vpack.c.b16 %v2634, %v2632
    %v2727 = vpack.c.b16 %v2635, %v2633
    %v2728 = vpack.c.b16 %v2638, %v2636
    %v2729 = vpack.c.b16 %v2639, %v2637
    %v2730 = vpack.c.b16 %v2642, %v2640
    %v2731 = vpack.c.b16 %v2643, %v2641
    %v2732 = vpack.c.b16 %v2646, %v2644
    %v2733 = vpack.c.b16 %v2647, %v2645
    %v2734 = vpack.c.b16 %v2650, %v2648
    %v2735 = vpack.c.b16 %v2651, %v2649
    %v2736 = vpack.c.b16 %v2654, %v2652
    %v2737 = vpack.c.b16 %v2655, %v2653
    %v2738 = vpack.c.b16 %v2658, %v2656
    %v2739 = vpack.c.b16 %v2659, %v2657
    %v2740 = vpack.c.b16 %v2662, %v2660
    %v2741 = vpack.c.b16 %v2663, %v2661
    %v2742 = vpack.c.b16 %v2666, %v2664
    %v2743 = vpack.c.b16 %v2667, %v2665
    %v2744 = vpack.c.b16 %v2670, %v2668
    %v2745 = vpack.c.b16 %v2671, %v2669
    %v2746 = vpack.c.b16 %v2674, %v2672
    %v2747 = vpack.c.b16 %v2675, %v2673
    %v2748 = vpack.c.b16 %v2678, %v2676
    %v2749 = vpack.c.b16 %v2679, %v2677
    %v2750 = vpack.c.b16 %v2682, %v2680
    %v2751 = vpack.c.b16 %v2683, %v2681
    %v2752 = vpack.c.b16 %v2686, %v2684
    %v2753 = vpack.c.b16 %v2687, %v2685
    %v2754 = vpack.c.b16 %v2690, %v2688
    %v2755 = vpack.c.b16 %v2691, %v2689
    %2820 = vmatprep.subr.bf16.mxu0 %v2707
    %2821 = vmatpush1.bf16.msra.mxu0 %v2706
    %2822 = vmatprep.subr.bf16.mxu0 %v2705
    %2823 = vmatpush1.bf16.msra.mxu0 %v2704
    %2824 = vmatprep.subr.bf16.mxu0 %v2703
    %2825 = vmatpush1.bf16.msra.mxu0 %v2702
    %2826 = vmatprep.subr.bf16.mxu0 %v2701
    %2827 = vmatpush1.bf16.msra.mxu0 %v2700
    %2828 = vmatprep.subr.bf16.mxu0 %v2699
    %2829 = vmatpush1.bf16.msra.mxu0 %v2698
    %2830 = vmatprep.subr.bf16.mxu0 %v2697
    %2831 = vmatpush1.bf16.msra.mxu0 %v2696
    %2832 = vmatprep.subr.bf16.mxu0 %v2695
    %2833 = vmatpush1.bf16.msra.mxu0 %v2694
    %2834 = vmatprep.subr.bf16.mxu0 %v2693
    %2835 = vmatpush1.bf16.msra.mxu0 %v2692
    %2836 = vmatprep.subr.bf16.mxu0 %v2723
    %2837 = vmatpush2.bf16.msra.mxu0 %v2722
    %2838 = vmatprep.subr.bf16.mxu0 %v2721
    %2839 = vmatpush2.bf16.msra.mxu0 %v2720
    %2840 = vmatprep.subr.bf16.mxu0 %v2719
    %2841 = vmatpush2.bf16.msra.mxu0 %v2718
    %2842 = vmatprep.subr.bf16.mxu0 %v2717
    %2843 = vmatpush2.bf16.msra.mxu0 %v2716
    %2844 = vmatprep.subr.bf16.mxu0 %v2715
    %2845 = vmatpush2.bf16.msra.mxu0 %v2714
    %2846 = vmatprep.subr.bf16.mxu0 %v2713
    %2847 = vmatpush2.bf16.msra.mxu0 %v2712
    %2848 = vmatprep.subr.bf16.mxu0 %v2711
    %2849 = vmatpush2.bf16.msra.mxu0 %v2710
    %2850 = vmatprep.subr.bf16.mxu0 %v2709
    %2851 = vmatpush2.bf16.msra.mxu0 %v2708
    %2852 = vmatprep.mubr.bf16.mxu0 %v2421
    %2853 = vmatmul.mubr.bf16.gmra.mxu0 %v2420
    %v2854 = vpop.f32.mrf.mxu0
    %v2855 = vadd.f32 %v2493, %v2854
    %v2856 = vpop.f32.mrf.mxu0
    %v2857 = vadd.f32 %v2497, %v2856
    %v2858 = vpop.f32.mrf.mxu0
    %v2859 = vpop.f32.mrf.mxu0
    %2860 = vdwg.mxu0
    %2861 = vmatprep.subr.bf16.mxu0 %v2739
    %2862 = vmatpush1.bf16.msra.mxu0 %v2738
    %2863 = vmatprep.subr.bf16.mxu0 %v2737
    %2864 = vmatpush1.bf16.msra.mxu0 %v2736
    %2865 = vmatprep.subr.bf16.mxu0 %v2735
    %2866 = vmatpush1.bf16.msra.mxu0 %v2734
    %2867 = vmatprep.subr.bf16.mxu0 %v2733
    %2868 = vmatpush1.bf16.msra.mxu0 %v2732
    %2869 = vmatprep.subr.bf16.mxu0 %v2731
    %2870 = vmatpush1.bf16.msra.mxu0 %v2730
    %2871 = vmatprep.subr.bf16.mxu0 %v2729
    %2872 = vmatpush1.bf16.msra.mxu0 %v2728
    %2873 = vmatprep.subr.bf16.mxu0 %v2727
    %2874 = vmatpush1.bf16.msra.mxu0 %v2726
    %2875 = vmatprep.subr.bf16.mxu0 %v2725
    %2876 = vmatpush1.bf16.msra.mxu0 %v2724
    %2877 = vmatprep.subr.bf16.mxu0 %v2755
    %2878 = vmatpush2.bf16.msra.mxu0 %v2754
    %2879 = vmatprep.subr.bf16.mxu0 %v2753
    %2880 = vmatpush2.bf16.msra.mxu0 %v2752
    %2881 = vmatprep.subr.bf16.mxu0 %v2751
    %2882 = vmatpush2.bf16.msra.mxu0 %v2750
    %2883 = vmatprep.subr.bf16.mxu0 %v2749
    %2884 = vmatpush2.bf16.msra.mxu0 %v2748
    %2885 = vmatprep.subr.bf16.mxu0 %v2747
    %2886 = vmatpush2.bf16.msra.mxu0 %v2746
    %2887 = vmatprep.subr.bf16.mxu0 %v2745
    %2888 = vmatpush2.bf16.msra.mxu0 %v2744
    %2889 = vmatprep.subr.bf16.mxu0 %v2743
    %2890 = vmatpush2.bf16.msra.mxu0 %v2742
    %2891 = vmatprep.subr.bf16.mxu0 %v2741
    %2892 = vmatpush2.bf16.msra.mxu0 %v2740
    %2893 = vmatprep.mubr.bf16.mxu0 %v2423
    %2894 = vmatmul.mubr.bf16.gmra.mxu0 %v2422
    %v2895 = vpop.f32.mrf.mxu0
    %v2896 = vadd.f32 %v2855, %v2895
    %v2897 = vpop.f32.mrf.mxu0
    %v2898 = vadd.f32 %v2857, %v2897
    %v2899 = vpop.f32.mrf.mxu0
    %v2900 = vpop.f32.mrf.mxu0
    %2901 = vdwg.mxu0
    %v2902 = vmul.f32 %v2896, 0.2
    %v2903 = vmul.f32 %v2898, 0.2
    %v2904 = vmax.f32 %v2896, %v2902
    %v2905 = vmax.f32 %v2898, %v2903
    %v2906 = vld [vmem:[%s7] sm:$0x3]
    %v2908 = vlaneseq
    %v2909 = vshrl.u32 %v2908, 7
    %v2910 = vsub.s32 0, %v2909
    %v2911 = vrot.slane %v2906, %v2910
    %v2912 = vlaneseq
    %v2913 = vshrl.u32 %v2912, 7
    %v2914 = vsub.s32 1, %v2913
    %v2915 = vrot.slane %v2906, %v2914
    %v2918 = vmul.f32 %v2904, %v2911
    %v2919 = vmul.f32 %v2905, %v2915
    %v2920 = vadd.f32 %v2918, %v2919
    %2921 = vadd.xlane.f32.xlu0 %v2920
    %v2922 = vpop.xlane.xlu0 %2921
    %v2923 = vld [vmem:[#allocation2] sm:$0x1]
    %v2925 = vlaneseq
    %v2926 = vshrl.u32 %v2925, 7
    %v2927 = vsub.s32 0, %v2926
    %v2928 = vrot.slane %v2923, %v2927
    %v2930 = vadd.f32 %v2922, %v2928
    %vm2931 = vcmask 7168
    %2932 = vst.msk [vmem:[%s9] sm:$0xff] %vm2931, %v2930
    // Predicated region
    $region58: #{_critic_pallas.1} parent=1 // pred_check
      _
    $region59: #{_critic_pallas.1} parent=1 // pred_check_branch
      %2934 = sbr.rel (0) target = $region61
    $region60: #{_critic_pallas.1} parent=1 // pred_region
      _
    $region61: #{_critic_pallas.1} parent=1 // pred_fallthru
      _
    // Predicated region
    $region62: #{_critic_pallas.1} parent=1 // pred_check
      _
    $region63: #{_critic_pallas.1} parent=1 // pred_check_branch
      %2936 = sbr.rel (0) target = $region65
    $region64: #{_critic_pallas.1} parent=1 // pred_region
      _
    $region65: #{_critic_pallas.1} parent=1 // pred_fallthru
      _
    %2937 = vsyncpa [#allocation4], 1
    %2938 = vsyncpa [#allocation6], 1
    %2939 = vsyncpa [#allocation9], 1

</llo_original>
